<compile_context>
chip_gen: v7x
topology: tpu7x:2x2x1
jax: 0.10.0
libtpu: 0.0.40
codegen_flags: <defaults>
</compile_context>

<pallas_src>
import functools

import jax
import jax.numpy as jnp
from jax import lax
from jax.experimental import pallas as pl
from jax.experimental.pallas import tpu as pltpu


# ----------------------------------------------------------------------------
# In-kernel helpers
# ----------------------------------------------------------------------------

def _dot(a, b):
    return jnp.dot(a, b, preferred_element_type=jnp.float32)


def _dot_nt(a, b):
    # a @ b.T without materialising a transpose (contract last dims on MXU).
    return lax.dot_general(a, b, (((1,), (1,)), ((), ())),
                           preferred_element_type=jnp.float32)


def _layer_norm(x, g, b, eps):
    mean = jnp.mean(x, axis=-1, keepdims=True)
    var = jnp.mean(jnp.square(x - mean), axis=-1, keepdims=True)
    return (x - mean) * lax.rsqrt(var + eps) * g + b


def _attn_core(q, k, v, wo, num_heads):
    """Single-batch attention on pre-projected q/k/v.

    q: [Nq, C] (scale already folded into the Q projection), k/v: [Nk, C].
    Per-head results are accumulated directly through the output projection,
    so no concatenate along lanes is needed.  Returns [Nq, C] (no out bias).
    """
    Nq, C = q.shape
    Dh = C // num_heads
    acc = jnp.zeros((Nq, C), jnp.float32)
    for h in range(num_heads):                      # small static unroll
        sl = slice(h * Dh, (h + 1) * Dh)
        s = _dot_nt(q[:, sl], k[:, sl])             # [Nq, Nk]
        m = jnp.max(s, axis=-1, keepdims=True)
        p = jnp.exp(s - m)
        denom = jnp.sum(p, axis=-1, keepdims=True)
        p = p * pl.reciprocal(denom, approx=True)   # EUP slot, ~free
        acc = acc + _dot(_dot(p, v[:, sl]), wo[sl, :])
    return acc


# ----------------------------------------------------------------------------
# Fused decoder-layer kernel
# ----------------------------------------------------------------------------

def decoder_layer_kernel(
        tgt_ref, pos_ref, mem_ref, mpos_ref,
        sa_wq_ref, sa_wk_ref, sa_wv_ref, sa_wo_ref, sa_bo_ref,
        ca_wq_ref, ca_wk_ref, ca_wv_ref, ca_wo_ref, ca_bo_ref,
        w1_ref, b1_ref, w2_ref, b2_ref,
        g1_ref, be1_ref, g2_ref, be2_ref, g3_ref, be3_ref,
        o_ref, *, B, Nq, Nk, num_heads, eps):
    tgt = tgt_ref[...]                  # [B*Nq, C]
    pos = pos_ref[...]                  # [B*Nq, C]

    # ---- self-attention: only batch 0 is ever used (PyTorch `[0]` quirk) ----
    q0_in = tgt[0:Nq, :] + pos[0:Nq, :]             # positional add in-kernel
    v0_in = tgt[0:Nq, :]
    q0 = _dot(q0_in, sa_wq_ref[...])                # scale pre-folded into Wq
    k0 = _dot(q0_in, sa_wk_ref[...])
    v0 = _dot(v0_in, sa_wv_ref[...])
    sa0 = _attn_core(q0, k0, v0, sa_wo_ref[...], num_heads) + sa_bo_ref[...]
    sa_all = jnp.concatenate([sa0] * B, axis=0)     # broadcast over batch rows

    # ---- residual + LayerNorm 1 (all rows at once) ----
    x1 = _layer_norm(tgt + sa_all, g1_ref[...], be1_ref[...], eps)

    # ---- cross-attention: projections over all rows, attention per batch ----
    q_in = x1 + pos
    k_in = mem_ref[...] + mpos_ref[...]
    v_in = mem_ref[...]
    qp = _dot(q_in, ca_wq_ref[...])                 # [B*Nq, C]
    kp = _dot(k_in, ca_wk_ref[...])                 # [B*Nk, C]
    vp = _dot(v_in, ca_wv_ref[...])                 # [B*Nk, C]
    wo_ca = ca_wo_ref[...]
    ca_rows = []
    for b in range(B):                              # small static unroll
        qb = qp[b * Nq:(b + 1) * Nq, :]
        kb = kp[b * Nk:(b + 1) * Nk, :]
        vb = vp[b * Nk:(b + 1) * Nk, :]
        ca_rows.append(_attn_core(qb, kb, vb, wo_ca, num_heads))
    ca_out = jnp.concatenate(ca_rows, axis=0) + ca_bo_ref[...]

    # ---- residual + LayerNorm 2 ----
    x2 = _layer_norm(x1 + ca_out, g2_ref[...], be2_ref[...], eps)

    # ---- FFN (ReLU) + residual + LayerNorm 3, single matmuls over all rows --
    h = jnp.maximum(_dot(x2, w1_ref[...]) + b1_ref[...], 0.0)
    y = _dot(h, w2_ref[...]) + b2_ref[...]
    x3 = _layer_norm(x2 + y, g3_ref[...], be3_ref[...], eps)

    o_ref[...] = x3.astype(o_ref.dtype)


# ----------------------------------------------------------------------------
# Wrapper: whole TRDecoderLayer forward in one pallas_call
# ----------------------------------------------------------------------------

def tr_decoder_layer_forward(params, tgt, tgt_query_pos, memory, memory_pos,
                             num_heads, eps=1e-5):
    B, Nq, C = tgt.shape
    Nk = memory.shape[1]
    scale = float((C // num_heads) ** (-0.5))

    sa, ca = params["self_attn"], params["cross_attn"]
    # Fold the attention scale into the Q projection weights (one-time prep,
    # removes the per-tile score multiply from the hot path).
    sa_wq = sa["wq"] * scale
    ca_wq = ca["wq"] * scale

    # Fold the batch dim into rows so projections/FFN run as single matmuls.
    tgt2d = tgt.reshape(B * Nq, C)
    pos2d = tgt_query_pos.reshape(B * Nq, C)
    mem2d = memory.reshape(B * Nk, C)
    mpos2d = memory_pos.reshape(B * Nk, C)

    kernel = functools.partial(decoder_layer_kernel, B=B, Nq=Nq, Nk=Nk,
                               num_heads=num_heads, eps=eps)
    out2d = pl.pallas_call(
        kernel,
        out_shape=jax.ShapeDtypeStruct((B * Nq, C), jnp.float32),
        compiler_params=pltpu.CompilerParams(
            vmem_limit_bytes=32 * 1024 * 1024),
    )(tgt2d, pos2d, mem2d, mpos2d,
      sa_wq, sa["wk"], sa["wv"], sa["wo"], sa["bo"],
      ca_wq, ca["wk"], ca["wv"], ca["wo"], ca["bo"],
      params["w1"], params["b1"], params["w2"], params["b2"],
      params["norm1_g"], params["norm1_b"],
      params["norm2_g"], params["norm2_b"],
      params["norm3_g"], params["norm3_b"])
    return out2d.reshape(B, Nq, C)


# ----------------------------------------------------------------------------
# Pure-JAX reference (for validation)
# ----------------------------------------------------------------------------

def _mha_ref(q_in, k_in, v_in, wq, wk, wv, wo, bo, num_heads):
    B, Nq, C = q_in.shape
    Nk = k_in.shape[1]
    Dh = C // num_heads
    scale = (C // num_heads) ** (-0.5)
    q = (q_in @ wq).reshape(B, Nq, num_heads, Dh).transpose(0, 2, 1, 3)
    k = (k_in @ wk).reshape(B, Nk, num_heads, Dh).transpose(0, 2, 1, 3)
    v = (v_in @ wv).reshape(B, Nk, num_heads, Dh).transpose(0, 2, 1, 3)
    s = jnp.einsum("bhqd,bhkd->bhqk", q, k) * scale
    p = jax.nn.softmax(s, axis=-1)
    o = jnp.einsum("bhqk,bhkd->bhqd", p, v).transpose(0, 2, 1, 3).reshape(B, Nq, C)
    return o @ wo + bo[0]


def _ln_ref(x, g, b, eps=1e-5):
    mean = jnp.mean(x, axis=-1, keepdims=True)
    var = jnp.mean((x - mean) ** 2, axis=-1, keepdims=True)
    return (x - mean) / jnp.sqrt(var + eps) * g[0] + b[0]


def _forward_ref(params, tgt, tgt_query_pos, memory, memory_pos, num_heads):
    sa = params["self_attn"]
    qk = tgt + tgt_query_pos
    tgt2 = _mha_ref(qk, qk, tgt, sa["wq"], sa["wk"], sa["wv"], sa["wo"],
                    sa["bo"], num_heads)[0]
    tgt = _ln_ref(tgt + tgt2[None], params["norm1_g"], params["norm1_b"])
    ca = params["cross_attn"]
    tgt2 = _mha_ref(tgt + tgt_query_pos, memory + memory_pos, memory,
                    ca["wq"], ca["wk"], ca["wv"], ca["wo"], ca["bo"], num_heads)
    tgt = _ln_ref(tgt + tgt2, params["norm2_g"], params["norm2_b"])
    h = jnp.maximum(tgt @ params["w1"] + params["b1"][0], 0.0)
    tgt2 = h @ params["w2"] + params["b2"][0]
    tgt = _ln_ref(tgt + tgt2, params["norm3_g"], params["norm3_b"])
    return tgt


# ----------------------------------------------------------------------------
# Main
# ----------------------------------------------------------------------------

if __name__ == "__main__":
    B, Nq, Nk = 2, 8, 16
    d_model, num_heads, dim_ffn = 32, 4, 64

    key = jax.random.PRNGKey(0)
    keys = jax.random.split(key, 20)

    def nrm(k, shape, std=0.05):
        return (std * jax.random.normal(k, shape)).astype(jnp.float32)

    def mha_params(k0, k1, k2, k3, k4):
        # weights stored as [in, out]  (equivalent to PyTorch W.T)
        return dict(wq=nrm(k0, (d_model, d_model)),
                    wk=nrm(k1, (d_model, d_model)),
                    wv=nrm(k2, (d_model, d_model)),
                    wo=nrm(k3, (d_model, d_model)),
                    bo=nrm(k4, (1, d_model)))

    params = dict(
        self_attn=mha_params(*keys[0:5]),
        cross_attn=mha_params(*keys[5:10]),
        w1=nrm(keys[10], (d_model, dim_ffn)),
        b1=nrm(keys[11], (1, dim_ffn)),
        w2=nrm(keys[12], (dim_ffn, d_model)),
        b2=nrm(keys[13], (1, d_model)),
        norm1_g=jnp.ones((1, d_model), jnp.float32),
        norm1_b=jnp.zeros((1, d_model), jnp.float32),
        norm2_g=jnp.ones((1, d_model), jnp.float32),
        norm2_b=jnp.zeros((1, d_model), jnp.float32),
        norm3_g=jnp.ones((1, d_model), jnp.float32),
        norm3_b=jnp.zeros((1, d_model), jnp.float32),
    )

    tgt = nrm(keys[14], (B, Nq, d_model), std=1.0)
    tgt_query_pos = nrm(keys[15], (B, Nq, d_model), std=1.0)
    memory = nrm(keys[16], (B, Nk, d_model), std=1.0)
    memory_pos = nrm(keys[17], (B, Nk, d_model), std=1.0)

    out = tr_decoder_layer_forward(params, tgt, tgt_query_pos, memory,
                                   memory_pos, num_heads)
    out = jax.block_until_ready(out)

    ref = _forward_ref(params, tgt, tgt_query_pos, memory, memory_pos,
                       num_heads)
    assert out.shape == (B, Nq, d_model)
    # tolerance accounts for the EUP approx-reciprocal in the softmax denom
    assert jnp.allclose(out, ref, atol=5e-3, rtol=5e-3), "mismatch vs reference"

    print("KERNEL_OK")
</pallas_src>

<mosaic_0001>
module attributes {stable_mosaic.version = 11 : i64} {
  func.func @decoder_layer_kernel(%arg0: memref<16x32xf32, #tpu.memory_space<vmem>>, %arg1: memref<16x32xf32, #tpu.memory_space<vmem>>, %arg2: memref<32x32xf32, #tpu.memory_space<vmem>>, %arg3: memref<32x32xf32, #tpu.memory_space<vmem>>, %arg4: memref<32x32xf32, #tpu.memory_space<vmem>>, %arg5: memref<32x32xf32, #tpu.memory_space<vmem>>, %arg6: memref<32x32xf32, #tpu.memory_space<vmem>>, %arg7: memref<32x32xf32, #tpu.memory_space<vmem>>, %arg8: memref<1x32xf32, #tpu.memory_space<vmem>>, %arg9: memref<32x32xf32, #tpu.memory_space<vmem>>, %arg10: memref<32x32xf32, #tpu.memory_space<vmem>>, %arg11: memref<32x32xf32, #tpu.memory_space<vmem>>, %arg12: memref<32x32xf32, #tpu.memory_space<vmem>>, %arg13: memref<1x32xf32, #tpu.memory_space<vmem>>, %arg14: memref<32x64xf32, #tpu.memory_space<vmem>>, %arg15: memref<1x64xf32, #tpu.memory_space<vmem>>, %arg16: memref<64x32xf32, #tpu.memory_space<vmem>>, %arg17: memref<1x32xf32, #tpu.memory_space<vmem>>, %arg18: memref<1x32xf32, #tpu.memory_space<vmem>>, %arg19: memref<1x32xf32, #tpu.memory_space<vmem>>, %arg20: memref<1x32xf32, #tpu.memory_space<vmem>>, %arg21: memref<1x32xf32, #tpu.memory_space<vmem>>, %arg22: memref<1x32xf32, #tpu.memory_space<vmem>>, %arg23: memref<1x32xf32, #tpu.memory_space<vmem>>, %arg24: memref<16x32xf32, #tpu.memory_space<vmem>>) attributes {dimension_semantics = [], scalar_prefetch = 0 : i64, scratch_operands = 0 : i64, tpu.core_type = #tpu.core_type<tc>} {
    %c0 = arith.constant 0 : index
    %c0_0 = arith.constant 0 : index
    %0 = vector.load %arg0[%c0, %c0_0] : memref<16x32xf32, #tpu.memory_space<vmem>>, vector<16x32xf32>
    %c0_1 = arith.constant 0 : index
    %c0_2 = arith.constant 0 : index
    %1 = vector.load %arg1[%c0_1, %c0_2] : memref<16x32xf32, #tpu.memory_space<vmem>>, vector<16x32xf32>
    %2 = vector.extract_strided_slice %0 {offsets = [0, 0], sizes = [8, 32], strides = [1, 1]} : vector<16x32xf32> to vector<8x32xf32>
    %3 = vector.extract_strided_slice %1 {offsets = [0, 0], sizes = [8, 32], strides = [1, 1]} : vector<16x32xf32> to vector<8x32xf32>
    %4 = arith.addf %2, %3 : vector<8x32xf32>
    %5 = vector.extract_strided_slice %0 {offsets = [0, 0], sizes = [8, 32], strides = [1, 1]} : vector<16x32xf32> to vector<8x32xf32>
    %c0_3 = arith.constant 0 : index
    %c0_4 = arith.constant 0 : index
    %6 = vector.load %arg4[%c0_3, %c0_4] : memref<32x32xf32, #tpu.memory_space<vmem>>, vector<32x32xf32>
    %cst = arith.constant dense<0.000000e+00> : vector<8x32xf32>
    %7 = tpu.matmul %4, %6, %cst {dimension_numbers = #tpu.dot_dimension_numbers<[1], [0], [0], [1], [0, 0, 1, 1], [], []>} : vector<8x32xf32>, vector<32x32xf32>, vector<8x32xf32> -> vector<8x32xf32>
    %c0_5 = arith.constant 0 : index
    %c0_6 = arith.constant 0 : index
    %8 = vector.load %arg5[%c0_5, %c0_6] : memref<32x32xf32, #tpu.memory_space<vmem>>, vector<32x32xf32>
    %cst_7 = arith.constant dense<0.000000e+00> : vector<8x32xf32>
    %9 = tpu.matmul %4, %8, %cst_7 {dimension_numbers = #tpu.dot_dimension_numbers<[1], [0], [0], [1], [0, 0, 1, 1], [], []>} : vector<8x32xf32>, vector<32x32xf32>, vector<8x32xf32> -> vector<8x32xf32>
    %c0_8 = arith.constant 0 : index
    %c0_9 = arith.constant 0 : index
    %10 = vector.load %arg6[%c0_8, %c0_9] : memref<32x32xf32, #tpu.memory_space<vmem>>, vector<32x32xf32>
    %cst_10 = arith.constant dense<0.000000e+00> : vector<8x32xf32>
    %11 = tpu.matmul %5, %10, %cst_10 {dimension_numbers = #tpu.dot_dimension_numbers<[1], [0], [0], [1], [0, 0, 1, 1], [], []>} : vector<8x32xf32>, vector<32x32xf32>, vector<8x32xf32> -> vector<8x32xf32>
    %c0_11 = arith.constant 0 : index
    %c0_12 = arith.constant 0 : index
    %12 = vector.load %arg7[%c0_11, %c0_12] : memref<32x32xf32, #tpu.memory_space<vmem>>, vector<32x32xf32>
    %cst_13 = arith.constant 0.000000e+00 : f32
    %13 = vector.broadcast %cst_13 : f32 to vector<8x32xf32>
    %14 = vector.extract_strided_slice %7 {offsets = [0, 0], sizes = [8, 8], strides = [1, 1]} : vector<8x32xf32> to vector<8x8xf32>
    %15 = vector.extract_strided_slice %9 {offsets = [0, 0], sizes = [8, 8], strides = [1, 1]} : vector<8x32xf32> to vector<8x8xf32>
    %cst_14 = arith.constant dense<0.000000e+00> : vector<8x8xf32>
    %16 = tpu.matmul %14, %15, %cst_14 {dimension_numbers = #tpu.dot_dimension_numbers<[1], [1], [0], [0], [0, 0, 1, 0], [], []>} : vector<8x8xf32>, vector<8x8xf32>, vector<8x8xf32> -> vector<8x8xf32>
    %cst_15 = arith.constant dense<0xFF800000> : vector<8xf32>
    %17 = vector.multi_reduction <maximumf>, %16, %cst_15 [1] : vector<8x8xf32> to vector<8xf32>
    %18 = vector.shape_cast %17 : vector<8xf32> to vector<8x1xf32>
    %19 = vector.broadcast %18 : vector<8x1xf32> to vector<8x8xf32>
    %20 = arith.subf %16, %19 : vector<8x8xf32>
    %21 = math.exp %20 : vector<8x8xf32>
    %cst_16 = arith.constant dense<0.000000e+00> : vector<8xf32>
    %22 = vector.multi_reduction <add>, %21, %cst_16 [1] : vector<8x8xf32> to vector<8xf32>
    %23 = vector.shape_cast %22 : vector<8xf32> to vector<8x1xf32>
    %24 = tpu.reciprocal %23 {approx = true} : vector<8x1xf32> -> vector<8x1xf32>
    %25 = vector.broadcast %24 : vector<8x1xf32> to vector<8x8xf32>
    %26 = arith.mulf %21, %25 : vector<8x8xf32>
    %27 = vector.extract_strided_slice %11 {offsets = [0, 0], sizes = [8, 8], strides = [1, 1]} : vector<8x32xf32> to vector<8x8xf32>
    %cst_17 = arith.constant dense<0.000000e+00> : vector<8x8xf32>
    %28 = tpu.matmul %26, %27, %cst_17 {dimension_numbers = #tpu.dot_dimension_numbers<[1], [0], [0], [1], [0, 0, 1, 1], [], []>} : vector<8x8xf32>, vector<8x8xf32>, vector<8x8xf32> -> vector<8x8xf32>
    %29 = vector.extract_strided_slice %12 {offsets = [0, 0], sizes = [8, 32], strides = [1, 1]} : vector<32x32xf32> to vector<8x32xf32>
    %cst_18 = arith.constant dense<0.000000e+00> : vector<8x32xf32>
    %30 = tpu.matmul %28, %29, %cst_18 {dimension_numbers = #tpu.dot_dimension_numbers<[1], [0], [0], [1], [0, 0, 1, 1], [], []>} : vector<8x8xf32>, vector<8x32xf32>, vector<8x32xf32> -> vector<8x32xf32>
    %31 = arith.addf %13, %30 : vector<8x32xf32>
    %32 = vector.extract_strided_slice %7 {offsets = [0, 8], sizes = [8, 8], strides = [1, 1]} : vector<8x32xf32> to vector<8x8xf32>
    %33 = vector.extract_strided_slice %9 {offsets = [0, 8], sizes = [8, 8], strides = [1, 1]} : vector<8x32xf32> to vector<8x8xf32>
    %cst_19 = arith.constant dense<0.000000e+00> : vector<8x8xf32>
    %34 = tpu.matmul %32, %33, %cst_19 {dimension_numbers = #tpu.dot_dimension_numbers<[1], [1], [0], [0], [0, 0, 1, 0], [], []>} : vector<8x8xf32>, vector<8x8xf32>, vector<8x8xf32> -> vector<8x8xf32>
    %cst_20 = arith.constant dense<0xFF800000> : vector<8xf32>
    %35 = vector.multi_reduction <maximumf>, %34, %cst_20 [1] : vector<8x8xf32> to vector<8xf32>
    %36 = vector.shape_cast %35 : vector<8xf32> to vector<8x1xf32>
    %37 = vector.broadcast %36 : vector<8x1xf32> to vector<8x8xf32>
    %38 = arith.subf %34, %37 : vector<8x8xf32>
    %39 = math.exp %38 : vector<8x8xf32>
    %cst_21 = arith.constant dense<0.000000e+00> : vector<8xf32>
    %40 = vector.multi_reduction <add>, %39, %cst_21 [1] : vector<8x8xf32> to vector<8xf32>
    %41 = vector.shape_cast %40 : vector<8xf32> to vector<8x1xf32>
    %42 = tpu.reciprocal %41 {approx = true} : vector<8x1xf32> -> vector<8x1xf32>
    %43 = vector.broadcast %42 : vector<8x1xf32> to vector<8x8xf32>
    %44 = arith.mulf %39, %43 : vector<8x8xf32>
    %45 = vector.extract_strided_slice %11 {offsets = [0, 8], sizes = [8, 8], strides = [1, 1]} : vector<8x32xf32> to vector<8x8xf32>
    %cst_22 = arith.constant dense<0.000000e+00> : vector<8x8xf32>
    %46 = tpu.matmul %44, %45, %cst_22 {dimension_numbers = #tpu.dot_dimension_numbers<[1], [0], [0], [1], [0, 0, 1, 1], [], []>} : vector<8x8xf32>, vector<8x8xf32>, vector<8x8xf32> -> vector<8x8xf32>
    %47 = vector.extract_strided_slice %12 {offsets = [8, 0], sizes = [8, 32], strides = [1, 1]} : vector<32x32xf32> to vector<8x32xf32>
    %cst_23 = arith.constant dense<0.000000e+00> : vector<8x32xf32>
    %48 = tpu.matmul %46, %47, %cst_23 {dimension_numbers = #tpu.dot_dimension_numbers<[1], [0], [0], [1], [0, 0, 1, 1], [], []>} : vector<8x8xf32>, vector<8x32xf32>, vector<8x32xf32> -> vector<8x32xf32>
    %49 = arith.addf %31, %48 : vector<8x32xf32>
    %50 = vector.extract_strided_slice %7 {offsets = [0, 16], sizes = [8, 8], strides = [1, 1]} : vector<8x32xf32> to vector<8x8xf32>
    %51 = vector.extract_strided_slice %9 {offsets = [0, 16], sizes = [8, 8], strides = [1, 1]} : vector<8x32xf32> to vector<8x8xf32>
    %cst_24 = arith.constant dense<0.000000e+00> : vector<8x8xf32>
    %52 = tpu.matmul %50, %51, %cst_24 {dimension_numbers = #tpu.dot_dimension_numbers<[1], [1], [0], [0], [0, 0, 1, 0], [], []>} : vector<8x8xf32>, vector<8x8xf32>, vector<8x8xf32> -> vector<8x8xf32>
    %cst_25 = arith.constant dense<0xFF800000> : vector<8xf32>
    %53 = vector.multi_reduction <maximumf>, %52, %cst_25 [1] : vector<8x8xf32> to vector<8xf32>
    %54 = vector.shape_cast %53 : vector<8xf32> to vector<8x1xf32>
    %55 = vector.broadcast %54 : vector<8x1xf32> to vector<8x8xf32>
    %56 = arith.subf %52, %55 : vector<8x8xf32>
    %57 = math.exp %56 : vector<8x8xf32>
    %cst_26 = arith.constant dense<0.000000e+00> : vector<8xf32>
    %58 = vector.multi_reduction <add>, %57, %cst_26 [1] : vector<8x8xf32> to vector<8xf32>
    %59 = vector.shape_cast %58 : vector<8xf32> to vector<8x1xf32>
    %60 = tpu.reciprocal %59 {approx = true} : vector<8x1xf32> -> vector<8x1xf32>
    %61 = vector.broadcast %60 : vector<8x1xf32> to vector<8x8xf32>
    %62 = arith.mulf %57, %61 : vector<8x8xf32>
    %63 = vector.extract_strided_slice %11 {offsets = [0, 16], sizes = [8, 8], strides = [1, 1]} : vector<8x32xf32> to vector<8x8xf32>
    %cst_27 = arith.constant dense<0.000000e+00> : vector<8x8xf32>
    %64 = tpu.matmul %62, %63, %cst_27 {dimension_numbers = #tpu.dot_dimension_numbers<[1], [0], [0], [1], [0, 0, 1, 1], [], []>} : vector<8x8xf32>, vector<8x8xf32>, vector<8x8xf32> -> vector<8x8xf32>
    %65 = vector.extract_strided_slice %12 {offsets = [16, 0], sizes = [8, 32], strides = [1, 1]} : vector<32x32xf32> to vector<8x32xf32>
    %cst_28 = arith.constant dense<0.000000e+00> : vector<8x32xf32>
    %66 = tpu.matmul %64, %65, %cst_28 {dimension_numbers = #tpu.dot_dimension_numbers<[1], [0], [0], [1], [0, 0, 1, 1], [], []>} : vector<8x8xf32>, vector<8x32xf32>, vector<8x32xf32> -> vector<8x32xf32>
    %67 = arith.addf %49, %66 : vector<8x32xf32>
    %68 = vector.extract_strided_slice %7 {offsets = [0, 24], sizes = [8, 8], strides = [1, 1]} : vector<8x32xf32> to vector<8x8xf32>
    %69 = vector.extract_strided_slice %9 {offsets = [0, 24], sizes = [8, 8], strides = [1, 1]} : vector<8x32xf32> to vector<8x8xf32>
    %cst_29 = arith.constant dense<0.000000e+00> : vector<8x8xf32>
    %70 = tpu.matmul %68, %69, %cst_29 {dimension_numbers = #tpu.dot_dimension_numbers<[1], [1], [0], [0], [0, 0, 1, 0], [], []>} : vector<8x8xf32>, vector<8x8xf32>, vector<8x8xf32> -> vector<8x8xf32>
    %cst_30 = arith.constant dense<0xFF800000> : vector<8xf32>
    %71 = vector.multi_reduction <maximumf>, %70, %cst_30 [1] : vector<8x8xf32> to vector<8xf32>
    %72 = vector.shape_cast %71 : vector<8xf32> to vector<8x1xf32>
    %73 = vector.broadcast %72 : vector<8x1xf32> to vector<8x8xf32>
    %74 = arith.subf %70, %73 : vector<8x8xf32>
    %75 = math.exp %74 : vector<8x8xf32>
    %cst_31 = arith.constant dense<0.000000e+00> : vector<8xf32>
    %76 = vector.multi_reduction <add>, %75, %cst_31 [1] : vector<8x8xf32> to vector<8xf32>
    %77 = vector.shape_cast %76 : vector<8xf32> to vector<8x1xf32>
    %78 = tpu.reciprocal %77 {approx = true} : vector<8x1xf32> -> vector<8x1xf32>
    %79 = vector.broadcast %78 : vector<8x1xf32> to vector<8x8xf32>
    %80 = arith.mulf %75, %79 : vector<8x8xf32>
    %81 = vector.extract_strided_slice %11 {offsets = [0, 24], sizes = [8, 8], strides = [1, 1]} : vector<8x32xf32> to vector<8x8xf32>
    %cst_32 = arith.constant dense<0.000000e+00> : vector<8x8xf32>
    %82 = tpu.matmul %80, %81, %cst_32 {dimension_numbers = #tpu.dot_dimension_numbers<[1], [0], [0], [1], [0, 0, 1, 1], [], []>} : vector<8x8xf32>, vector<8x8xf32>, vector<8x8xf32> -> vector<8x8xf32>
    %83 = vector.extract_strided_slice %12 {offsets = [24, 0], sizes = [8, 32], strides = [1, 1]} : vector<32x32xf32> to vector<8x32xf32>
    %cst_33 = arith.constant dense<0.000000e+00> : vector<8x32xf32>
    %84 = tpu.matmul %82, %83, %cst_33 {dimension_numbers = #tpu.dot_dimension_numbers<[1], [0], [0], [1], [0, 0, 1, 1], [], []>} : vector<8x8xf32>, vector<8x32xf32>, vector<8x32xf32> -> vector<8x32xf32>
    %85 = arith.addf %67, %84 : vector<8x32xf32>
    %c0_34 = arith.constant 0 : index
    %c0_35 = arith.constant 0 : index
    %86 = vector.load %arg8[%c0_34, %c0_35] : memref<1x32xf32, #tpu.memory_space<vmem>>, vector<1x32xf32>
    %87 = vector.broadcast %86 : vector<1x32xf32> to vector<8x32xf32>
    %88 = arith.addf %85, %87 : vector<8x32xf32>
    %89 = tpu.concatenate %88, %88 in 0 : vector<8x32xf32>, vector<8x32xf32> -> vector<16x32xf32>
    %90 = arith.addf %0, %89 : vector<16x32xf32>
    %c0_36 = arith.constant 0 : index
    %c0_37 = arith.constant 0 : index
    %91 = vector.load %arg18[%c0_36, %c0_37] : memref<1x32xf32, #tpu.memory_space<vmem>>, vector<1x32xf32>
    %c0_38 = arith.constant 0 : index
    %c0_39 = arith.constant 0 : index
    %92 = vector.load %arg19[%c0_38, %c0_39] : memref<1x32xf32, #tpu.memory_space<vmem>>, vector<1x32xf32>
    %cst_40 = arith.constant dense<0.000000e+00> : vector<16xf32>
    %93 = vector.multi_reduction <add>, %90, %cst_40 [1] : vector<16x32xf32> to vector<16xf32>
    %94 = vector.shape_cast %93 : vector<16xf32> to vector<16x1xf32>
    %cst_41 = arith.constant 3.200000e+01 : f32
    %95 = vector.broadcast %cst_41 : f32 to vector<16x1xf32>
    %96 = arith.divf %94, %95 : vector<16x1xf32>
    %97 = vector.broadcast %96 : vector<16x1xf32> to vector<16x32xf32>
    %98 = arith.subf %90, %97 : vector<16x32xf32>
    %99 = arith.mulf %98, %98 : vector<16x32xf32>
    %cst_42 = arith.constant dense<0.000000e+00> : vector<16xf32>
    %100 = vector.multi_reduction <add>, %99, %cst_42 [1] : vector<16x32xf32> to vector<16xf32>
    %101 = vector.shape_cast %100 : vector<16xf32> to vector<16x1xf32>
    %cst_43 = arith.constant 3.200000e+01 : f32
    %102 = vector.broadcast %cst_43 : f32 to vector<16x1xf32>
    %103 = arith.divf %101, %102 : vector<16x1xf32>
    %104 = vector.broadcast %96 : vector<16x1xf32> to vector<16x32xf32>
    %105 = arith.subf %90, %104 : vector<16x32xf32>
    %cst_44 = arith.constant 9.99999974E-6 : f32
    %106 = vector.broadcast %cst_44 : f32 to vector<16x1xf32>
    %107 = arith.addf %103, %106 : vector<16x1xf32>
    %108 = math.rsqrt %107 : vector<16x1xf32>
    %109 = vector.broadcast %108 : vector<16x1xf32> to vector<16x32xf32>
    %110 = arith.mulf %105, %109 : vector<16x32xf32>
    %111 = vector.broadcast %91 : vector<1x32xf32> to vector<16x32xf32>
    %112 = arith.mulf %110, %111 : vector<16x32xf32>
    %113 = vector.broadcast %92 : vector<1x32xf32> to vector<16x32xf32>
    %114 = arith.addf %112, %113 : vector<16x32xf32>
    %115 = arith.addf %114, %1 : vector<16x32xf32>
    %c0_45 = arith.constant 0 : index
    %c0_46 = arith.constant 0 : index
    %116 = vector.load %arg2[%c0_45, %c0_46] : memref<32x32xf32, #tpu.memory_space<vmem>>, vector<32x32xf32>
    %c0_47 = arith.constant 0 : index
    %c0_48 = arith.constant 0 : index
    %117 = vector.load %arg3[%c0_47, %c0_48] : memref<32x32xf32, #tpu.memory_space<vmem>>, vector<32x32xf32>
    %118 = arith.addf %116, %117 : vector<32x32xf32>
    %c0_49 = arith.constant 0 : index
    %c0_50 = arith.constant 0 : index
    %119 = vector.load %arg2[%c0_49, %c0_50] : memref<32x32xf32, #tpu.memory_space<vmem>>, vector<32x32xf32>
    %c0_51 = arith.constant 0 : index
    %c0_52 = arith.constant 0 : index
    %120 = vector.load %arg9[%c0_51, %c0_52] : memref<32x32xf32, #tpu.memory_space<vmem>>, vector<32x32xf32>
    %cst_53 = arith.constant dense<0.000000e+00> : vector<16x32xf32>
    %121 = tpu.matmul %115, %120, %cst_53 {dimension_numbers = #tpu.dot_dimension_numbers<[1], [0], [0], [1], [0, 0, 1, 1], [], []>} : vector<16x32xf32>, vector<32x32xf32>, vector<16x32xf32> -> vector<16x32xf32>
    %c0_54 = arith.constant 0 : index
    %c0_55 = arith.constant 0 : index
    %122 = vector.load %arg10[%c0_54, %c0_55] : memref<32x32xf32, #tpu.memory_space<vmem>>, vector<32x32xf32>
    %cst_56 = arith.constant dense<0.000000e+00> : vector<32x32xf32>
    %123 = tpu.matmul %118, %122, %cst_56 {dimension_numbers = #tpu.dot_dimension_numbers<[1], [0], [0], [1], [0, 0, 1, 1], [], []>} : vector<32x32xf32>, vector<32x32xf32>, vector<32x32xf32> -> vector<32x32xf32>
    %c0_57 = arith.constant 0 : index
    %c0_58 = arith.constant 0 : index
    %124 = vector.load %arg11[%c0_57, %c0_58] : memref<32x32xf32, #tpu.memory_space<vmem>>, vector<32x32xf32>
    %cst_59 = arith.constant dense<0.000000e+00> : vector<32x32xf32>
    %125 = tpu.matmul %119, %124, %cst_59 {dimension_numbers = #tpu.dot_dimension_numbers<[1], [0], [0], [1], [0, 0, 1, 1], [], []>} : vector<32x32xf32>, vector<32x32xf32>, vector<32x32xf32> -> vector<32x32xf32>
    %c0_60 = arith.constant 0 : index
    %c0_61 = arith.constant 0 : index
    %126 = vector.load %arg12[%c0_60, %c0_61] : memref<32x32xf32, #tpu.memory_space<vmem>>, vector<32x32xf32>
    %127 = vector.extract_strided_slice %121 {offsets = [0, 0], sizes = [8, 32], strides = [1, 1]} : vector<16x32xf32> to vector<8x32xf32>
    %128 = vector.extract_strided_slice %123 {offsets = [0, 0], sizes = [16, 32], strides = [1, 1]} : vector<32x32xf32> to vector<16x32xf32>
    %129 = vector.extract_strided_slice %125 {offsets = [0, 0], sizes = [16, 32], strides = [1, 1]} : vector<32x32xf32> to vector<16x32xf32>
    %cst_62 = arith.constant 0.000000e+00 : f32
    %130 = vector.broadcast %cst_62 : f32 to vector<8x32xf32>
    %131 = vector.extract_strided_slice %127 {offsets = [0, 0], sizes = [8, 8], strides = [1, 1]} : vector<8x32xf32> to vector<8x8xf32>
    %132 = vector.extract_strided_slice %128 {offsets = [0, 0], sizes = [16, 8], strides = [1, 1]} : vector<16x32xf32> to vector<16x8xf32>
    %cst_63 = arith.constant dense<0.000000e+00> : vector<8x16xf32>
    %133 = tpu.matmul %131, %132, %cst_63 {dimension_numbers = #tpu.dot_dimension_numbers<[1], [1], [0], [0], [0, 0, 1, 0], [], []>} : vector<8x8xf32>, vector<16x8xf32>, vector<8x16xf32> -> vector<8x16xf32>
    %cst_64 = arith.constant dense<0xFF800000> : vector<8xf32>
    %134 = vector.multi_reduction <maximumf>, %133, %cst_64 [1] : vector<8x16xf32> to vector<8xf32>
    %135 = vector.shape_cast %134 : vector<8xf32> to vector<8x1xf32>
    %136 = vector.broadcast %135 : vector<8x1xf32> to vector<8x16xf32>
    %137 = arith.subf %133, %136 : vector<8x16xf32>
    %138 = math.exp %137 : vector<8x16xf32>
    %cst_65 = arith.constant dense<0.000000e+00> : vector<8xf32>
    %139 = vector.multi_reduction <add>, %138, %cst_65 [1] : vector<8x16xf32> to vector<8xf32>
    %140 = vector.shape_cast %139 : vector<8xf32> to vector<8x1xf32>
    %141 = tpu.reciprocal %140 {approx = true} : vector<8x1xf32> -> vector<8x1xf32>
    %142 = vector.broadcast %141 : vector<8x1xf32> to vector<8x16xf32>
    %143 = arith.mulf %138, %142 : vector<8x16xf32>
    %144 = vector.extract_strided_slice %129 {offsets = [0, 0], sizes = [16, 8], strides = [1, 1]} : vector<16x32xf32> to vector<16x8xf32>
    %cst_66 = arith.constant dense<0.000000e+00> : vector<8x8xf32>
    %145 = tpu.matmul %143, %144, %cst_66 {dimension_numbers = #tpu.dot_dimension_numbers<[1], [0], [0], [1], [0, 0, 1, 1], [], []>} : vector<8x16xf32>, vector<16x8xf32>, vector<8x8xf32> -> vector<8x8xf32>
    %146 = vector.extract_strided_slice %126 {offsets = [0, 0], sizes = [8, 32], strides = [1, 1]} : vector<32x32xf32> to vector<8x32xf32>
    %cst_67 = arith.constant dense<0.000000e+00> : vector<8x32xf32>
    %147 = tpu.matmul %145, %146, %cst_67 {dimension_numbers = #tpu.dot_dimension_numbers<[1], [0], [0], [1], [0, 0, 1, 1], [], []>} : vector<8x8xf32>, vector<8x32xf32>, vector<8x32xf32> -> vector<8x32xf32>
    %148 = arith.addf %130, %147 : vector<8x32xf32>
    %149 = vector.extract_strided_slice %127 {offsets = [0, 8], sizes = [8, 8], strides = [1, 1]} : vector<8x32xf32> to vector<8x8xf32>
    %150 = vector.extract_strided_slice %128 {offsets = [0, 8], sizes = [16, 8], strides = [1, 1]} : vector<16x32xf32> to vector<16x8xf32>
    %cst_68 = arith.constant dense<0.000000e+00> : vector<8x16xf32>
    %151 = tpu.matmul %149, %150, %cst_68 {dimension_numbers = #tpu.dot_dimension_numbers<[1], [1], [0], [0], [0, 0, 1, 0], [], []>} : vector<8x8xf32>, vector<16x8xf32>, vector<8x16xf32> -> vector<8x16xf32>
    %cst_69 = arith.constant dense<0xFF800000> : vector<8xf32>
    %152 = vector.multi_reduction <maximumf>, %151, %cst_69 [1] : vector<8x16xf32> to vector<8xf32>
    %153 = vector.shape_cast %152 : vector<8xf32> to vector<8x1xf32>
    %154 = vector.broadcast %153 : vector<8x1xf32> to vector<8x16xf32>
    %155 = arith.subf %151, %154 : vector<8x16xf32>
    %156 = math.exp %155 : vector<8x16xf32>
    %cst_70 = arith.constant dense<0.000000e+00> : vector<8xf32>
    %157 = vector.multi_reduction <add>, %156, %cst_70 [1] : vector<8x16xf32> to vector<8xf32>
    %158 = vector.shape_cast %157 : vector<8xf32> to vector<8x1xf32>
    %159 = tpu.reciprocal %158 {approx = true} : vector<8x1xf32> -> vector<8x1xf32>
    %160 = vector.broadcast %159 : vector<8x1xf32> to vector<8x16xf32>
    %161 = arith.mulf %156, %160 : vector<8x16xf32>
    %162 = vector.extract_strided_slice %129 {offsets = [0, 8], sizes = [16, 8], strides = [1, 1]} : vector<16x32xf32> to vector<16x8xf32>
    %cst_71 = arith.constant dense<0.000000e+00> : vector<8x8xf32>
    %163 = tpu.matmul %161, %162, %cst_71 {dimension_numbers = #tpu.dot_dimension_numbers<[1], [0], [0], [1], [0, 0, 1, 1], [], []>} : vector<8x16xf32>, vector<16x8xf32>, vector<8x8xf32> -> vector<8x8xf32>
    %164 = vector.extract_strided_slice %126 {offsets = [8, 0], sizes = [8, 32], strides = [1, 1]} : vector<32x32xf32> to vector<8x32xf32>
    %cst_72 = arith.constant dense<0.000000e+00> : vector<8x32xf32>
    %165 = tpu.matmul %163, %164, %cst_72 {dimension_numbers = #tpu.dot_dimension_numbers<[1], [0], [0], [1], [0, 0, 1, 1], [], []>} : vector<8x8xf32>, vector<8x32xf32>, vector<8x32xf32> -> vector<8x32xf32>
    %166 = arith.addf %148, %165 : vector<8x32xf32>
    %167 = vector.extract_strided_slice %127 {offsets = [0, 16], sizes = [8, 8], strides = [1, 1]} : vector<8x32xf32> to vector<8x8xf32>
    %168 = vector.extract_strided_slice %128 {offsets = [0, 16], sizes = [16, 8], strides = [1, 1]} : vector<16x32xf32> to vector<16x8xf32>
    %cst_73 = arith.constant dense<0.000000e+00> : vector<8x16xf32>
    %169 = tpu.matmul %167, %168, %cst_73 {dimension_numbers = #tpu.dot_dimension_numbers<[1], [1], [0], [0], [0, 0, 1, 0], [], []>} : vector<8x8xf32>, vector<16x8xf32>, vector<8x16xf32> -> vector<8x16xf32>
    %cst_74 = arith.constant dense<0xFF800000> : vector<8xf32>
    %170 = vector.multi_reduction <maximumf>, %169, %cst_74 [1] : vector<8x16xf32> to vector<8xf32>
    %171 = vector.shape_cast %170 : vector<8xf32> to vector<8x1xf32>
    %172 = vector.broadcast %171 : vector<8x1xf32> to vector<8x16xf32>
    %173 = arith.subf %169, %172 : vector<8x16xf32>
    %174 = math.exp %173 : vector<8x16xf32>
    %cst_75 = arith.constant dense<0.000000e+00> : vector<8xf32>
    %175 = vector.multi_reduction <add>, %174, %cst_75 [1] : vector<8x16xf32> to vector<8xf32>
    %176 = vector.shape_cast %175 : vector<8xf32> to vector<8x1xf32>
    %177 = tpu.reciprocal %176 {approx = true} : vector<8x1xf32> -> vector<8x1xf32>
    %178 = vector.broadcast %177 : vector<8x1xf32> to vector<8x16xf32>
    %179 = arith.mulf %174, %178 : vector<8x16xf32>
    %180 = vector.extract_strided_slice %129 {offsets = [0, 16], sizes = [16, 8], strides = [1, 1]} : vector<16x32xf32> to vector<16x8xf32>
    %cst_76 = arith.constant dense<0.000000e+00> : vector<8x8xf32>
    %181 = tpu.matmul %179, %180, %cst_76 {dimension_numbers = #tpu.dot_dimension_numbers<[1], [0], [0], [1], [0, 0, 1, 1], [], []>} : vector<8x16xf32>, vector<16x8xf32>, vector<8x8xf32> -> vector<8x8xf32>
    %182 = vector.extract_strided_slice %126 {offsets = [16, 0], sizes = [8, 32], strides = [1, 1]} : vector<32x32xf32> to vector<8x32xf32>
    %cst_77 = arith.constant dense<0.000000e+00> : vector<8x32xf32>
    %183 = tpu.matmul %181, %182, %cst_77 {dimension_numbers = #tpu.dot_dimension_numbers<[1], [0], [0], [1], [0, 0, 1, 1], [], []>} : vector<8x8xf32>, vector<8x32xf32>, vector<8x32xf32> -> vector<8x32xf32>
    %184 = arith.addf %166, %183 : vector<8x32xf32>
    %185 = vector.extract_strided_slice %127 {offsets = [0, 24], sizes = [8, 8], strides = [1, 1]} : vector<8x32xf32> to vector<8x8xf32>
    %186 = vector.extract_strided_slice %128 {offsets = [0, 24], sizes = [16, 8], strides = [1, 1]} : vector<16x32xf32> to vector<16x8xf32>
    %cst_78 = arith.constant dense<0.000000e+00> : vector<8x16xf32>
    %187 = tpu.matmul %185, %186, %cst_78 {dimension_numbers = #tpu.dot_dimension_numbers<[1], [1], [0], [0], [0, 0, 1, 0], [], []>} : vector<8x8xf32>, vector<16x8xf32>, vector<8x16xf32> -> vector<8x16xf32>
    %cst_79 = arith.constant dense<0xFF800000> : vector<8xf32>
    %188 = vector.multi_reduction <maximumf>, %187, %cst_79 [1] : vector<8x16xf32> to vector<8xf32>
    %189 = vector.shape_cast %188 : vector<8xf32> to vector<8x1xf32>
    %190 = vector.broadcast %189 : vector<8x1xf32> to vector<8x16xf32>
    %191 = arith.subf %187, %190 : vector<8x16xf32>
    %192 = math.exp %191 : vector<8x16xf32>
    %cst_80 = arith.constant dense<0.000000e+00> : vector<8xf32>
    %193 = vector.multi_reduction <add>, %192, %cst_80 [1] : vector<8x16xf32> to vector<8xf32>
    %194 = vector.shape_cast %193 : vector<8xf32> to vector<8x1xf32>
    %195 = tpu.reciprocal %194 {approx = true} : vector<8x1xf32> -> vector<8x1xf32>
    %196 = vector.broadcast %195 : vector<8x1xf32> to vector<8x16xf32>
    %197 = arith.mulf %192, %196 : vector<8x16xf32>
    %198 = vector.extract_strided_slice %129 {offsets = [0, 24], sizes = [16, 8], strides = [1, 1]} : vector<16x32xf32> to vector<16x8xf32>
    %cst_81 = arith.constant dense<0.000000e+00> : vector<8x8xf32>
    %199 = tpu.matmul %197, %198, %cst_81 {dimension_numbers = #tpu.dot_dimension_numbers<[1], [0], [0], [1], [0, 0, 1, 1], [], []>} : vector<8x16xf32>, vector<16x8xf32>, vector<8x8xf32> -> vector<8x8xf32>
    %200 = vector.extract_strided_slice %126 {offsets = [24, 0], sizes = [8, 32], strides = [1, 1]} : vector<32x32xf32> to vector<8x32xf32>
    %cst_82 = arith.constant dense<0.000000e+00> : vector<8x32xf32>
    %201 = tpu.matmul %199, %200, %cst_82 {dimension_numbers = #tpu.dot_dimension_numbers<[1], [0], [0], [1], [0, 0, 1, 1], [], []>} : vector<8x8xf32>, vector<8x32xf32>, vector<8x32xf32> -> vector<8x32xf32>
    %202 = arith.addf %184, %201 : vector<8x32xf32>
    %203 = vector.extract_strided_slice %121 {offsets = [8, 0], sizes = [8, 32], strides = [1, 1]} : vector<16x32xf32> to vector<8x32xf32>
    %204 = vector.extract_strided_slice %123 {offsets = [16, 0], sizes = [16, 32], strides = [1, 1]} : vector<32x32xf32> to vector<16x32xf32>
    %205 = vector.extract_strided_slice %125 {offsets = [16, 0], sizes = [16, 32], strides = [1, 1]} : vector<32x32xf32> to vector<16x32xf32>
    %cst_83 = arith.constant 0.000000e+00 : f32
    %206 = vector.broadcast %cst_83 : f32 to vector<8x32xf32>
    %207 = vector.extract_strided_slice %203 {offsets = [0, 0], sizes = [8, 8], strides = [1, 1]} : vector<8x32xf32> to vector<8x8xf32>
    %208 = vector.extract_strided_slice %204 {offsets = [0, 0], sizes = [16, 8], strides = [1, 1]} : vector<16x32xf32> to vector<16x8xf32>
    %cst_84 = arith.constant dense<0.000000e+00> : vector<8x16xf32>
    %209 = tpu.matmul %207, %208, %cst_84 {dimension_numbers = #tpu.dot_dimension_numbers<[1], [1], [0], [0], [0, 0, 1, 0], [], []>} : vector<8x8xf32>, vector<16x8xf32>, vector<8x16xf32> -> vector<8x16xf32>
    %cst_85 = arith.constant dense<0xFF800000> : vector<8xf32>
    %210 = vector.multi_reduction <maximumf>, %209, %cst_85 [1] : vector<8x16xf32> to vector<8xf32>
    %211 = vector.shape_cast %210 : vector<8xf32> to vector<8x1xf32>
    %212 = vector.broadcast %211 : vector<8x1xf32> to vector<8x16xf32>
    %213 = arith.subf %209, %212 : vector<8x16xf32>
    %214 = math.exp %213 : vector<8x16xf32>
    %cst_86 = arith.constant dense<0.000000e+00> : vector<8xf32>
    %215 = vector.multi_reduction <add>, %214, %cst_86 [1] : vector<8x16xf32> to vector<8xf32>
    %216 = vector.shape_cast %215 : vector<8xf32> to vector<8x1xf32>
    %217 = tpu.reciprocal %216 {approx = true} : vector<8x1xf32> -> vector<8x1xf32>
    %218 = vector.broadcast %217 : vector<8x1xf32> to vector<8x16xf32>
    %219 = arith.mulf %214, %218 : vector<8x16xf32>
    %220 = vector.extract_strided_slice %205 {offsets = [0, 0], sizes = [16, 8], strides = [1, 1]} : vector<16x32xf32> to vector<16x8xf32>
    %cst_87 = arith.constant dense<0.000000e+00> : vector<8x8xf32>
    %221 = tpu.matmul %219, %220, %cst_87 {dimension_numbers = #tpu.dot_dimension_numbers<[1], [0], [0], [1], [0, 0, 1, 1], [], []>} : vector<8x16xf32>, vector<16x8xf32>, vector<8x8xf32> -> vector<8x8xf32>
    %222 = vector.extract_strided_slice %126 {offsets = [0, 0], sizes = [8, 32], strides = [1, 1]} : vector<32x32xf32> to vector<8x32xf32>
    %cst_88 = arith.constant dense<0.000000e+00> : vector<8x32xf32>
    %223 = tpu.matmul %221, %222, %cst_88 {dimension_numbers = #tpu.dot_dimension_numbers<[1], [0], [0], [1], [0, 0, 1, 1], [], []>} : vector<8x8xf32>, vector<8x32xf32>, vector<8x32xf32> -> vector<8x32xf32>
    %224 = arith.addf %206, %223 : vector<8x32xf32>
    %225 = vector.extract_strided_slice %203 {offsets = [0, 8], sizes = [8, 8], strides = [1, 1]} : vector<8x32xf32> to vector<8x8xf32>
    %226 = vector.extract_strided_slice %204 {offsets = [0, 8], sizes = [16, 8], strides = [1, 1]} : vector<16x32xf32> to vector<16x8xf32>
    %cst_89 = arith.constant dense<0.000000e+00> : vector<8x16xf32>
    %227 = tpu.matmul %225, %226, %cst_89 {dimension_numbers = #tpu.dot_dimension_numbers<[1], [1], [0], [0], [0, 0, 1, 0], [], []>} : vector<8x8xf32>, vector<16x8xf32>, vector<8x16xf32> -> vector<8x16xf32>
    %cst_90 = arith.constant dense<0xFF800000> : vector<8xf32>
    %228 = vector.multi_reduction <maximumf>, %227, %cst_90 [1] : vector<8x16xf32> to vector<8xf32>
    %229 = vector.shape_cast %228 : vector<8xf32> to vector<8x1xf32>
    %230 = vector.broadcast %229 : vector<8x1xf32> to vector<8x16xf32>
    %231 = arith.subf %227, %230 : vector<8x16xf32>
    %232 = math.exp %231 : vector<8x16xf32>
    %cst_91 = arith.constant dense<0.000000e+00> : vector<8xf32>
    %233 = vector.multi_reduction <add>, %232, %cst_91 [1] : vector<8x16xf32> to vector<8xf32>
    %234 = vector.shape_cast %233 : vector<8xf32> to vector<8x1xf32>
    %235 = tpu.reciprocal %234 {approx = true} : vector<8x1xf32> -> vector<8x1xf32>
    %236 = vector.broadcast %235 : vector<8x1xf32> to vector<8x16xf32>
    %237 = arith.mulf %232, %236 : vector<8x16xf32>
    %238 = vector.extract_strided_slice %205 {offsets = [0, 8], sizes = [16, 8], strides = [1, 1]} : vector<16x32xf32> to vector<16x8xf32>
    %cst_92 = arith.constant dense<0.000000e+00> : vector<8x8xf32>
    %239 = tpu.matmul %237, %238, %cst_92 {dimension_numbers = #tpu.dot_dimension_numbers<[1], [0], [0], [1], [0, 0, 1, 1], [], []>} : vector<8x16xf32>, vector<16x8xf32>, vector<8x8xf32> -> vector<8x8xf32>
    %240 = vector.extract_strided_slice %126 {offsets = [8, 0], sizes = [8, 32], strides = [1, 1]} : vector<32x32xf32> to vector<8x32xf32>
    %cst_93 = arith.constant dense<0.000000e+00> : vector<8x32xf32>
    %241 = tpu.matmul %239, %240, %cst_93 {dimension_numbers = #tpu.dot_dimension_numbers<[1], [0], [0], [1], [0, 0, 1, 1], [], []>} : vector<8x8xf32>, vector<8x32xf32>, vector<8x32xf32> -> vector<8x32xf32>
    %242 = arith.addf %224, %241 : vector<8x32xf32>
    %243 = vector.extract_strided_slice %203 {offsets = [0, 16], sizes = [8, 8], strides = [1, 1]} : vector<8x32xf32> to vector<8x8xf32>
    %244 = vector.extract_strided_slice %204 {offsets = [0, 16], sizes = [16, 8], strides = [1, 1]} : vector<16x32xf32> to vector<16x8xf32>
    %cst_94 = arith.constant dense<0.000000e+00> : vector<8x16xf32>
    %245 = tpu.matmul %243, %244, %cst_94 {dimension_numbers = #tpu.dot_dimension_numbers<[1], [1], [0], [0], [0, 0, 1, 0], [], []>} : vector<8x8xf32>, vector<16x8xf32>, vector<8x16xf32> -> vector<8x16xf32>
    %cst_95 = arith.constant dense<0xFF800000> : vector<8xf32>
    %246 = vector.multi_reduction <maximumf>, %245, %cst_95 [1] : vector<8x16xf32> to vector<8xf32>
    %247 = vector.shape_cast %246 : vector<8xf32> to vector<8x1xf32>
    %248 = vector.broadcast %247 : vector<8x1xf32> to vector<8x16xf32>
    %249 = arith.subf %245, %248 : vector<8x16xf32>
    %250 = math.exp %249 : vector<8x16xf32>
    %cst_96 = arith.constant dense<0.000000e+00> : vector<8xf32>
    %251 = vector.multi_reduction <add>, %250, %cst_96 [1] : vector<8x16xf32> to vector<8xf32>
    %252 = vector.shape_cast %251 : vector<8xf32> to vector<8x1xf32>
    %253 = tpu.reciprocal %252 {approx = true} : vector<8x1xf32> -> vector<8x1xf32>
    %254 = vector.broadcast %253 : vector<8x1xf32> to vector<8x16xf32>
    %255 = arith.mulf %250, %254 : vector<8x16xf32>
    %256 = vector.extract_strided_slice %205 {offsets = [0, 16], sizes = [16, 8], strides = [1, 1]} : vector<16x32xf32> to vector<16x8xf32>
    %cst_97 = arith.constant dense<0.000000e+00> : vector<8x8xf32>
    %257 = tpu.matmul %255, %256, %cst_97 {dimension_numbers = #tpu.dot_dimension_numbers<[1], [0], [0], [1], [0, 0, 1, 1], [], []>} : vector<8x16xf32>, vector<16x8xf32>, vector<8x8xf32> -> vector<8x8xf32>
    %258 = vector.extract_strided_slice %126 {offsets = [16, 0], sizes = [8, 32], strides = [1, 1]} : vector<32x32xf32> to vector<8x32xf32>
    %cst_98 = arith.constant dense<0.000000e+00> : vector<8x32xf32>
    %259 = tpu.matmul %257, %258, %cst_98 {dimension_numbers = #tpu.dot_dimension_numbers<[1], [0], [0], [1], [0, 0, 1, 1], [], []>} : vector<8x8xf32>, vector<8x32xf32>, vector<8x32xf32> -> vector<8x32xf32>
    %260 = arith.addf %242, %259 : vector<8x32xf32>
    %261 = vector.extract_strided_slice %203 {offsets = [0, 24], sizes = [8, 8], strides = [1, 1]} : vector<8x32xf32> to vector<8x8xf32>
    %262 = vector.extract_strided_slice %204 {offsets = [0, 24], sizes = [16, 8], strides = [1, 1]} : vector<16x32xf32> to vector<16x8xf32>
    %cst_99 = arith.constant dense<0.000000e+00> : vector<8x16xf32>
    %263 = tpu.matmul %261, %262, %cst_99 {dimension_numbers = #tpu.dot_dimension_numbers<[1], [1], [0], [0], [0, 0, 1, 0], [], []>} : vector<8x8xf32>, vector<16x8xf32>, vector<8x16xf32> -> vector<8x16xf32>
    %cst_100 = arith.constant dense<0xFF800000> : vector<8xf32>
    %264 = vector.multi_reduction <maximumf>, %263, %cst_100 [1] : vector<8x16xf32> to vector<8xf32>
    %265 = vector.shape_cast %264 : vector<8xf32> to vector<8x1xf32>
    %266 = vector.broadcast %265 : vector<8x1xf32> to vector<8x16xf32>
    %267 = arith.subf %263, %266 : vector<8x16xf32>
    %268 = math.exp %267 : vector<8x16xf32>
    %cst_101 = arith.constant dense<0.000000e+00> : vector<8xf32>
    %269 = vector.multi_reduction <add>, %268, %cst_101 [1] : vector<8x16xf32> to vector<8xf32>
    %270 = vector.shape_cast %269 : vector<8xf32> to vector<8x1xf32>
    %271 = tpu.reciprocal %270 {approx = true} : vector<8x1xf32> -> vector<8x1xf32>
    %272 = vector.broadcast %271 : vector<8x1xf32> to vector<8x16xf32>
    %273 = arith.mulf %268, %272 : vector<8x16xf32>
    %274 = vector.extract_strided_slice %205 {offsets = [0, 24], sizes = [16, 8], strides = [1, 1]} : vector<16x32xf32> to vector<16x8xf32>
    %cst_102 = arith.constant dense<0.000000e+00> : vector<8x8xf32>
    %275 = tpu.matmul %273, %274, %cst_102 {dimension_numbers = #tpu.dot_dimension_numbers<[1], [0], [0], [1], [0, 0, 1, 1], [], []>} : vector<8x16xf32>, vector<16x8xf32>, vector<8x8xf32> -> vector<8x8xf32>
    %276 = vector.extract_strided_slice %126 {offsets = [24, 0], sizes = [8, 32], strides = [1, 1]} : vector<32x32xf32> to vector<8x32xf32>
    %cst_103 = arith.constant dense<0.000000e+00> : vector<8x32xf32>
    %277 = tpu.matmul %275, %276, %cst_103 {dimension_numbers = #tpu.dot_dimension_numbers<[1], [0], [0], [1], [0, 0, 1, 1], [], []>} : vector<8x8xf32>, vector<8x32xf32>, vector<8x32xf32> -> vector<8x32xf32>
    %278 = arith.addf %260, %277 : vector<8x32xf32>
    %279 = tpu.concatenate %202, %278 in 0 : vector<8x32xf32>, vector<8x32xf32> -> vector<16x32xf32>
    %c0_104 = arith.constant 0 : index
    %c0_105 = arith.constant 0 : index
    %280 = vector.load %arg13[%c0_104, %c0_105] : memref<1x32xf32, #tpu.memory_space<vmem>>, vector<1x32xf32>
    %281 = vector.broadcast %280 : vector<1x32xf32> to vector<16x32xf32>
    %282 = arith.addf %279, %281 : vector<16x32xf32>
    %283 = arith.addf %114, %282 : vector<16x32xf32>
    %c0_106 = arith.constant 0 : index
    %c0_107 = arith.constant 0 : index
    %284 = vector.load %arg20[%c0_106, %c0_107] : memref<1x32xf32, #tpu.memory_space<vmem>>, vector<1x32xf32>
    %c0_108 = arith.constant 0 : index
    %c0_109 = arith.constant 0 : index
    %285 = vector.load %arg21[%c0_108, %c0_109] : memref<1x32xf32, #tpu.memory_space<vmem>>, vector<1x32xf32>
    %cst_110 = arith.constant dense<0.000000e+00> : vector<16xf32>
    %286 = vector.multi_reduction <add>, %283, %cst_110 [1] : vector<16x32xf32> to vector<16xf32>
    %287 = vector.shape_cast %286 : vector<16xf32> to vector<16x1xf32>
    %cst_111 = arith.constant 3.200000e+01 : f32
    %288 = vector.broadcast %cst_111 : f32 to vector<16x1xf32>
    %289 = arith.divf %287, %288 : vector<16x1xf32>
    %290 = vector.broadcast %289 : vector<16x1xf32> to vector<16x32xf32>
    %291 = arith.subf %283, %290 : vector<16x32xf32>
    %292 = arith.mulf %291, %291 : vector<16x32xf32>
    %cst_112 = arith.constant dense<0.000000e+00> : vector<16xf32>
    %293 = vector.multi_reduction <add>, %292, %cst_112 [1] : vector<16x32xf32> to vector<16xf32>
    %294 = vector.shape_cast %293 : vector<16xf32> to vector<16x1xf32>
    %cst_113 = arith.constant 3.200000e+01 : f32
    %295 = vector.broadcast %cst_113 : f32 to vector<16x1xf32>
    %296 = arith.divf %294, %295 : vector<16x1xf32>
    %297 = vector.broadcast %289 : vector<16x1xf32> to vector<16x32xf32>
    %298 = arith.subf %283, %297 : vector<16x32xf32>
    %cst_114 = arith.constant 9.99999974E-6 : f32
    %299 = vector.broadcast %cst_114 : f32 to vector<16x1xf32>
    %300 = arith.addf %296, %299 : vector<16x1xf32>
    %301 = math.rsqrt %300 : vector<16x1xf32>
    %302 = vector.broadcast %301 : vector<16x1xf32> to vector<16x32xf32>
    %303 = arith.mulf %298, %302 : vector<16x32xf32>
    %304 = vector.broadcast %284 : vector<1x32xf32> to vector<16x32xf32>
    %305 = arith.mulf %303, %304 : vector<16x32xf32>
    %306 = vector.broadcast %285 : vector<1x32xf32> to vector<16x32xf32>
    %307 = arith.addf %305, %306 : vector<16x32xf32>
    %c0_115 = arith.constant 0 : index
    %c0_116 = arith.constant 0 : index
    %308 = vector.load %arg14[%c0_115, %c0_116] : memref<32x64xf32, #tpu.memory_space<vmem>>, vector<32x64xf32>
    %cst_117 = arith.constant dense<0.000000e+00> : vector<16x64xf32>
    %309 = tpu.matmul %307, %308, %cst_117 {dimension_numbers = #tpu.dot_dimension_numbers<[1], [0], [0], [1], [0, 0, 1, 1], [], []>} : vector<16x32xf32>, vector<32x64xf32>, vector<16x64xf32> -> vector<16x64xf32>
    %c0_118 = arith.constant 0 : index
    %c0_119 = arith.constant 0 : index
    %310 = vector.load %arg15[%c0_118, %c0_119] : memref<1x64xf32, #tpu.memory_space<vmem>>, vector<1x64xf32>
    %311 = vector.broadcast %310 : vector<1x64xf32> to vector<16x64xf32>
    %312 = arith.addf %309, %311 : vector<16x64xf32>
    %cst_120 = arith.constant 0.000000e+00 : f32
    %313 = vector.broadcast %cst_120 : f32 to vector<16x64xf32>
    %314 = arith.maximumf %312, %313 : vector<16x64xf32>
    %c0_121 = arith.constant 0 : index
    %c0_122 = arith.constant 0 : index
    %315 = vector.load %arg16[%c0_121, %c0_122] : memref<64x32xf32, #tpu.memory_space<vmem>>, vector<64x32xf32>
    %cst_123 = arith.constant dense<0.000000e+00> : vector<16x32xf32>
    %316 = tpu.matmul %314, %315, %cst_123 {dimension_numbers = #tpu.dot_dimension_numbers<[1], [0], [0], [1], [0, 0, 1, 1], [], []>} : vector<16x64xf32>, vector<64x32xf32>, vector<16x32xf32> -> vector<16x32xf32>
    %c0_124 = arith.constant 0 : index
    %c0_125 = arith.constant 0 : index
    %317 = vector.load %arg17[%c0_124, %c0_125] : memref<1x32xf32, #tpu.memory_space<vmem>>, vector<1x32xf32>
    %318 = vector.broadcast %317 : vector<1x32xf32> to vector<16x32xf32>
    %319 = arith.addf %316, %318 : vector<16x32xf32>
    %320 = arith.addf %307, %319 : vector<16x32xf32>
    %c0_126 = arith.constant 0 : index
    %c0_127 = arith.constant 0 : index
    %321 = vector.load %arg22[%c0_126, %c0_127] : memref<1x32xf32, #tpu.memory_space<vmem>>, vector<1x32xf32>
    %c0_128 = arith.constant 0 : index
    %c0_129 = arith.constant 0 : index
    %322 = vector.load %arg23[%c0_128, %c0_129] : memref<1x32xf32, #tpu.memory_space<vmem>>, vector<1x32xf32>
    %cst_130 = arith.constant dense<0.000000e+00> : vector<16xf32>
    %323 = vector.multi_reduction <add>, %320, %cst_130 [1] : vector<16x32xf32> to vector<16xf32>
    %324 = vector.shape_cast %323 : vector<16xf32> to vector<16x1xf32>
    %cst_131 = arith.constant 3.200000e+01 : f32
    %325 = vector.broadcast %cst_131 : f32 to vector<16x1xf32>
    %326 = arith.divf %324, %325 : vector<16x1xf32>
    %327 = vector.broadcast %326 : vector<16x1xf32> to vector<16x32xf32>
    %328 = arith.subf %320, %327 : vector<16x32xf32>
    %329 = arith.mulf %328, %328 : vector<16x32xf32>
    %cst_132 = arith.constant dense<0.000000e+00> : vector<16xf32>
    %330 = vector.multi_reduction <add>, %329, %cst_132 [1] : vector<16x32xf32> to vector<16xf32>
    %331 = vector.shape_cast %330 : vector<16xf32> to vector<16x1xf32>
    %cst_133 = arith.constant 3.200000e+01 : f32
    %332 = vector.broadcast %cst_133 : f32 to vector<16x1xf32>
    %333 = arith.divf %331, %332 : vector<16x1xf32>
    %334 = vector.broadcast %326 : vector<16x1xf32> to vector<16x32xf32>
    %335 = arith.subf %320, %334 : vector<16x32xf32>
    %cst_134 = arith.constant 9.99999974E-6 : f32
    %336 = vector.broadcast %cst_134 : f32 to vector<16x1xf32>
    %337 = arith.addf %333, %336 : vector<16x1xf32>
    %338 = math.rsqrt %337 : vector<16x1xf32>
    %339 = vector.broadcast %338 : vector<16x1xf32> to vector<16x32xf32>
    %340 = arith.mulf %335, %339 : vector<16x32xf32>
    %341 = vector.broadcast %321 : vector<1x32xf32> to vector<16x32xf32>
    %342 = arith.mulf %340, %341 : vector<16x32xf32>
    %343 = vector.broadcast %322 : vector<1x32xf32> to vector<16x32xf32>
    %344 = arith.addf %342, %343 : vector<16x32xf32>
    %c0_135 = arith.constant 0 : index
    %c0_136 = arith.constant 0 : index
    %345 = vector.load %arg24[%c0_135, %c0_136] : memref<16x32xf32, #tpu.memory_space<vmem>>, vector<16x32xf32>
    tpu.vector_store %arg24[%c0_135, %c0_136], %344 {strides = array<i32>} : memref<16x32xf32, #tpu.memory_space<vmem>>, vector<16x32xf32>,
    return
  }
}

</mosaic_0001>

<llo_original>
// kernel: tpu_custom_call.1
$region0: #{tpu_custom_call.1}
  #allocation0 [shape = 'u32[]', space=smem, size = 0x4, offset = 0x4, fixed_abs, tag = 'smem constant byte address 0x4 - core index']
  #allocation1 [shape = 'u32[144,128]{1,0:T(1,128)}', space=vmem, size = 0x12000, scoped, tag = 'internal scratch']
  %s0 = inlined_call_operand.hbm [shape: f32[16,32], index: 0, kind: input, shape index: {}]
  %s1 = inlined_call_operand.hbm [shape: f32[16,32], index: 1, kind: input, shape index: {}]
  %s2 = inlined_call_operand.vmem [shape: f32[32,32], index: 2, kind: input, shape index: {}]
  %s3 = inlined_call_operand.vmem [shape: f32[32,32], index: 3, kind: input, shape index: {}]
  %s4 = inlined_call_operand.vmem [shape: f32[32,32], index: 4, kind: input, shape index: {}]
  %s5 = inlined_call_operand.hbm [shape: f32[32,32], index: 5, kind: input, shape index: {}]
  %s6 = inlined_call_operand.hbm [shape: f32[32,32], index: 6, kind: input, shape index: {}]
  %s7 = inlined_call_operand.hbm [shape: f32[32,32], index: 7, kind: input, shape index: {}]
  %s8 = inlined_call_operand.vmem [shape: f32[1,32], index: 8, kind: input, shape index: {}]
  %s9 = inlined_call_operand.hbm [shape: f32[32,32], index: 9, kind: input, shape index: {}]
  %s10 = inlined_call_operand.hbm [shape: f32[32,32], index: 10, kind: input, shape index: {}]
  %s11 = inlined_call_operand.hbm [shape: f32[32,32], index: 11, kind: input, shape index: {}]
  %s12 = inlined_call_operand.hbm [shape: f32[32,32], index: 12, kind: input, shape index: {}]
  %s13 = inlined_call_operand.vmem [shape: f32[1,32], index: 13, kind: input, shape index: {}]
  %s14 = inlined_call_operand.hbm [shape: f32[32,64], index: 14, kind: input, shape index: {}]
  %s15 = inlined_call_operand.vmem [shape: f32[1,64], index: 15, kind: input, shape index: {}]
  %s16 = inlined_call_operand.vmem [shape: f32[64,32], index: 16, kind: input, shape index: {}]
  %s17 = inlined_call_operand.vmem [shape: f32[1,32], index: 17, kind: input, shape index: {}]
  %s18 = inlined_call_operand.vmem [shape: f32[1,32], index: 18, kind: input, shape index: {}]
  %s19 = inlined_call_operand.vmem [shape: f32[1,32], index: 19, kind: input, shape index: {}]
  %s20 = inlined_call_operand.vmem [shape: f32[1,32], index: 20, kind: input, shape index: {}]
  %s21 = inlined_call_operand.vmem [shape: f32[1,32], index: 21, kind: input, shape index: {}]
  %s22 = inlined_call_operand.vmem [shape: f32[1,32], index: 22, kind: input, shape index: {}]
  %s23 = inlined_call_operand.vmem [shape: f32[1,32], index: 23, kind: input, shape index: {}]
  %s24 = inlined_call_operand.hbm [shape: f32[16,32], index: 24, kind: output, shape index: {}]
  %s25 = sld [smem:[#allocation0]]
  $region146: #{tpu_custom_call.1} parent=0
    _
  %s27 = ssub.s32 1, %s25
  %s28 = scalar_select 0, %s27, %s25
  $region1: #{tpu_custom_call.1} parent=0
    #allocation2 [shape = 'u8[8192]{0}', space=vmem, size = 0x2000, scoped, tag = 'input window, operand 0, single buffered']
    #allocation3 [shape = 's32[1]{0}', space=sflag, size = 0x4, scoped, tag = 'scoped memory for tpu_custom_call.1']
    #allocation4 [shape = 's32[1]{0}', space=sflag, size = 0x4, scoped, tag = 'scoped memory for tpu_custom_call.1']
    #allocation5 [shape = 'u8[8192]{0}', space=vmem, size = 0x2000, scoped, tag = 'input window, operand 1, single buffered']
    #allocation6 [shape = 's32[1]{0}', space=sflag, size = 0x4, scoped, tag = 'scoped memory for tpu_custom_call.1']
    #allocation7 [shape = 'u8[16384]{0}', space=vmem, size = 0x4000, scoped, tag = 'input window, operand 5, single buffered']
    #allocation8 [shape = 'u8[16384]{0}', space=vmem, size = 0x4000, scoped, tag = 'input window, operand 6, single buffered']
    #allocation9 [shape = 's32[1]{0}', space=sflag, size = 0x4, scoped, tag = 'scoped memory for tpu_custom_call.1']
    #allocation10 [shape = 'u8[16384]{0}', space=vmem, size = 0x4000, scoped, tag = 'input window, operand 7, single buffered']
    #allocation11 [shape = 'u8[16384]{0}', space=vmem, size = 0x4000, scoped, tag = 'input window, operand 9, single buffered']
    #allocation12 [shape = 's32[1]{0}', space=sflag, size = 0x4, scoped, tag = 'scoped memory for tpu_custom_call.1']
    #allocation13 [shape = 'u8[16384]{0}', space=vmem, size = 0x4000, scoped, tag = 'input window, operand 10, single buffered']
    #allocation14 [shape = 'u8[16384]{0}', space=vmem, size = 0x4000, scoped, tag = 'input window, operand 11, single buffered']
    #allocation15 [shape = 's32[1]{0}', space=sflag, size = 0x4, scoped, tag = 'scoped memory for tpu_custom_call.1']
    #allocation16 [shape = 'u8[16384]{0}', space=vmem, size = 0x4000, scoped, tag = 'input window, operand 12, single buffered']
    #allocation17 [shape = 'u8[16384]{0}', space=vmem, size = 0x4000, scoped, tag = 'input window, operand 14, single buffered']
    #allocation18 [shape = 's32[1]{0}', space=sflag, size = 0x4, scoped, tag = 'scoped memory for tpu_custom_call.1']
    #allocation19 [shape = 'u8[8192]{0}', space=vmem, size = 0x2000, scoped, tag = 'output window, operand 0, single buffered']
    %29 = vsyncpa [#allocation3], 0
    %30 = vsyncpa [#allocation6], 0
    %31 = vsyncpa [#allocation9], 0
    %32 = vsyncpa [#allocation12], 0
    %33 = vsyncpa [#allocation15], 0
    %34 = vsyncpa [#allocation18], 0
    %35 = vsyncpa [#allocation4], 0
    // Predicated region
    $region2: #{tpu_custom_call.1} parent=1 // pred_check
      _
    $region3: #{tpu_custom_call.1} parent=1 // pred_check_branch
      %37 = sbr.rel (0) target = $region5
    $region4: #{tpu_custom_call.1} parent=1 // pred_region
      %s39 = ssub.s32 256, 256
      %40 = vsyncadd [#allocation3], %s39
      %s41 = sshll.u32 [#allocation2], 4
      %s42 = int_to_ptr.vmem [resolvable:$true] %s41
      %47 = dma.hbm_to_vmem [thread:$0]  %s0, 256, %s42, [#allocation3], 128, 128, 8
    $region5: #{tpu_custom_call.1} parent=1 // pred_fallthru
      _
    // Predicated region
    $region6: #{tpu_custom_call.1} parent=1 // pred_check
      _
    $region7: #{tpu_custom_call.1} parent=1 // pred_check_branch
      %49 = sbr.rel (0) target = $region9
    $region8: #{tpu_custom_call.1} parent=1 // pred_region
      %s51 = ssub.s32 256, 256
      %52 = vsyncadd [#allocation6], %s51
      %s53 = sshll.u32 [#allocation5], 4
      %s54 = int_to_ptr.vmem [resolvable:$true] %s53
      %59 = dma.hbm_to_vmem [thread:$0]  %s1, 256, %s54, [#allocation6], 128, 128, 8
    $region9: #{tpu_custom_call.1} parent=1 // pred_fallthru
      _
    // Predicated region
    $region10: #{tpu_custom_call.1} parent=1 // pred_check
      _
    $region11: #{tpu_custom_call.1} parent=1 // pred_check_branch
      %61 = sbr.rel (0) target = $region13
    $region12: #{tpu_custom_call.1} parent=1 // pred_region
      _
    $region13: #{tpu_custom_call.1} parent=1 // pred_fallthru
      _
    // Predicated region
    $region14: #{tpu_custom_call.1} parent=1 // pred_check
      _
    $region15: #{tpu_custom_call.1} parent=1 // pred_check_branch
      %63 = sbr.rel (0) target = $region17
    $region16: #{tpu_custom_call.1} parent=1 // pred_region
      _
    $region17: #{tpu_custom_call.1} parent=1 // pred_fallthru
      _
    // Predicated region
    $region18: #{tpu_custom_call.1} parent=1 // pred_check
      _
    $region19: #{tpu_custom_call.1} parent=1 // pred_check_branch
      %65 = sbr.rel (0) target = $region21
    $region20: #{tpu_custom_call.1} parent=1 // pred_region
      _
    $region21: #{tpu_custom_call.1} parent=1 // pred_fallthru
      _
    // Predicated region
    $region22: #{tpu_custom_call.1} parent=1 // pred_check
      _
    $region23: #{tpu_custom_call.1} parent=1 // pred_check_branch
      %67 = sbr.rel (0) target = $region25
    $region24: #{tpu_custom_call.1} parent=1 // pred_region
      %s69 = ssub.s32 512, 512
      %70 = vsyncadd [#allocation6], %s69
      %s71 = sshll.u32 [#allocation7], 4
      %s72 = int_to_ptr.vmem [resolvable:$true] %s71
      %77 = dma.hbm_to_vmem [thread:$0]  %s5, 512, %s72, [#allocation6], 128, 128, 8
    $region25: #{tpu_custom_call.1} parent=1 // pred_fallthru
      _
    // Predicated region
    $region26: #{tpu_custom_call.1} parent=1 // pred_check
      _
    $region27: #{tpu_custom_call.1} parent=1 // pred_check_branch
      %79 = sbr.rel (0) target = $region29
    $region28: #{tpu_custom_call.1} parent=1 // pred_region
      %s81 = ssub.s32 512, 512
      %82 = vsyncadd [#allocation9], %s81
      %s83 = sshll.u32 [#allocation8], 4
      %s84 = int_to_ptr.vmem [resolvable:$true] %s83
      %89 = dma.hbm_to_vmem [thread:$0]  %s6, 512, %s84, [#allocation9], 128, 128, 8
    $region29: #{tpu_custom_call.1} parent=1 // pred_fallthru
      _
    // Predicated region
    $region30: #{tpu_custom_call.1} parent=1 // pred_check
      _
    $region31: #{tpu_custom_call.1} parent=1 // pred_check_branch
      %91 = sbr.rel (0) target = $region33
    $region32: #{tpu_custom_call.1} parent=1 // pred_region
      %s93 = ssub.s32 512, 512
      %94 = vsyncadd [#allocation9], %s93
      %s95 = sshll.u32 [#allocation10], 4
      %s96 = int_to_ptr.vmem [resolvable:$true] %s95
      %101 = dma.hbm_to_vmem [thread:$0]  %s7, 512, %s96, [#allocation9], 128, 128, 8
    $region33: #{tpu_custom_call.1} parent=1 // pred_fallthru
      _
    // Predicated region
    $region34: #{tpu_custom_call.1} parent=1 // pred_check
      _
    $region35: #{tpu_custom_call.1} parent=1 // pred_check_branch
      %103 = sbr.rel (0) target = $region37
    $region36: #{tpu_custom_call.1} parent=1 // pred_region
      _
    $region37: #{tpu_custom_call.1} parent=1 // pred_fallthru
      _
    // Predicated region
    $region38: #{tpu_custom_call.1} parent=1 // pred_check
      _
    $region39: #{tpu_custom_call.1} parent=1 // pred_check_branch
      %105 = sbr.rel (0) target = $region41
    $region40: #{tpu_custom_call.1} parent=1 // pred_region
      %s107 = ssub.s32 512, 512
      %108 = vsyncadd [#allocation12], %s107
      %s109 = sshll.u32 [#allocation11], 4
      %s110 = int_to_ptr.vmem [resolvable:$true] %s109
      %115 = dma.hbm_to_vmem [thread:$0]  %s9, 512, %s110, [#allocation12], 128, 128, 8
    $region41: #{tpu_custom_call.1} parent=1 // pred_fallthru
      _
    // Predicated region
    $region42: #{tpu_custom_call.1} parent=1 // pred_check
      _
    $region43: #{tpu_custom_call.1} parent=1 // pred_check_branch
      %117 = sbr.rel (0) target = $region45
    $region44: #{tpu_custom_call.1} parent=1 // pred_region
      %s119 = ssub.s32 512, 512
      %120 = vsyncadd [#allocation12], %s119
      %s121 = sshll.u32 [#allocation13], 4
      %s122 = int_to_ptr.vmem [resolvable:$true] %s121
      %127 = dma.hbm_to_vmem [thread:$0]  %s10, 512, %s122, [#allocation12], 128, 128, 8
    $region45: #{tpu_custom_call.1} parent=1 // pred_fallthru
      _
    // Predicated region
    $region46: #{tpu_custom_call.1} parent=1 // pred_check
      _
    $region47: #{tpu_custom_call.1} parent=1 // pred_check_branch
      %129 = sbr.rel (0) target = $region49
    $region48: #{tpu_custom_call.1} parent=1 // pred_region
      %s131 = ssub.s32 512, 512
      %132 = vsyncadd [#allocation15], %s131
      %s133 = sshll.u32 [#allocation14], 4
      %s134 = int_to_ptr.vmem [resolvable:$true] %s133
      %139 = dma.hbm_to_vmem [thread:$0]  %s11, 512, %s134, [#allocation15], 128, 128, 8
    $region49: #{tpu_custom_call.1} parent=1 // pred_fallthru
      _
    // Predicated region
    $region50: #{tpu_custom_call.1} parent=1 // pred_check
      _
    $region51: #{tpu_custom_call.1} parent=1 // pred_check_branch
      %141 = sbr.rel (0) target = $region53
    $region52: #{tpu_custom_call.1} parent=1 // pred_region
      %s143 = ssub.s32 512, 512
      %144 = vsyncadd [#allocation15], %s143
      %s145 = sshll.u32 [#allocation16], 4
      %s146 = int_to_ptr.vmem [resolvable:$true] %s145
      %151 = dma.hbm_to_vmem [thread:$0]  %s12, 512, %s146, [#allocation15], 128, 128, 8
    $region53: #{tpu_custom_call.1} parent=1 // pred_fallthru
      _
    // Predicated region
    $region54: #{tpu_custom_call.1} parent=1 // pred_check
      _
    $region55: #{tpu_custom_call.1} parent=1 // pred_check_branch
      %153 = sbr.rel (0) target = $region57
    $region56: #{tpu_custom_call.1} parent=1 // pred_region
      _
    $region57: #{tpu_custom_call.1} parent=1 // pred_fallthru
      _
    // Predicated region
    $region58: #{tpu_custom_call.1} parent=1 // pred_check
      _
    $region59: #{tpu_custom_call.1} parent=1 // pred_check_branch
      %155 = sbr.rel (0) target = $region61
    $region60: #{tpu_custom_call.1} parent=1 // pred_region
      %s157 = ssub.s32 512, 512
      %158 = vsyncadd [#allocation18], %s157
      %s159 = sshll.u32 [#allocation17], 4
      %s160 = int_to_ptr.vmem [resolvable:$true] %s159
      %165 = dma.hbm_to_vmem [thread:$0]  %s14, 512, %s160, [#allocation18], 128, 128, 8
    $region61: #{tpu_custom_call.1} parent=1 // pred_fallthru
      _
    // Predicated region
    $region62: #{tpu_custom_call.1} parent=1 // pred_check
      _
    $region63: #{tpu_custom_call.1} parent=1 // pred_check_branch
      %167 = sbr.rel (0) target = $region65
    $region64: #{tpu_custom_call.1} parent=1 // pred_region
      _
    $region65: #{tpu_custom_call.1} parent=1 // pred_fallthru
      _
    // Predicated region
    $region66: #{tpu_custom_call.1} parent=1 // pred_check
      _
    $region67: #{tpu_custom_call.1} parent=1 // pred_check_branch
      %169 = sbr.rel (0) target = $region69
    $region68: #{tpu_custom_call.1} parent=1 // pred_region
      _
    $region69: #{tpu_custom_call.1} parent=1 // pred_fallthru
      _
    // Predicated region
    $region70: #{tpu_custom_call.1} parent=1 // pred_check
      _
    $region71: #{tpu_custom_call.1} parent=1 // pred_check_branch
      %171 = sbr.rel (0) target = $region73
    $region72: #{tpu_custom_call.1} parent=1 // pred_region
      _
    $region73: #{tpu_custom_call.1} parent=1 // pred_fallthru
      _
    // Predicated region
    $region74: #{tpu_custom_call.1} parent=1 // pred_check
      _
    $region75: #{tpu_custom_call.1} parent=1 // pred_check_branch
      %173 = sbr.rel (0) target = $region77
    $region76: #{tpu_custom_call.1} parent=1 // pred_region
      _
    $region77: #{tpu_custom_call.1} parent=1 // pred_fallthru
      _
    // Predicated region
    $region78: #{tpu_custom_call.1} parent=1 // pred_check
      _
    $region79: #{tpu_custom_call.1} parent=1 // pred_check_branch
      %175 = sbr.rel (0) target = $region81
    $region80: #{tpu_custom_call.1} parent=1 // pred_region
      _
    $region81: #{tpu_custom_call.1} parent=1 // pred_fallthru
      _
    // Predicated region
    $region82: #{tpu_custom_call.1} parent=1 // pred_check
      _
    $region83: #{tpu_custom_call.1} parent=1 // pred_check_branch
      %177 = sbr.rel (0) target = $region85
    $region84: #{tpu_custom_call.1} parent=1 // pred_region
      _
    $region85: #{tpu_custom_call.1} parent=1 // pred_fallthru
      _
    // Predicated region
    $region86: #{tpu_custom_call.1} parent=1 // pred_check
      _
    $region87: #{tpu_custom_call.1} parent=1 // pred_check_branch
      %179 = sbr.rel (0) target = $region89
    $region88: #{tpu_custom_call.1} parent=1 // pred_region
      _
    $region89: #{tpu_custom_call.1} parent=1 // pred_fallthru
      _
    // Predicated region
    $region90: #{tpu_custom_call.1} parent=1 // pred_check
      _
    $region91: #{tpu_custom_call.1} parent=1 // pred_check_branch
      %181 = sbr.rel (0) target = $region93
    $region92: #{tpu_custom_call.1} parent=1 // pred_region
      _
    $region93: #{tpu_custom_call.1} parent=1 // pred_fallthru
      _
    // Predicated region
    $region94: #{tpu_custom_call.1} parent=1 // pred_check
      _
    $region95: #{tpu_custom_call.1} parent=1 // pred_check_branch
      %183 = sbr.rel (0) target = $region97
    $region96: #{tpu_custom_call.1} parent=1 // pred_region
      _
    $region97: #{tpu_custom_call.1} parent=1 // pred_fallthru
      _
    // Predicated region
    $region98: #{tpu_custom_call.1} parent=1 // pred_check
      _
    $region99: #{tpu_custom_call.1} parent=1 // pred_check_branch
      %185 = sbr.rel (0) target = $region101
    $region100: #{tpu_custom_call.1} parent=1 // pred_region
      %186 = dma.done [#allocation3], 256
    $region101: #{tpu_custom_call.1} parent=1 // pred_fallthru
      _
    // Predicated region
    $region102: #{tpu_custom_call.1} parent=1 // pred_check
      _
    $region103: #{tpu_custom_call.1} parent=1 // pred_check_branch
      %188 = sbr.rel (0) target = $region105
    $region104: #{tpu_custom_call.1} parent=1 // pred_region
      %189 = dma.done [#allocation6], 256
    $region105: #{tpu_custom_call.1} parent=1 // pred_fallthru
      _
    // Predicated region
    $region106: #{tpu_custom_call.1} parent=1 // pred_check
      _
    $region107: #{tpu_custom_call.1} parent=1 // pred_check_branch
      %191 = sbr.rel (0) target = $region109
    $region108: #{tpu_custom_call.1} parent=1 // pred_region
      %192 = dma.done [#allocation6], 512
    $region109: #{tpu_custom_call.1} parent=1 // pred_fallthru
      _
    // Predicated region
    $region110: #{tpu_custom_call.1} parent=1 // pred_check
      _
    $region111: #{tpu_custom_call.1} parent=1 // pred_check_branch
      %194 = sbr.rel (0) target = $region113
    $region112: #{tpu_custom_call.1} parent=1 // pred_region
      %195 = dma.done [#allocation9], 512
    $region113: #{tpu_custom_call.1} parent=1 // pred_fallthru
      _
    // Predicated region
    $region114: #{tpu_custom_call.1} parent=1 // pred_check
      _
    $region115: #{tpu_custom_call.1} parent=1 // pred_check_branch
      %197 = sbr.rel (0) target = $region117
    $region116: #{tpu_custom_call.1} parent=1 // pred_region
      %198 = dma.done [#allocation9], 512
    $region117: #{tpu_custom_call.1} parent=1 // pred_fallthru
      _
    // Predicated region
    $region118: #{tpu_custom_call.1} parent=1 // pred_check
      _
    $region119: #{tpu_custom_call.1} parent=1 // pred_check_branch
      %200 = sbr.rel (0) target = $region121
    $region120: #{tpu_custom_call.1} parent=1 // pred_region
      %201 = dma.done [#allocation12], 512
    $region121: #{tpu_custom_call.1} parent=1 // pred_fallthru
      _
    // Predicated region
    $region122: #{tpu_custom_call.1} parent=1 // pred_check
      _
    $region123: #{tpu_custom_call.1} parent=1 // pred_check_branch
      %203 = sbr.rel (0) target = $region125
    $region124: #{tpu_custom_call.1} parent=1 // pred_region
      %204 = dma.done [#allocation12], 512
    $region125: #{tpu_custom_call.1} parent=1 // pred_fallthru
      _
    // Predicated region
    $region126: #{tpu_custom_call.1} parent=1 // pred_check
      _
    $region127: #{tpu_custom_call.1} parent=1 // pred_check_branch
      %206 = sbr.rel (0) target = $region129
    $region128: #{tpu_custom_call.1} parent=1 // pred_region
      %207 = dma.done [#allocation15], 512
    $region129: #{tpu_custom_call.1} parent=1 // pred_fallthru
      _
    // Predicated region
    $region130: #{tpu_custom_call.1} parent=1 // pred_check
      _
    $region131: #{tpu_custom_call.1} parent=1 // pred_check_branch
      %209 = sbr.rel (0) target = $region133
    $region132: #{tpu_custom_call.1} parent=1 // pred_region
      %210 = dma.done [#allocation15], 512
    $region133: #{tpu_custom_call.1} parent=1 // pred_fallthru
      _
    // Predicated region
    $region134: #{tpu_custom_call.1} parent=1 // pred_check
      _
    $region135: #{tpu_custom_call.1} parent=1 // pred_check_branch
      %212 = sbr.rel (0) target = $region137
    $region136: #{tpu_custom_call.1} parent=1 // pred_region
      %213 = dma.done [#allocation18], 512
    $region137: #{tpu_custom_call.1} parent=1 // pred_fallthru
      _
    %v214 = vld [vmem:[#allocation2] sm:$0xff]
    %v215 = vld [vmem:[#allocation2 + $0x8] sm:$0xff]
    %v216 = vld [vmem:[#allocation5] sm:$0xff]
    %v217 = vld [vmem:[#allocation5 + $0x8] sm:$0xff]
    %v218 = vadd.f32 %v214, %v216
    %v219 = vld [vmem:[%s4] sm:$0xff]
    %v220 = vld [vmem:[%s4 + $0x8] sm:$0xff]
    %v221 = vld [vmem:[%s4 + $0x10] sm:$0xff]
    %v222 = vld [vmem:[%s4 + $0x18] sm:$0xff]
    %vm223 = vcmask 261120
    %v225 = vsel %vm223, %v218, 0
    %227 = vmatprep.subr.mxu0 0.0
    %228 = vmatpush1.msra.mxu0 %v219
    %229 = vmatprep.subr.mxu0 0.0
    %230 = vmatpush1.msra.mxu0 %v220
    %231 = vmatprep.subr.mxu0 0.0
    %232 = vmatpush1.msra.mxu0 %v221
    %233 = vmatprep.subr.mxu0 0.0
    %234 = vmatpush1.msra.mxu0 %v222
    %235 = vmatprep.subr.mxu0 0.0
    %236 = vmatpush1.msra.mxu0 0.0
    %237 = vmatprep.subr.mxu0 0.0
    %238 = vmatpush1.msra.mxu0 0.0
    %239 = vmatprep.subr.mxu0 0.0
    %240 = vmatpush1.msra.mxu0 0.0
    %241 = vmatprep.subr.mxu0 0.0
    %242 = vmatpush1.msra.mxu0 0.0
    %243 = vmatprep.subr.mxu0 0.0
    %244 = vmatpush1.msra.mxu0 0.0
    %245 = vmatprep.subr.mxu0 0.0
    %246 = vmatpush1.msra.mxu0 0.0
    %247 = vmatprep.subr.mxu0 0.0
    %248 = vmatpush1.msra.mxu0 0.0
    %249 = vmatprep.subr.mxu0 0.0
    %250 = vmatpush1.msra.mxu0 0.0
    %251 = vmatprep.subr.mxu0 0.0
    %252 = vmatpush1.msra.mxu0 0.0
    %253 = vmatprep.subr.mxu0 0.0
    %254 = vmatpush1.msra.mxu0 0.0
    %255 = vmatprep.subr.mxu0 0.0
    %256 = vmatpush1.msra.mxu0 0.0
    %257 = vmatprep.subr.mxu0 0.0
    %258 = vmatpush1.msra.mxu0 0.0
    %259 = vmatprep.subr.mxu0 0.0
    %260 = vmatpush1.msra.mxu0 0.0
    %261 = vmatprep.subr.mxu0 0.0
    %262 = vmatpush1.msra.mxu0 0.0
    %263 = vmatprep.subr.mxu0 0.0
    %264 = vmatpush1.msra.mxu0 0.0
    %265 = vmatprep.subr.mxu0 0.0
    %266 = vmatpush1.msra.mxu0 0.0
    %267 = vmatprep.subr.mxu0 0.0
    %268 = vmatpush1.msra.mxu0 0.0
    %269 = vmatprep.subr.mxu0 0.0
    %270 = vmatpush1.msra.mxu0 0.0
    %271 = vmatprep.subr.mxu0 0.0
    %272 = vmatpush1.msra.mxu0 0.0
    %273 = vmatprep.subr.mxu0 0.0
    %274 = vmatpush1.msra.mxu0 0.0
    %275 = vmatprep.subr.mxu0 0.0
    %276 = vmatpush1.msra.mxu0 0.0
    %277 = vmatprep.subr.mxu0 0.0
    %278 = vmatpush1.msra.mxu0 0.0
    %279 = vmatprep.subr.mxu0 0.0
    %280 = vmatpush1.msra.mxu0 0.0
    %281 = vmatprep.subr.mxu0 0.0
    %282 = vmatpush1.msra.mxu0 0.0
    %283 = vmatprep.subr.mxu0 0.0
    %284 = vmatpush1.msra.mxu0 0.0
    %285 = vmatprep.subr.mxu0 0.0
    %286 = vmatpush1.msra.mxu0 0.0
    %287 = vmatprep.subr.mxu0 0.0
    %288 = vmatpush1.msra.mxu0 0.0
    %289 = vmatprep.subr.mxu0 0.0
    %290 = vmatpush1.msra.mxu0 0.0
    %291 = vmatprep.mubr.f32.mxu0 0.0
    %292 = vmatmul.mubr.f32.gmra.mrb[0].mxu0 %v225
    %v293 = vpop.f32.mrb[0].mxu0
    %v294 = vadd.f32 0.0, %v293
    %v295 = vpop.f32.mrb[0].mxu0
    %296 = vdwg.mxu0
    %v297 = vld [vmem:[#allocation7] sm:$0xff]
    %v298 = vld [vmem:[#allocation7 + $0x8] sm:$0xff]
    %v299 = vld [vmem:[#allocation7 + $0x10] sm:$0xff]
    %v300 = vld [vmem:[#allocation7 + $0x18] sm:$0xff]
    %301 = vmatprep.subr.mxu0 0.0
    %302 = vmatpush1.msra.mxu0 %v297
    %303 = vmatprep.subr.mxu0 0.0
    %304 = vmatpush1.msra.mxu0 %v298
    %305 = vmatprep.subr.mxu0 0.0
    %306 = vmatpush1.msra.mxu0 %v299
    %307 = vmatprep.subr.mxu0 0.0
    %308 = vmatpush1.msra.mxu0 %v300
    %309 = vmatprep.subr.mxu0 0.0
    %310 = vmatpush1.msra.mxu0 0.0
    %311 = vmatprep.subr.mxu0 0.0
    %312 = vmatpush1.msra.mxu0 0.0
    %313 = vmatprep.subr.mxu0 0.0
    %314 = vmatpush1.msra.mxu0 0.0
    %315 = vmatprep.subr.mxu0 0.0
    %316 = vmatpush1.msra.mxu0 0.0
    %317 = vmatprep.subr.mxu0 0.0
    %318 = vmatpush1.msra.mxu0 0.0
    %319 = vmatprep.subr.mxu0 0.0
    %320 = vmatpush1.msra.mxu0 0.0
    %321 = vmatprep.subr.mxu0 0.0
    %322 = vmatpush1.msra.mxu0 0.0
    %323 = vmatprep.subr.mxu0 0.0
    %324 = vmatpush1.msra.mxu0 0.0
    %325 = vmatprep.subr.mxu0 0.0
    %326 = vmatpush1.msra.mxu0 0.0
    %327 = vmatprep.subr.mxu0 0.0
    %328 = vmatpush1.msra.mxu0 0.0
    %329 = vmatprep.subr.mxu0 0.0
    %330 = vmatpush1.msra.mxu0 0.0
    %331 = vmatprep.subr.mxu0 0.0
    %332 = vmatpush1.msra.mxu0 0.0
    %333 = vmatprep.subr.mxu0 0.0
    %334 = vmatpush1.msra.mxu0 0.0
    %335 = vmatprep.subr.mxu0 0.0
    %336 = vmatpush1.msra.mxu0 0.0
    %337 = vmatprep.subr.mxu0 0.0
    %338 = vmatpush1.msra.mxu0 0.0
    %339 = vmatprep.subr.mxu0 0.0
    %340 = vmatpush1.msra.mxu0 0.0
    %341 = vmatprep.subr.mxu0 0.0
    %342 = vmatpush1.msra.mxu0 0.0
    %343 = vmatprep.subr.mxu0 0.0
    %344 = vmatpush1.msra.mxu0 0.0
    %345 = vmatprep.subr.mxu0 0.0
    %346 = vmatpush1.msra.mxu0 0.0
    %347 = vmatprep.subr.mxu0 0.0
    %348 = vmatpush1.msra.mxu0 0.0
    %349 = vmatprep.subr.mxu0 0.0
    %350 = vmatpush1.msra.mxu0 0.0
    %351 = vmatprep.subr.mxu0 0.0
    %352 = vmatpush1.msra.mxu0 0.0
    %353 = vmatprep.subr.mxu0 0.0
    %354 = vmatpush1.msra.mxu0 0.0
    %355 = vmatprep.subr.mxu0 0.0
    %356 = vmatpush1.msra.mxu0 0.0
    %357 = vmatprep.subr.mxu0 0.0
    %358 = vmatpush1.msra.mxu0 0.0
    %359 = vmatprep.subr.mxu0 0.0
    %360 = vmatpush1.msra.mxu0 0.0
    %361 = vmatprep.subr.mxu0 0.0
    %362 = vmatpush1.msra.mxu0 0.0
    %363 = vmatprep.subr.mxu0 0.0
    %364 = vmatpush1.msra.mxu0 0.0
    %365 = vmatprep.mubr.f32.mxu0 0.0
    %366 = vmatmul.mubr.f32.gmra.mrb[0].mxu0 %v225
    %v367 = vpop.f32.mrb[0].mxu0
    %v368 = vadd.f32 0.0, %v367
    %v369 = vpop.f32.mrb[0].mxu0
    %370 = vdwg.mxu0
    %v371 = vld [vmem:[#allocation8] sm:$0xff]
    %v372 = vld [vmem:[#allocation8 + $0x8] sm:$0xff]
    %v373 = vld [vmem:[#allocation8 + $0x10] sm:$0xff]
    %v374 = vld [vmem:[#allocation8 + $0x18] sm:$0xff]
    %v376 = vsel %vm223, %v214, 0
    %378 = vmatprep.subr.mxu0 0.0
    %379 = vmatpush1.msra.mxu0 %v371
    %380 = vmatprep.subr.mxu0 0.0
    %381 = vmatpush1.msra.mxu0 %v372
    %382 = vmatprep.subr.mxu0 0.0
    %383 = vmatpush1.msra.mxu0 %v373
    %384 = vmatprep.subr.mxu0 0.0
    %385 = vmatpush1.msra.mxu0 %v374
    %386 = vmatprep.subr.mxu0 0.0
    %387 = vmatpush1.msra.mxu0 0.0
    %388 = vmatprep.subr.mxu0 0.0
    %389 = vmatpush1.msra.mxu0 0.0
    %390 = vmatprep.subr.mxu0 0.0
    %391 = vmatpush1.msra.mxu0 0.0
    %392 = vmatprep.subr.mxu0 0.0
    %393 = vmatpush1.msra.mxu0 0.0
    %394 = vmatprep.subr.mxu0 0.0
    %395 = vmatpush1.msra.mxu0 0.0
    %396 = vmatprep.subr.mxu0 0.0
    %397 = vmatpush1.msra.mxu0 0.0
    %398 = vmatprep.subr.mxu0 0.0
    %399 = vmatpush1.msra.mxu0 0.0
    %400 = vmatprep.subr.mxu0 0.0
    %401 = vmatpush1.msra.mxu0 0.0
    %402 = vmatprep.subr.mxu0 0.0
    %403 = vmatpush1.msra.mxu0 0.0
    %404 = vmatprep.subr.mxu0 0.0
    %405 = vmatpush1.msra.mxu0 0.0
    %406 = vmatprep.subr.mxu0 0.0
    %407 = vmatpush1.msra.mxu0 0.0
    %408 = vmatprep.subr.mxu0 0.0
    %409 = vmatpush1.msra.mxu0 0.0
    %410 = vmatprep.subr.mxu0 0.0
    %411 = vmatpush1.msra.mxu0 0.0
    %412 = vmatprep.subr.mxu0 0.0
    %413 = vmatpush1.msra.mxu0 0.0
    %414 = vmatprep.subr.mxu0 0.0
    %415 = vmatpush1.msra.mxu0 0.0
    %416 = vmatprep.subr.mxu0 0.0
    %417 = vmatpush1.msra.mxu0 0.0
    %418 = vmatprep.subr.mxu0 0.0
    %419 = vmatpush1.msra.mxu0 0.0
    %420 = vmatprep.subr.mxu0 0.0
    %421 = vmatpush1.msra.mxu0 0.0
    %422 = vmatprep.subr.mxu0 0.0
    %423 = vmatpush1.msra.mxu0 0.0
    %424 = vmatprep.subr.mxu0 0.0
    %425 = vmatpush1.msra.mxu0 0.0
    %426 = vmatprep.subr.mxu0 0.0
    %427 = vmatpush1.msra.mxu0 0.0
    %428 = vmatprep.subr.mxu0 0.0
    %429 = vmatpush1.msra.mxu0 0.0
    %430 = vmatprep.subr.mxu0 0.0
    %431 = vmatpush1.msra.mxu0 0.0
    %432 = vmatprep.subr.mxu0 0.0
    %433 = vmatpush1.msra.mxu0 0.0
    %434 = vmatprep.subr.mxu0 0.0
    %435 = vmatpush1.msra.mxu0 0.0
    %436 = vmatprep.subr.mxu0 0.0
    %437 = vmatpush1.msra.mxu0 0.0
    %438 = vmatprep.subr.mxu0 0.0
    %439 = vmatpush1.msra.mxu0 0.0
    %440 = vmatprep.subr.mxu0 0.0
    %441 = vmatpush1.msra.mxu0 0.0
    %442 = vmatprep.mubr.f32.mxu0 0.0
    %443 = vmatmul.mubr.f32.gmra.mrb[0].mxu0 %v376
    %v444 = vpop.f32.mrb[0].mxu0
    %v445 = vadd.f32 0.0, %v444
    %v446 = vpop.f32.mrb[0].mxu0
    %447 = vdwg.mxu0
    %v448 = vld [vmem:[#allocation10] sm:$0xff]
    %v449 = vld [vmem:[#allocation10 + $0x8] sm:$0xff]
    %v450 = vld [vmem:[#allocation10 + $0x10] sm:$0xff]
    %v451 = vld [vmem:[#allocation10 + $0x18] sm:$0xff]
    %vm452 = vcmask 64512
    %v454 = vsel %vm452, %v294, 0
    %v457 = vsel %vm452, %v368, 0
    %459 = vmatprep.subr.mxu0 0.0
    %460 = vmatpush1.xpose.msra.mxu0 %v457
    %461 = vmatprep.subr.mxu0 0.0
    %462 = vmatpush1.xpose.msra.mxu0 0.0
    %463 = vmatprep.subr.mxu0 0.0
    %464 = vmatpush1.xpose.msra.mxu0 0.0
    %465 = vmatprep.subr.mxu0 0.0
    %466 = vmatpush1.xpose.msra.mxu0 0.0
    %467 = vmatprep.subr.mxu0 0.0
    %468 = vmatpush1.xpose.msra.mxu0 0.0
    %469 = vmatprep.subr.mxu0 0.0
    %470 = vmatpush1.xpose.msra.mxu0 0.0
    %471 = vmatprep.subr.mxu0 0.0
    %472 = vmatpush1.xpose.msra.mxu0 0.0
    %473 = vmatprep.subr.mxu0 0.0
    %474 = vmatpush1.xpose.msra.mxu0 0.0
    %475 = vmatprep.subr.mxu0 0.0
    %476 = vmatpush1.xpose.msra.mxu0 0.0
    %477 = vmatprep.subr.mxu0 0.0
    %478 = vmatpush1.xpose.msra.mxu0 0.0
    %479 = vmatprep.subr.mxu0 0.0
    %480 = vmatpush1.xpose.msra.mxu0 0.0
    %481 = vmatprep.subr.mxu0 0.0
    %482 = vmatpush1.xpose.msra.mxu0 0.0
    %483 = vmatprep.subr.mxu0 0.0
    %484 = vmatpush1.xpose.msra.mxu0 0.0
    %485 = vmatprep.subr.mxu0 0.0
    %486 = vmatpush1.xpose.msra.mxu0 0.0
    %487 = vmatprep.subr.mxu0 0.0
    %488 = vmatpush1.xpose.msra.mxu0 0.0
    %489 = vmatprep.subr.mxu0 0.0
    %490 = vmatpush1.xpose.msra.mxu0 0.0
    %491 = vmatprep.subr.mxu0 0.0
    %492 = vmatpush1.xpose.msra.mxu0 0.0
    %493 = vmatprep.subr.mxu0 0.0
    %494 = vmatpush1.xpose.msra.mxu0 0.0
    %495 = vmatprep.subr.mxu0 0.0
    %496 = vmatpush1.xpose.msra.mxu0 0.0
    %497 = vmatprep.subr.mxu0 0.0
    %498 = vmatpush1.xpose.msra.mxu0 0.0
    %499 = vmatprep.subr.mxu0 0.0
    %500 = vmatpush1.xpose.msra.mxu0 0.0
    %501 = vmatprep.subr.mxu0 0.0
    %502 = vmatpush1.xpose.msra.mxu0 0.0
    %503 = vmatprep.subr.mxu0 0.0
    %504 = vmatpush1.xpose.msra.mxu0 0.0
    %505 = vmatprep.subr.mxu0 0.0
    %506 = vmatpush1.xpose.msra.mxu0 0.0
    %507 = vmatprep.subr.mxu0 0.0
    %508 = vmatpush1.xpose.msra.mxu0 0.0
    %509 = vmatprep.subr.mxu0 0.0
    %510 = vmatpush1.xpose.msra.mxu0 0.0
    %511 = vmatprep.subr.mxu0 0.0
    %512 = vmatpush1.xpose.msra.mxu0 0.0
    %513 = vmatprep.subr.mxu0 0.0
    %514 = vmatpush1.xpose.msra.mxu0 0.0
    %515 = vmatprep.subr.mxu0 0.0
    %516 = vmatpush1.xpose.msra.mxu0 0.0
    %517 = vmatprep.subr.mxu0 0.0
    %518 = vmatpush1.xpose.msra.mxu0 0.0
    %519 = vmatprep.subr.mxu0 0.0
    %520 = vmatpush1.xpose.msra.mxu0 0.0
    %521 = vmatprep.subr.mxu0 0.0
    %522 = vmatpush1.xpose.msra.mxu0 0.0
    %523 = vmatprep.mubr.f32.mxu0 0.0
    %524 = vmatmul.mubr.f32.gmra.mrb[0].mxu0 %v454
    %v525 = vpop.f32.mrb[0].mxu0
    %v526 = vadd.f32 0.0, %v525
    %v527 = vpop.f32.mrb[0].mxu0
    %528 = vdwg.mxu0
    %v529 = vsel %vm452, %v526, -inf
    %530 = vmax.xlane.f32.xlu0 %v529
    %v531 = vpop.xlane.xlu0 %530
    %v532 = vsub.f32 %v526, %v531
    %v533 = vmul.f32 %v532, 1.442695
    %v534 = vpow.pop %v533
    %v535 = vsel %vm452, %v534, 0.0
    %536 = vadd.xlane.f32.xlu0 %v535
    %v537 = vpop.xlane.xlu0 %536
    %v538 = vrcp.pop %v537
    %v539 = vmul.f32 %v534, %v538
    %v541 = vsel %vm452, %v539, 0
    %543 = vmatprep.subr.mxu0 0.0
    %544 = vmatpush1.msra.mxu0 %v445
    %545 = vmatprep.subr.mxu0 0.0
    %546 = vmatpush1.msra.mxu0 0.0
    %547 = vmatprep.subr.mxu0 0.0
    %548 = vmatpush1.msra.mxu0 0.0
    %549 = vmatprep.subr.mxu0 0.0
    %550 = vmatpush1.msra.mxu0 0.0
    %551 = vmatprep.subr.mxu0 0.0
    %552 = vmatpush1.msra.mxu0 0.0
    %553 = vmatprep.subr.mxu0 0.0
    %554 = vmatpush1.msra.mxu0 0.0
    %555 = vmatprep.subr.mxu0 0.0
    %556 = vmatpush1.msra.mxu0 0.0
    %557 = vmatprep.subr.mxu0 0.0
    %558 = vmatpush1.msra.mxu0 0.0
    %559 = vmatprep.subr.mxu0 0.0
    %560 = vmatpush1.msra.mxu0 0.0
    %561 = vmatprep.subr.mxu0 0.0
    %562 = vmatpush1.msra.mxu0 0.0
    %563 = vmatprep.subr.mxu0 0.0
    %564 = vmatpush1.msra.mxu0 0.0
    %565 = vmatprep.subr.mxu0 0.0
    %566 = vmatpush1.msra.mxu0 0.0
    %567 = vmatprep.subr.mxu0 0.0
    %568 = vmatpush1.msra.mxu0 0.0
    %569 = vmatprep.subr.mxu0 0.0
    %570 = vmatpush1.msra.mxu0 0.0
    %571 = vmatprep.subr.mxu0 0.0
    %572 = vmatpush1.msra.mxu0 0.0
    %573 = vmatprep.subr.mxu0 0.0
    %574 = vmatpush1.msra.mxu0 0.0
    %575 = vmatprep.subr.mxu0 0.0
    %576 = vmatpush1.msra.mxu0 0.0
    %577 = vmatprep.subr.mxu0 0.0
    %578 = vmatpush1.msra.mxu0 0.0
    %579 = vmatprep.subr.mxu0 0.0
    %580 = vmatpush1.msra.mxu0 0.0
    %581 = vmatprep.subr.mxu0 0.0
    %582 = vmatpush1.msra.mxu0 0.0
    %583 = vmatprep.subr.mxu0 0.0
    %584 = vmatpush1.msra.mxu0 0.0
    %585 = vmatprep.subr.mxu0 0.0
    %586 = vmatpush1.msra.mxu0 0.0
    %587 = vmatprep.subr.mxu0 0.0
    %588 = vmatpush1.msra.mxu0 0.0
    %589 = vmatprep.subr.mxu0 0.0
    %590 = vmatpush1.msra.mxu0 0.0
    %591 = vmatprep.subr.mxu0 0.0
    %592 = vmatpush1.msra.mxu0 0.0
    %593 = vmatprep.subr.mxu0 0.0
    %594 = vmatpush1.msra.mxu0 0.0
    %595 = vmatprep.subr.mxu0 0.0
    %596 = vmatpush1.msra.mxu0 0.0
    %597 = vmatprep.subr.mxu0 0.0
    %598 = vmatpush1.msra.mxu0 0.0
    %599 = vmatprep.subr.mxu0 0.0
    %600 = vmatpush1.msra.mxu0 0.0
    %601 = vmatprep.subr.mxu0 0.0
    %602 = vmatpush1.msra.mxu0 0.0
    %603 = vmatprep.subr.mxu0 0.0
    %604 = vmatpush1.msra.mxu0 0.0
    %605 = vmatprep.subr.mxu0 0.0
    %606 = vmatpush1.msra.mxu0 0.0
    %607 = vmatprep.mubr.f32.mxu0 0.0
    %608 = vmatmul.mubr.f32.gmra.mrb[0].mxu0 %v541
    %v609 = vpop.f32.mrb[0].mxu0
    %v610 = vadd.f32 0.0, %v609
    %v611 = vpop.f32.mrb[0].mxu0
    %612 = vdwg.mxu0
    %613 = vrot.lane.b32.xlu0 %v294, 120
    %v614 = vpop.permute.xlu0 %613
    %615 = vrot.lane.b32.xlu0 %v368, 120
    %v616 = vpop.permute.xlu0 %615
    %v617 = vsel %vm452, %v614, 0
    %v619 = vsel %vm452, %v616, 0
    %621 = vmatprep.subr.mxu0 0.0
    %622 = vmatpush1.xpose.msra.mxu0 %v619
    %623 = vmatprep.subr.mxu0 0.0
    %624 = vmatpush1.xpose.msra.mxu0 0.0
    %625 = vmatprep.subr.mxu0 0.0
    %626 = vmatpush1.xpose.msra.mxu0 0.0
    %627 = vmatprep.subr.mxu0 0.0
    %628 = vmatpush1.xpose.msra.mxu0 0.0
    %629 = vmatprep.subr.mxu0 0.0
    %630 = vmatpush1.xpose.msra.mxu0 0.0
    %631 = vmatprep.subr.mxu0 0.0
    %632 = vmatpush1.xpose.msra.mxu0 0.0
    %633 = vmatprep.subr.mxu0 0.0
    %634 = vmatpush1.xpose.msra.mxu0 0.0
    %635 = vmatprep.subr.mxu0 0.0
    %636 = vmatpush1.xpose.msra.mxu0 0.0
    %637 = vmatprep.subr.mxu0 0.0
    %638 = vmatpush1.xpose.msra.mxu0 0.0
    %639 = vmatprep.subr.mxu0 0.0
    %640 = vmatpush1.xpose.msra.mxu0 0.0
    %641 = vmatprep.subr.mxu0 0.0
    %642 = vmatpush1.xpose.msra.mxu0 0.0
    %643 = vmatprep.subr.mxu0 0.0
    %644 = vmatpush1.xpose.msra.mxu0 0.0
    %645 = vmatprep.subr.mxu0 0.0
    %646 = vmatpush1.xpose.msra.mxu0 0.0
    %647 = vmatprep.subr.mxu0 0.0
    %648 = vmatpush1.xpose.msra.mxu0 0.0
    %649 = vmatprep.subr.mxu0 0.0
    %650 = vmatpush1.xpose.msra.mxu0 0.0
    %651 = vmatprep.subr.mxu0 0.0
    %652 = vmatpush1.xpose.msra.mxu0 0.0
    %653 = vmatprep.subr.mxu0 0.0
    %654 = vmatpush1.xpose.msra.mxu0 0.0
    %655 = vmatprep.subr.mxu0 0.0
    %656 = vmatpush1.xpose.msra.mxu0 0.0
    %657 = vmatprep.subr.mxu0 0.0
    %658 = vmatpush1.xpose.msra.mxu0 0.0
    %659 = vmatprep.subr.mxu0 0.0
    %660 = vmatpush1.xpose.msra.mxu0 0.0
    %661 = vmatprep.subr.mxu0 0.0
    %662 = vmatpush1.xpose.msra.mxu0 0.0
    %663 = vmatprep.subr.mxu0 0.0
    %664 = vmatpush1.xpose.msra.mxu0 0.0
    %665 = vmatprep.subr.mxu0 0.0
    %666 = vmatpush1.xpose.msra.mxu0 0.0
    %667 = vmatprep.subr.mxu0 0.0
    %668 = vmatpush1.xpose.msra.mxu0 0.0
    %669 = vmatprep.subr.mxu0 0.0
    %670 = vmatpush1.xpose.msra.mxu0 0.0
    %671 = vmatprep.subr.mxu0 0.0
    %672 = vmatpush1.xpose.msra.mxu0 0.0
    %673 = vmatprep.subr.mxu0 0.0
    %674 = vmatpush1.xpose.msra.mxu0 0.0
    %675 = vmatprep.subr.mxu0 0.0
    %676 = vmatpush1.xpose.msra.mxu0 0.0
    %677 = vmatprep.subr.mxu0 0.0
    %678 = vmatpush1.xpose.msra.mxu0 0.0
    %679 = vmatprep.subr.mxu0 0.0
    %680 = vmatpush1.xpose.msra.mxu0 0.0
    %681 = vmatprep.subr.mxu0 0.0
    %682 = vmatpush1.xpose.msra.mxu0 0.0
    %683 = vmatprep.subr.mxu0 0.0
    %684 = vmatpush1.xpose.msra.mxu0 0.0
    %685 = vmatprep.mubr.f32.mxu0 0.0
    %686 = vmatmul.mubr.f32.gmra.mrb[0].mxu0 %v617
    %v687 = vpop.f32.mrb[0].mxu0
    %v688 = vadd.f32 0.0, %v687
    %v689 = vpop.f32.mrb[0].mxu0
    %690 = vdwg.mxu0
    %v691 = vsel %vm452, %v688, -inf
    %692 = vmax.xlane.f32.xlu0 %v691
    %v693 = vpop.xlane.xlu0 %692
    %v694 = vsub.f32 %v688, %v693
    %v695 = vmul.f32 %v694, 1.442695
    %v696 = vpow.pop %v695
    %v697 = vsel %vm452, %v696, 0.0
    %698 = vadd.xlane.f32.xlu0 %v697
    %v699 = vpop.xlane.xlu0 %698
    %v700 = vrcp.pop %v699
    %v701 = vmul.f32 %v696, %v700
    %703 = vrot.lane.b32.xlu0 %v445, 120
    %v704 = vpop.permute.xlu0 %703
    %v707 = vsel %vm452, %v701, 0
    %709 = vmatprep.subr.mxu0 0.0
    %710 = vmatpush1.msra.mxu0 %v704
    %711 = vmatprep.subr.mxu0 0.0
    %712 = vmatpush1.msra.mxu0 0.0
    %713 = vmatprep.subr.mxu0 0.0
    %714 = vmatpush1.msra.mxu0 0.0
    %715 = vmatprep.subr.mxu0 0.0
    %716 = vmatpush1.msra.mxu0 0.0
    %717 = vmatprep.subr.mxu0 0.0
    %718 = vmatpush1.msra.mxu0 0.0
    %719 = vmatprep.subr.mxu0 0.0
    %720 = vmatpush1.msra.mxu0 0.0
    %721 = vmatprep.subr.mxu0 0.0
    %722 = vmatpush1.msra.mxu0 0.0
    %723 = vmatprep.subr.mxu0 0.0
    %724 = vmatpush1.msra.mxu0 0.0
    %725 = vmatprep.subr.mxu0 0.0
    %726 = vmatpush1.msra.mxu0 0.0
    %727 = vmatprep.subr.mxu0 0.0
    %728 = vmatpush1.msra.mxu0 0.0
    %729 = vmatprep.subr.mxu0 0.0
    %730 = vmatpush1.msra.mxu0 0.0
    %731 = vmatprep.subr.mxu0 0.0
    %732 = vmatpush1.msra.mxu0 0.0
    %733 = vmatprep.subr.mxu0 0.0
    %734 = vmatpush1.msra.mxu0 0.0
    %735 = vmatprep.subr.mxu0 0.0
    %736 = vmatpush1.msra.mxu0 0.0
    %737 = vmatprep.subr.mxu0 0.0
    %738 = vmatpush1.msra.mxu0 0.0
    %739 = vmatprep.subr.mxu0 0.0
    %740 = vmatpush1.msra.mxu0 0.0
    %741 = vmatprep.subr.mxu0 0.0
    %742 = vmatpush1.msra.mxu0 0.0
    %743 = vmatprep.subr.mxu0 0.0
    %744 = vmatpush1.msra.mxu0 0.0
    %745 = vmatprep.subr.mxu0 0.0
    %746 = vmatpush1.msra.mxu0 0.0
    %747 = vmatprep.subr.mxu0 0.0
    %748 = vmatpush1.msra.mxu0 0.0
    %749 = vmatprep.subr.mxu0 0.0
    %750 = vmatpush1.msra.mxu0 0.0
    %751 = vmatprep.subr.mxu0 0.0
    %752 = vmatpush1.msra.mxu0 0.0
    %753 = vmatprep.subr.mxu0 0.0
    %754 = vmatpush1.msra.mxu0 0.0
    %755 = vmatprep.subr.mxu0 0.0
    %756 = vmatpush1.msra.mxu0 0.0
    %757 = vmatprep.subr.mxu0 0.0
    %758 = vmatpush1.msra.mxu0 0.0
    %759 = vmatprep.subr.mxu0 0.0
    %760 = vmatpush1.msra.mxu0 0.0
    %761 = vmatprep.subr.mxu0 0.0
    %762 = vmatpush1.msra.mxu0 0.0
    %763 = vmatprep.subr.mxu0 0.0
    %764 = vmatpush1.msra.mxu0 0.0
    %765 = vmatprep.subr.mxu0 0.0
    %766 = vmatpush1.msra.mxu0 0.0
    %767 = vmatprep.subr.mxu0 0.0
    %768 = vmatpush1.msra.mxu0 0.0
    %769 = vmatprep.subr.mxu0 0.0
    %770 = vmatpush1.msra.mxu0 0.0
    %771 = vmatprep.subr.mxu0 0.0
    %772 = vmatpush1.msra.mxu0 0.0
    %773 = vmatprep.mubr.f32.mxu0 0.0
    %774 = vmatmul.mubr.f32.gmra.mrb[0].mxu0 %v707
    %v775 = vpop.f32.mrb[0].mxu0
    %v776 = vadd.f32 0.0, %v775
    %v777 = vpop.f32.mrb[0].mxu0
    %778 = vdwg.mxu0
    %v780 = vsel %vm452, %v776, 0
    %782 = vmatprep.subr.mxu0 0.0
    %783 = vmatpush1.msra.mxu0 %v449
    %784 = vmatprep.subr.mxu0 0.0
    %785 = vmatpush1.msra.mxu0 0.0
    %786 = vmatprep.subr.mxu0 0.0
    %787 = vmatpush1.msra.mxu0 0.0
    %788 = vmatprep.subr.mxu0 0.0
    %789 = vmatpush1.msra.mxu0 0.0
    %790 = vmatprep.subr.mxu0 0.0
    %791 = vmatpush1.msra.mxu0 0.0
    %792 = vmatprep.subr.mxu0 0.0
    %793 = vmatpush1.msra.mxu0 0.0
    %794 = vmatprep.subr.mxu0 0.0
    %795 = vmatpush1.msra.mxu0 0.0
    %796 = vmatprep.subr.mxu0 0.0
    %797 = vmatpush1.msra.mxu0 0.0
    %798 = vmatprep.subr.mxu0 0.0
    %799 = vmatpush1.msra.mxu0 0.0
    %800 = vmatprep.subr.mxu0 0.0
    %801 = vmatpush1.msra.mxu0 0.0
    %802 = vmatprep.subr.mxu0 0.0
    %803 = vmatpush1.msra.mxu0 0.0
    %804 = vmatprep.subr.mxu0 0.0
    %805 = vmatpush1.msra.mxu0 0.0
    %806 = vmatprep.subr.mxu0 0.0
    %807 = vmatpush1.msra.mxu0 0.0
    %808 = vmatprep.subr.mxu0 0.0
    %809 = vmatpush1.msra.mxu0 0.0
    %810 = vmatprep.subr.mxu0 0.0
    %811 = vmatpush1.msra.mxu0 0.0
    %812 = vmatprep.subr.mxu0 0.0
    %813 = vmatpush1.msra.mxu0 0.0
    %814 = vmatprep.subr.mxu0 0.0
    %815 = vmatpush1.msra.mxu0 0.0
    %816 = vmatprep.subr.mxu0 0.0
    %817 = vmatpush1.msra.mxu0 0.0
    %818 = vmatprep.subr.mxu0 0.0
    %819 = vmatpush1.msra.mxu0 0.0
    %820 = vmatprep.subr.mxu0 0.0
    %821 = vmatpush1.msra.mxu0 0.0
    %822 = vmatprep.subr.mxu0 0.0
    %823 = vmatpush1.msra.mxu0 0.0
    %824 = vmatprep.subr.mxu0 0.0
    %825 = vmatpush1.msra.mxu0 0.0
    %826 = vmatprep.subr.mxu0 0.0
    %827 = vmatpush1.msra.mxu0 0.0
    %828 = vmatprep.subr.mxu0 0.0
    %829 = vmatpush1.msra.mxu0 0.0
    %830 = vmatprep.subr.mxu0 0.0
    %831 = vmatpush1.msra.mxu0 0.0
    %832 = vmatprep.subr.mxu0 0.0
    %833 = vmatpush1.msra.mxu0 0.0
    %834 = vmatprep.subr.mxu0 0.0
    %835 = vmatpush1.msra.mxu0 0.0
    %836 = vmatprep.subr.mxu0 0.0
    %837 = vmatpush1.msra.mxu0 0.0
    %838 = vmatprep.subr.mxu0 0.0
    %839 = vmatpush1.msra.mxu0 0.0
    %840 = vmatprep.subr.mxu0 0.0
    %841 = vmatpush1.msra.mxu0 0.0
    %842 = vmatprep.subr.mxu0 0.0
    %843 = vmatpush1.msra.mxu0 0.0
    %844 = vmatprep.subr.mxu0 0.0
    %845 = vmatpush1.msra.mxu0 0.0
    %846 = vmatprep.mubr.f32.mxu0 0.0
    %847 = vmatmul.mubr.f32.gmra.mrb[0].mxu0 %v780
    %v848 = vpop.f32.mrb[0].mxu0
    %v849 = vadd.f32 0.0, %v848
    %v850 = vpop.f32.mrb[0].mxu0
    %851 = vdwg.mxu0
    %v853 = vsel %vm452, %v610, 0
    %855 = vmatprep.subr.mxu0 0.0
    %856 = vmatpush1.msra.mxu0 %v448
    %857 = vmatprep.subr.mxu0 0.0
    %858 = vmatpush1.msra.mxu0 0.0
    %859 = vmatprep.subr.mxu0 0.0
    %860 = vmatpush1.msra.mxu0 0.0
    %861 = vmatprep.subr.mxu0 0.0
    %862 = vmatpush1.msra.mxu0 0.0
    %863 = vmatprep.subr.mxu0 0.0
    %864 = vmatpush1.msra.mxu0 0.0
    %865 = vmatprep.subr.mxu0 0.0
    %866 = vmatpush1.msra.mxu0 0.0
    %867 = vmatprep.subr.mxu0 0.0
    %868 = vmatpush1.msra.mxu0 0.0
    %869 = vmatprep.subr.mxu0 0.0
    %870 = vmatpush1.msra.mxu0 0.0
    %871 = vmatprep.subr.mxu0 0.0
    %872 = vmatpush1.msra.mxu0 0.0
    %873 = vmatprep.subr.mxu0 0.0
    %874 = vmatpush1.msra.mxu0 0.0
    %875 = vmatprep.subr.mxu0 0.0
    %876 = vmatpush1.msra.mxu0 0.0
    %877 = vmatprep.subr.mxu0 0.0
    %878 = vmatpush1.msra.mxu0 0.0
    %879 = vmatprep.subr.mxu0 0.0
    %880 = vmatpush1.msra.mxu0 0.0
    %881 = vmatprep.subr.mxu0 0.0
    %882 = vmatpush1.msra.mxu0 0.0
    %883 = vmatprep.subr.mxu0 0.0
    %884 = vmatpush1.msra.mxu0 0.0
    %885 = vmatprep.subr.mxu0 0.0
    %886 = vmatpush1.msra.mxu0 0.0
    %887 = vmatprep.subr.mxu0 0.0
    %888 = vmatpush1.msra.mxu0 0.0
    %889 = vmatprep.subr.mxu0 0.0
    %890 = vmatpush1.msra.mxu0 0.0
    %891 = vmatprep.subr.mxu0 0.0
    %892 = vmatpush1.msra.mxu0 0.0
    %893 = vmatprep.subr.mxu0 0.0
    %894 = vmatpush1.msra.mxu0 0.0
    %895 = vmatprep.subr.mxu0 0.0
    %896 = vmatpush1.msra.mxu0 0.0
    %897 = vmatprep.subr.mxu0 0.0
    %898 = vmatpush1.msra.mxu0 0.0
    %899 = vmatprep.subr.mxu0 0.0
    %900 = vmatpush1.msra.mxu0 0.0
    %901 = vmatprep.subr.mxu0 0.0
    %902 = vmatpush1.msra.mxu0 0.0
    %903 = vmatprep.subr.mxu0 0.0
    %904 = vmatpush1.msra.mxu0 0.0
    %905 = vmatprep.subr.mxu0 0.0
    %906 = vmatpush1.msra.mxu0 0.0
    %907 = vmatprep.subr.mxu0 0.0
    %908 = vmatpush1.msra.mxu0 0.0
    %909 = vmatprep.subr.mxu0 0.0
    %910 = vmatpush1.msra.mxu0 0.0
    %911 = vmatprep.subr.mxu0 0.0
    %912 = vmatpush1.msra.mxu0 0.0
    %913 = vmatprep.subr.mxu0 0.0
    %914 = vmatpush1.msra.mxu0 0.0
    %915 = vmatprep.subr.mxu0 0.0
    %916 = vmatpush1.msra.mxu0 0.0
    %917 = vmatprep.subr.mxu0 0.0
    %918 = vmatpush1.msra.mxu0 0.0
    %919 = vmatprep.mubr.f32.mxu0 0.0
    %920 = vmatmul.mubr.f32.gmra.mrb[0].mxu0 %v853
    %v921 = vpop.f32.mrb[0].mxu0
    %v922 = vadd.f32 %v849, %v921
    %v923 = vpop.f32.mrb[0].mxu0
    %924 = vdwg.mxu0
    %925 = vrot.lane.b32.xlu0 %v294, 112
    %v926 = vpop.permute.xlu0 %925
    %927 = vrot.lane.b32.xlu0 %v368, 112
    %v928 = vpop.permute.xlu0 %927
    %v929 = vsel %vm452, %v926, 0
    %v931 = vsel %vm452, %v928, 0
    %933 = vmatprep.subr.mxu0 0.0
    %934 = vmatpush1.xpose.msra.mxu0 %v931
    %935 = vmatprep.subr.mxu0 0.0
    %936 = vmatpush1.xpose.msra.mxu0 0.0
    %937 = vmatprep.subr.mxu0 0.0
    %938 = vmatpush1.xpose.msra.mxu0 0.0
    %939 = vmatprep.subr.mxu0 0.0
    %940 = vmatpush1.xpose.msra.mxu0 0.0
    %941 = vmatprep.subr.mxu0 0.0
    %942 = vmatpush1.xpose.msra.mxu0 0.0
    %943 = vmatprep.subr.mxu0 0.0
    %944 = vmatpush1.xpose.msra.mxu0 0.0
    %945 = vmatprep.subr.mxu0 0.0
    %946 = vmatpush1.xpose.msra.mxu0 0.0
    %947 = vmatprep.subr.mxu0 0.0
    %948 = vmatpush1.xpose.msra.mxu0 0.0
    %949 = vmatprep.subr.mxu0 0.0
    %950 = vmatpush1.xpose.msra.mxu0 0.0
    %951 = vmatprep.subr.mxu0 0.0
    %952 = vmatpush1.xpose.msra.mxu0 0.0
    %953 = vmatprep.subr.mxu0 0.0
    %954 = vmatpush1.xpose.msra.mxu0 0.0
    %955 = vmatprep.subr.mxu0 0.0
    %956 = vmatpush1.xpose.msra.mxu0 0.0
    %957 = vmatprep.subr.mxu0 0.0
    %958 = vmatpush1.xpose.msra.mxu0 0.0
    %959 = vmatprep.subr.mxu0 0.0
    %960 = vmatpush1.xpose.msra.mxu0 0.0
    %961 = vmatprep.subr.mxu0 0.0
    %962 = vmatpush1.xpose.msra.mxu0 0.0
    %963 = vmatprep.subr.mxu0 0.0
    %964 = vmatpush1.xpose.msra.mxu0 0.0
    %965 = vmatprep.subr.mxu0 0.0
    %966 = vmatpush1.xpose.msra.mxu0 0.0
    %967 = vmatprep.subr.mxu0 0.0
    %968 = vmatpush1.xpose.msra.mxu0 0.0
    %969 = vmatprep.subr.mxu0 0.0
    %970 = vmatpush1.xpose.msra.mxu0 0.0
    %971 = vmatprep.subr.mxu0 0.0
    %972 = vmatpush1.xpose.msra.mxu0 0.0
    %973 = vmatprep.subr.mxu0 0.0
    %974 = vmatpush1.xpose.msra.mxu0 0.0
    %975 = vmatprep.subr.mxu0 0.0
    %976 = vmatpush1.xpose.msra.mxu0 0.0
    %977 = vmatprep.subr.mxu0 0.0
    %978 = vmatpush1.xpose.msra.mxu0 0.0
    %979 = vmatprep.subr.mxu0 0.0
    %980 = vmatpush1.xpose.msra.mxu0 0.0
    %981 = vmatprep.subr.mxu0 0.0
    %982 = vmatpush1.xpose.msra.mxu0 0.0
    %983 = vmatprep.subr.mxu0 0.0
    %984 = vmatpush1.xpose.msra.mxu0 0.0
    %985 = vmatprep.subr.mxu0 0.0
    %986 = vmatpush1.xpose.msra.mxu0 0.0
    %987 = vmatprep.subr.mxu0 0.0
    %988 = vmatpush1.xpose.msra.mxu0 0.0
    %989 = vmatprep.subr.mxu0 0.0
    %990 = vmatpush1.xpose.msra.mxu0 0.0
    %991 = vmatprep.subr.mxu0 0.0
    %992 = vmatpush1.xpose.msra.mxu0 0.0
    %993 = vmatprep.subr.mxu0 0.0
    %994 = vmatpush1.xpose.msra.mxu0 0.0
    %995 = vmatprep.subr.mxu0 0.0
    %996 = vmatpush1.xpose.msra.mxu0 0.0
    %997 = vmatprep.mubr.f32.mxu0 0.0
    %998 = vmatmul.mubr.f32.gmra.mrb[0].mxu0 %v929
    %v999 = vpop.f32.mrb[0].mxu0
    %v1000 = vadd.f32 0.0, %v999
    %v1001 = vpop.f32.mrb[0].mxu0
    %1002 = vdwg.mxu0
    %v1003 = vsel %vm452, %v1000, -inf
    %1004 = vmax.xlane.f32.xlu0 %v1003
    %v1005 = vpop.xlane.xlu0 %1004
    %v1006 = vsub.f32 %v1000, %v1005
    %v1007 = vmul.f32 %v1006, 1.442695
    %v1008 = vpow.pop %v1007
    %v1009 = vsel %vm452, %v1008, 0.0
    %1010 = vadd.xlane.f32.xlu0 %v1009
    %v1011 = vpop.xlane.xlu0 %1010
    %v1012 = vrcp.pop %v1011
    %v1013 = vmul.f32 %v1008, %v1012
    %1014 = vrot.lane.b32.xlu0 %v445, 112
    %v1015 = vpop.permute.xlu0 %1014
    %v1018 = vsel %vm452, %v1013, 0
    %1020 = vmatprep.subr.mxu0 0.0
    %1021 = vmatpush1.msra.mxu0 %v1015
    %1022 = vmatprep.subr.mxu0 0.0
    %1023 = vmatpush1.msra.mxu0 0.0
    %1024 = vmatprep.subr.mxu0 0.0
    %1025 = vmatpush1.msra.mxu0 0.0
    %1026 = vmatprep.subr.mxu0 0.0
    %1027 = vmatpush1.msra.mxu0 0.0
    %1028 = vmatprep.subr.mxu0 0.0
    %1029 = vmatpush1.msra.mxu0 0.0
    %1030 = vmatprep.subr.mxu0 0.0
    %1031 = vmatpush1.msra.mxu0 0.0
    %1032 = vmatprep.subr.mxu0 0.0
    %1033 = vmatpush1.msra.mxu0 0.0
    %1034 = vmatprep.subr.mxu0 0.0
    %1035 = vmatpush1.msra.mxu0 0.0
    %1036 = vmatprep.subr.mxu0 0.0
    %1037 = vmatpush1.msra.mxu0 0.0
    %1038 = vmatprep.subr.mxu0 0.0
    %1039 = vmatpush1.msra.mxu0 0.0
    %1040 = vmatprep.subr.mxu0 0.0
    %1041 = vmatpush1.msra.mxu0 0.0
    %1042 = vmatprep.subr.mxu0 0.0
    %1043 = vmatpush1.msra.mxu0 0.0
    %1044 = vmatprep.subr.mxu0 0.0
    %1045 = vmatpush1.msra.mxu0 0.0
    %1046 = vmatprep.subr.mxu0 0.0
    %1047 = vmatpush1.msra.mxu0 0.0
    %1048 = vmatprep.subr.mxu0 0.0
    %1049 = vmatpush1.msra.mxu0 0.0
    %1050 = vmatprep.subr.mxu0 0.0
    %1051 = vmatpush1.msra.mxu0 0.0
    %1052 = vmatprep.subr.mxu0 0.0
    %1053 = vmatpush1.msra.mxu0 0.0
    %1054 = vmatprep.subr.mxu0 0.0
    %1055 = vmatpush1.msra.mxu0 0.0
    %1056 = vmatprep.subr.mxu0 0.0
    %1057 = vmatpush1.msra.mxu0 0.0
    %1058 = vmatprep.subr.mxu0 0.0
    %1059 = vmatpush1.msra.mxu0 0.0
    %1060 = vmatprep.subr.mxu0 0.0
    %1061 = vmatpush1.msra.mxu0 0.0
    %1062 = vmatprep.subr.mxu0 0.0
    %1063 = vmatpush1.msra.mxu0 0.0
    %1064 = vmatprep.subr.mxu0 0.0
    %1065 = vmatpush1.msra.mxu0 0.0
    %1066 = vmatprep.subr.mxu0 0.0
    %1067 = vmatpush1.msra.mxu0 0.0
    %1068 = vmatprep.subr.mxu0 0.0
    %1069 = vmatpush1.msra.mxu0 0.0
    %1070 = vmatprep.subr.mxu0 0.0
    %1071 = vmatpush1.msra.mxu0 0.0
    %1072 = vmatprep.subr.mxu0 0.0
    %1073 = vmatpush1.msra.mxu0 0.0
    %1074 = vmatprep.subr.mxu0 0.0
    %1075 = vmatpush1.msra.mxu0 0.0
    %1076 = vmatprep.subr.mxu0 0.0
    %1077 = vmatpush1.msra.mxu0 0.0
    %1078 = vmatprep.subr.mxu0 0.0
    %1079 = vmatpush1.msra.mxu0 0.0
    %1080 = vmatprep.subr.mxu0 0.0
    %1081 = vmatpush1.msra.mxu0 0.0
    %1082 = vmatprep.subr.mxu0 0.0
    %1083 = vmatpush1.msra.mxu0 0.0
    %1084 = vmatprep.mubr.f32.mxu0 0.0
    %1085 = vmatmul.mubr.f32.gmra.mrb[0].mxu0 %v1018
    %v1086 = vpop.f32.mrb[0].mxu0
    %v1087 = vadd.f32 0.0, %v1086
    %v1088 = vpop.f32.mrb[0].mxu0
    %1089 = vdwg.mxu0
    %v1091 = vsel %vm452, %v1087, 0
    %1093 = vmatprep.subr.mxu0 0.0
    %1094 = vmatpush1.msra.mxu0 %v450
    %1095 = vmatprep.subr.mxu0 0.0
    %1096 = vmatpush1.msra.mxu0 0.0
    %1097 = vmatprep.subr.mxu0 0.0
    %1098 = vmatpush1.msra.mxu0 0.0
    %1099 = vmatprep.subr.mxu0 0.0
    %1100 = vmatpush1.msra.mxu0 0.0
    %1101 = vmatprep.subr.mxu0 0.0
    %1102 = vmatpush1.msra.mxu0 0.0
    %1103 = vmatprep.subr.mxu0 0.0
    %1104 = vmatpush1.msra.mxu0 0.0
    %1105 = vmatprep.subr.mxu0 0.0
    %1106 = vmatpush1.msra.mxu0 0.0
    %1107 = vmatprep.subr.mxu0 0.0
    %1108 = vmatpush1.msra.mxu0 0.0
    %1109 = vmatprep.subr.mxu0 0.0
    %1110 = vmatpush1.msra.mxu0 0.0
    %1111 = vmatprep.subr.mxu0 0.0
    %1112 = vmatpush1.msra.mxu0 0.0
    %1113 = vmatprep.subr.mxu0 0.0
    %1114 = vmatpush1.msra.mxu0 0.0
    %1115 = vmatprep.subr.mxu0 0.0
    %1116 = vmatpush1.msra.mxu0 0.0
    %1117 = vmatprep.subr.mxu0 0.0
    %1118 = vmatpush1.msra.mxu0 0.0
    %1119 = vmatprep.subr.mxu0 0.0
    %1120 = vmatpush1.msra.mxu0 0.0
    %1121 = vmatprep.subr.mxu0 0.0
    %1122 = vmatpush1.msra.mxu0 0.0
    %1123 = vmatprep.subr.mxu0 0.0
    %1124 = vmatpush1.msra.mxu0 0.0
    %1125 = vmatprep.subr.mxu0 0.0
    %1126 = vmatpush1.msra.mxu0 0.0
    %1127 = vmatprep.subr.mxu0 0.0
    %1128 = vmatpush1.msra.mxu0 0.0
    %1129 = vmatprep.subr.mxu0 0.0
    %1130 = vmatpush1.msra.mxu0 0.0
    %1131 = vmatprep.subr.mxu0 0.0
    %1132 = vmatpush1.msra.mxu0 0.0
    %1133 = vmatprep.subr.mxu0 0.0
    %1134 = vmatpush1.msra.mxu0 0.0
    %1135 = vmatprep.subr.mxu0 0.0
    %1136 = vmatpush1.msra.mxu0 0.0
    %1137 = vmatprep.subr.mxu0 0.0
    %1138 = vmatpush1.msra.mxu0 0.0
    %1139 = vmatprep.subr.mxu0 0.0
    %1140 = vmatpush1.msra.mxu0 0.0
    %1141 = vmatprep.subr.mxu0 0.0
    %1142 = vmatpush1.msra.mxu0 0.0
    %1143 = vmatprep.subr.mxu0 0.0
    %1144 = vmatpush1.msra.mxu0 0.0
    %1145 = vmatprep.subr.mxu0 0.0
    %1146 = vmatpush1.msra.mxu0 0.0
    %1147 = vmatprep.subr.mxu0 0.0
    %1148 = vmatpush1.msra.mxu0 0.0
    %1149 = vmatprep.subr.mxu0 0.0
    %1150 = vmatpush1.msra.mxu0 0.0
    %1151 = vmatprep.subr.mxu0 0.0
    %1152 = vmatpush1.msra.mxu0 0.0
    %1153 = vmatprep.subr.mxu0 0.0
    %1154 = vmatpush1.msra.mxu0 0.0
    %1155 = vmatprep.subr.mxu0 0.0
    %1156 = vmatpush1.msra.mxu0 0.0
    %1157 = vmatprep.mubr.f32.mxu0 0.0
    %1158 = vmatmul.mubr.f32.gmra.mrb[0].mxu0 %v1091
    %v1159 = vpop.f32.mrb[0].mxu0
    %v1160 = vadd.f32 0.0, %v1159
    %v1161 = vpop.f32.mrb[0].mxu0
    %1162 = vdwg.mxu0
    %v1163 = vadd.f32 %v922, %v1160
    %1164 = vrot.lane.b32.xlu0 %v294, 104
    %v1165 = vpop.permute.xlu0 %1164
    %1166 = vrot.lane.b32.xlu0 %v368, 104
    %v1167 = vpop.permute.xlu0 %1166
    %v1168 = vsel %vm452, %v1165, 0
    %v1170 = vsel %vm452, %v1167, 0
    %1172 = vmatprep.subr.mxu0 0.0
    %1173 = vmatpush1.xpose.msra.mxu0 %v1170
    %1174 = vmatprep.subr.mxu0 0.0
    %1175 = vmatpush1.xpose.msra.mxu0 0.0
    %1176 = vmatprep.subr.mxu0 0.0
    %1177 = vmatpush1.xpose.msra.mxu0 0.0
    %1178 = vmatprep.subr.mxu0 0.0
    %1179 = vmatpush1.xpose.msra.mxu0 0.0
    %1180 = vmatprep.subr.mxu0 0.0
    %1181 = vmatpush1.xpose.msra.mxu0 0.0
    %1182 = vmatprep.subr.mxu0 0.0
    %1183 = vmatpush1.xpose.msra.mxu0 0.0
    %1184 = vmatprep.subr.mxu0 0.0
    %1185 = vmatpush1.xpose.msra.mxu0 0.0
    %1186 = vmatprep.subr.mxu0 0.0
    %1187 = vmatpush1.xpose.msra.mxu0 0.0
    %1188 = vmatprep.subr.mxu0 0.0
    %1189 = vmatpush1.xpose.msra.mxu0 0.0
    %1190 = vmatprep.subr.mxu0 0.0
    %1191 = vmatpush1.xpose.msra.mxu0 0.0
    %1192 = vmatprep.subr.mxu0 0.0
    %1193 = vmatpush1.xpose.msra.mxu0 0.0
    %1194 = vmatprep.subr.mxu0 0.0
    %1195 = vmatpush1.xpose.msra.mxu0 0.0
    %1196 = vmatprep.subr.mxu0 0.0
    %1197 = vmatpush1.xpose.msra.mxu0 0.0
    %1198 = vmatprep.subr.mxu0 0.0
    %1199 = vmatpush1.xpose.msra.mxu0 0.0
    %1200 = vmatprep.subr.mxu0 0.0
    %1201 = vmatpush1.xpose.msra.mxu0 0.0
    %1202 = vmatprep.subr.mxu0 0.0
    %1203 = vmatpush1.xpose.msra.mxu0 0.0
    %1204 = vmatprep.subr.mxu0 0.0
    %1205 = vmatpush1.xpose.msra.mxu0 0.0
    %1206 = vmatprep.subr.mxu0 0.0
    %1207 = vmatpush1.xpose.msra.mxu0 0.0
    %1208 = vmatprep.subr.mxu0 0.0
    %1209 = vmatpush1.xpose.msra.mxu0 0.0
    %1210 = vmatprep.subr.mxu0 0.0
    %1211 = vmatpush1.xpose.msra.mxu0 0.0
    %1212 = vmatprep.subr.mxu0 0.0
    %1213 = vmatpush1.xpose.msra.mxu0 0.0
    %1214 = vmatprep.subr.mxu0 0.0
    %1215 = vmatpush1.xpose.msra.mxu0 0.0
    %1216 = vmatprep.subr.mxu0 0.0
    %1217 = vmatpush1.xpose.msra.mxu0 0.0
    %1218 = vmatprep.subr.mxu0 0.0
    %1219 = vmatpush1.xpose.msra.mxu0 0.0
    %1220 = vmatprep.subr.mxu0 0.0
    %1221 = vmatpush1.xpose.msra.mxu0 0.0
    %1222 = vmatprep.subr.mxu0 0.0
    %1223 = vmatpush1.xpose.msra.mxu0 0.0
    %1224 = vmatprep.subr.mxu0 0.0
    %1225 = vmatpush1.xpose.msra.mxu0 0.0
    %1226 = vmatprep.subr.mxu0 0.0
    %1227 = vmatpush1.xpose.msra.mxu0 0.0
    %1228 = vmatprep.subr.mxu0 0.0
    %1229 = vmatpush1.xpose.msra.mxu0 0.0
    %1230 = vmatprep.subr.mxu0 0.0
    %1231 = vmatpush1.xpose.msra.mxu0 0.0
    %1232 = vmatprep.subr.mxu0 0.0
    %1233 = vmatpush1.xpose.msra.mxu0 0.0
    %1234 = vmatprep.subr.mxu0 0.0
    %1235 = vmatpush1.xpose.msra.mxu0 0.0
    %1236 = vmatprep.mubr.f32.mxu0 0.0
    %1237 = vmatmul.mubr.f32.gmra.mrb[0].mxu0 %v1168
    %v1238 = vpop.f32.mrb[0].mxu0
    %v1239 = vadd.f32 0.0, %v1238
    %v1240 = vpop.f32.mrb[0].mxu0
    %1241 = vdwg.mxu0
    %v1242 = vsel %vm452, %v1239, -inf
    %1243 = vmax.xlane.f32.xlu0 %v1242
    %v1244 = vpop.xlane.xlu0 %1243
    %v1245 = vsub.f32 %v1239, %v1244
    %v1246 = vmul.f32 %v1245, 1.442695
    %v1247 = vpow.pop %v1246
    %v1248 = vsel %vm452, %v1247, 0.0
    %1249 = vadd.xlane.f32.xlu0 %v1248
    %v1250 = vpop.xlane.xlu0 %1249
    %v1251 = vrcp.pop %v1250
    %v1252 = vmul.f32 %v1247, %v1251
    %1253 = vrot.lane.b32.xlu0 %v445, 104
    %v1254 = vpop.permute.xlu0 %1253
    %v1257 = vsel %vm452, %v1252, 0
    %1259 = vmatprep.subr.mxu0 0.0
    %1260 = vmatpush1.msra.mxu0 %v1254
    %1261 = vmatprep.subr.mxu0 0.0
    %1262 = vmatpush1.msra.mxu0 0.0
    %1263 = vmatprep.subr.mxu0 0.0
    %1264 = vmatpush1.msra.mxu0 0.0
    %1265 = vmatprep.subr.mxu0 0.0
    %1266 = vmatpush1.msra.mxu0 0.0
    %1267 = vmatprep.subr.mxu0 0.0
    %1268 = vmatpush1.msra.mxu0 0.0
    %1269 = vmatprep.subr.mxu0 0.0
    %1270 = vmatpush1.msra.mxu0 0.0
    %1271 = vmatprep.subr.mxu0 0.0
    %1272 = vmatpush1.msra.mxu0 0.0
    %1273 = vmatprep.subr.mxu0 0.0
    %1274 = vmatpush1.msra.mxu0 0.0
    %1275 = vmatprep.subr.mxu0 0.0
    %1276 = vmatpush1.msra.mxu0 0.0
    %1277 = vmatprep.subr.mxu0 0.0
    %1278 = vmatpush1.msra.mxu0 0.0
    %1279 = vmatprep.subr.mxu0 0.0
    %1280 = vmatpush1.msra.mxu0 0.0
    %1281 = vmatprep.subr.mxu0 0.0
    %1282 = vmatpush1.msra.mxu0 0.0
    %1283 = vmatprep.subr.mxu0 0.0
    %1284 = vmatpush1.msra.mxu0 0.0
    %1285 = vmatprep.subr.mxu0 0.0
    %1286 = vmatpush1.msra.mxu0 0.0
    %1287 = vmatprep.subr.mxu0 0.0
    %1288 = vmatpush1.msra.mxu0 0.0
    %1289 = vmatprep.subr.mxu0 0.0
    %1290 = vmatpush1.msra.mxu0 0.0
    %1291 = vmatprep.subr.mxu0 0.0
    %1292 = vmatpush1.msra.mxu0 0.0
    %1293 = vmatprep.subr.mxu0 0.0
    %1294 = vmatpush1.msra.mxu0 0.0
    %1295 = vmatprep.subr.mxu0 0.0
    %1296 = vmatpush1.msra.mxu0 0.0
    %1297 = vmatprep.subr.mxu0 0.0
    %1298 = vmatpush1.msra.mxu0 0.0
    %1299 = vmatprep.subr.mxu0 0.0
    %1300 = vmatpush1.msra.mxu0 0.0
    %1301 = vmatprep.subr.mxu0 0.0
    %1302 = vmatpush1.msra.mxu0 0.0
    %1303 = vmatprep.subr.mxu0 0.0
    %1304 = vmatpush1.msra.mxu0 0.0
    %1305 = vmatprep.subr.mxu0 0.0
    %1306 = vmatpush1.msra.mxu0 0.0
    %1307 = vmatprep.subr.mxu0 0.0
    %1308 = vmatpush1.msra.mxu0 0.0
    %1309 = vmatprep.subr.mxu0 0.0
    %1310 = vmatpush1.msra.mxu0 0.0
    %1311 = vmatprep.subr.mxu0 0.0
    %1312 = vmatpush1.msra.mxu0 0.0
    %1313 = vmatprep.subr.mxu0 0.0
    %1314 = vmatpush1.msra.mxu0 0.0
    %1315 = vmatprep.subr.mxu0 0.0
    %1316 = vmatpush1.msra.mxu0 0.0
    %1317 = vmatprep.subr.mxu0 0.0
    %1318 = vmatpush1.msra.mxu0 0.0
    %1319 = vmatprep.subr.mxu0 0.0
    %1320 = vmatpush1.msra.mxu0 0.0
    %1321 = vmatprep.subr.mxu0 0.0
    %1322 = vmatpush1.msra.mxu0 0.0
    %1323 = vmatprep.mubr.f32.mxu0 0.0
    %1324 = vmatmul.mubr.f32.gmra.mrb[0].mxu0 %v1257
    %v1325 = vpop.f32.mrb[0].mxu0
    %v1326 = vadd.f32 0.0, %v1325
    %v1327 = vpop.f32.mrb[0].mxu0
    %1328 = vdwg.mxu0
    %v1330 = vsel %vm452, %v1326, 0
    %1332 = vmatprep.subr.mxu0 0.0
    %1333 = vmatpush1.msra.mxu0 %v451
    %1334 = vmatprep.subr.mxu0 0.0
    %1335 = vmatpush1.msra.mxu0 0.0
    %1336 = vmatprep.subr.mxu0 0.0
    %1337 = vmatpush1.msra.mxu0 0.0
    %1338 = vmatprep.subr.mxu0 0.0
    %1339 = vmatpush1.msra.mxu0 0.0
    %1340 = vmatprep.subr.mxu0 0.0
    %1341 = vmatpush1.msra.mxu0 0.0
    %1342 = vmatprep.subr.mxu0 0.0
    %1343 = vmatpush1.msra.mxu0 0.0
    %1344 = vmatprep.subr.mxu0 0.0
    %1345 = vmatpush1.msra.mxu0 0.0
    %1346 = vmatprep.subr.mxu0 0.0
    %1347 = vmatpush1.msra.mxu0 0.0
    %1348 = vmatprep.subr.mxu0 0.0
    %1349 = vmatpush1.msra.mxu0 0.0
    %1350 = vmatprep.subr.mxu0 0.0
    %1351 = vmatpush1.msra.mxu0 0.0
    %1352 = vmatprep.subr.mxu0 0.0
    %1353 = vmatpush1.msra.mxu0 0.0
    %1354 = vmatprep.subr.mxu0 0.0
    %1355 = vmatpush1.msra.mxu0 0.0
    %1356 = vmatprep.subr.mxu0 0.0
    %1357 = vmatpush1.msra.mxu0 0.0
    %1358 = vmatprep.subr.mxu0 0.0
    %1359 = vmatpush1.msra.mxu0 0.0
    %1360 = vmatprep.subr.mxu0 0.0
    %1361 = vmatpush1.msra.mxu0 0.0
    %1362 = vmatprep.subr.mxu0 0.0
    %1363 = vmatpush1.msra.mxu0 0.0
    %1364 = vmatprep.subr.mxu0 0.0
    %1365 = vmatpush1.msra.mxu0 0.0
    %1366 = vmatprep.subr.mxu0 0.0
    %1367 = vmatpush1.msra.mxu0 0.0
    %1368 = vmatprep.subr.mxu0 0.0
    %1369 = vmatpush1.msra.mxu0 0.0
    %1370 = vmatprep.subr.mxu0 0.0
    %1371 = vmatpush1.msra.mxu0 0.0
    %1372 = vmatprep.subr.mxu0 0.0
    %1373 = vmatpush1.msra.mxu0 0.0
    %1374 = vmatprep.subr.mxu0 0.0
    %1375 = vmatpush1.msra.mxu0 0.0
    %1376 = vmatprep.subr.mxu0 0.0
    %1377 = vmatpush1.msra.mxu0 0.0
    %1378 = vmatprep.subr.mxu0 0.0
    %1379 = vmatpush1.msra.mxu0 0.0
    %1380 = vmatprep.subr.mxu0 0.0
    %1381 = vmatpush1.msra.mxu0 0.0
    %1382 = vmatprep.subr.mxu0 0.0
    %1383 = vmatpush1.msra.mxu0 0.0
    %1384 = vmatprep.subr.mxu0 0.0
    %1385 = vmatpush1.msra.mxu0 0.0
    %1386 = vmatprep.subr.mxu0 0.0
    %1387 = vmatpush1.msra.mxu0 0.0
    %1388 = vmatprep.subr.mxu0 0.0
    %1389 = vmatpush1.msra.mxu0 0.0
    %1390 = vmatprep.subr.mxu0 0.0
    %1391 = vmatpush1.msra.mxu0 0.0
    %1392 = vmatprep.subr.mxu0 0.0
    %1393 = vmatpush1.msra.mxu0 0.0
    %1394 = vmatprep.subr.mxu0 0.0
    %1395 = vmatpush1.msra.mxu0 0.0
    %1396 = vmatprep.mubr.f32.mxu0 0.0
    %1397 = vmatmul.mubr.f32.gmra.mrb[0].mxu0 %v1330
    %v1398 = vpop.f32.mrb[0].mxu0
    %v1399 = vadd.f32 0.0, %v1398
    %v1400 = vpop.f32.mrb[0].mxu0
    %1401 = vdwg.mxu0
    %v1402 = vadd.f32 %v1163, %v1399
    %v1403 = vld [vmem:[%s8] sm:$0x1]
    %v1405 = vlaneseq
    %v1406 = vshrl.u32 %v1405, 7
    %v1407 = vsub.s32 0, %v1406
    %v1408 = vrot.slane %v1403, %v1407
    %v1410 = vadd.f32 %v1402, %v1408
    %v1411 = vadd.f32 %v214, %v1410
    %v1412 = vadd.f32 %v215, %v1410
    %v1413 = vld [vmem:[%s18] sm:$0x1]
    %v1414 = vld [vmem:[%s19] sm:$0x1]
    %v1415 = vsel %vm223, %v1411, 0.0
    %1416 = vadd.xlane.f32.xlu0 %v1415
    %v1417 = vpop.xlane.xlu0 %1416
    %v1418 = vsel %vm223, %v1412, 0.0
    %1419 = vadd.xlane.f32.xlu0 %v1418
    %v1420 = vpop.xlane.xlu0 %1419
    %v1421 = vrcp.pop 32.0
    %v1422 = vmul.f32 %v1417, %v1421
    %v1423 = vmul.f32 %v1420, %v1421
    %v1424 = vsub.f32 %v1411, %v1422
    %v1425 = vsub.f32 %v1412, %v1423
    %v1426 = vmul.f32 %v1424, %v1424
    %v1427 = vmul.f32 %v1425, %v1425
    %v1428 = vsel %vm223, %v1426, 0.0
    %1429 = vadd.xlane.f32.xlu0 %v1428
    %v1430 = vpop.xlane.xlu0 %1429
    %v1431 = vsel %vm223, %v1427, 0.0
    %1432 = vadd.xlane.f32.xlu0 %v1431
    %v1433 = vpop.xlane.xlu0 %1432
    %v1434 = vmul.f32 %v1430, %v1421
    %v1435 = vmul.f32 %v1433, %v1421
    %v1436 = vadd.f32 %v1434, 1e-05
    %v1437 = vadd.f32 %v1435, 1e-05
    %v1438 = vrsqrt.pop %v1436
    %v1439 = vrsqrt.pop %v1437
    %v1440 = vmul.f32 %v1424, %v1438
    %v1441 = vmul.f32 %v1425, %v1439
    %v1443 = vlaneseq
    %v1444 = vshrl.u32 %v1443, 7
    %v1445 = vsub.s32 0, %v1444
    %v1446 = vrot.slane %v1413, %v1445
    %v1448 = vmul.f32 %v1440, %v1446
    %v1449 = vmul.f32 %v1441, %v1446
    %v1451 = vlaneseq
    %v1452 = vshrl.u32 %v1451, 7
    %v1453 = vsub.s32 0, %v1452
    %v1454 = vrot.slane %v1414, %v1453
    %v1456 = vadd.f32 %v1448, %v1454
    %v1457 = vadd.f32 %v1449, %v1454
    %v1458 = vadd.f32 %v1456, %v216
    %v1459 = vadd.f32 %v1457, %v217
    %v1460 = vld [vmem:[%s2] sm:$0xff]
    %v1461 = vld [vmem:[%s2 + $0x8] sm:$0xff]
    %v1462 = vld [vmem:[%s2 + $0x10] sm:$0xff]
    %v1463 = vld [vmem:[%s2 + $0x18] sm:$0xff]
    %v1464 = vld [vmem:[%s3] sm:$0xff]
    %v1465 = vld [vmem:[%s3 + $0x8] sm:$0xff]
    %v1466 = vld [vmem:[%s3 + $0x10] sm:$0xff]
    %v1467 = vld [vmem:[%s3 + $0x18] sm:$0xff]
    %v1468 = vadd.f32 %v1460, %v1464
    %v1469 = vadd.f32 %v1461, %v1465
    %v1470 = vadd.f32 %v1462, %v1466
    %v1471 = vadd.f32 %v1463, %v1467
    %v1472 = vld [vmem:[#allocation11] sm:$0xff]
    %v1473 = vld [vmem:[#allocation11 + $0x8] sm:$0xff]
    %v1474 = vld [vmem:[#allocation11 + $0x10] sm:$0xff]
    %v1475 = vld [vmem:[#allocation11 + $0x18] sm:$0xff]
    %v1477 = vsel %vm223, %v1458, 0
    %v1480 = vsel %vm223, %v1459, 0
    %1482 = vmatprep.subr.mxu0 0.0
    %1483 = vmatpush1.msra.mxu0 %v1472
    %1484 = vmatprep.subr.mxu0 0.0
    %1485 = vmatpush1.msra.mxu0 %v1473
    %1486 = vmatprep.subr.mxu0 0.0
    %1487 = vmatpush1.msra.mxu0 %v1474
    %1488 = vmatprep.subr.mxu0 0.0
    %1489 = vmatpush1.msra.mxu0 %v1475
    %1490 = vmatprep.subr.mxu0 0.0
    %1491 = vmatpush1.msra.mxu0 0.0
    %1492 = vmatprep.subr.mxu0 0.0
    %1493 = vmatpush1.msra.mxu0 0.0
    %1494 = vmatprep.subr.mxu0 0.0
    %1495 = vmatpush1.msra.mxu0 0.0
    %1496 = vmatprep.subr.mxu0 0.0
    %1497 = vmatpush1.msra.mxu0 0.0
    %1498 = vmatprep.subr.mxu0 0.0
    %1499 = vmatpush1.msra.mxu0 0.0
    %1500 = vmatprep.subr.mxu0 0.0
    %1501 = vmatpush1.msra.mxu0 0.0
    %1502 = vmatprep.subr.mxu0 0.0
    %1503 = vmatpush1.msra.mxu0 0.0
    %1504 = vmatprep.subr.mxu0 0.0
    %1505 = vmatpush1.msra.mxu0 0.0
    %1506 = vmatprep.subr.mxu0 0.0
    %1507 = vmatpush1.msra.mxu0 0.0
    %1508 = vmatprep.subr.mxu0 0.0
    %1509 = vmatpush1.msra.mxu0 0.0
    %1510 = vmatprep.subr.mxu0 0.0
    %1511 = vmatpush1.msra.mxu0 0.0
    %1512 = vmatprep.subr.mxu0 0.0
    %1513 = vmatpush1.msra.mxu0 0.0
    %1514 = vmatprep.subr.mxu0 0.0
    %1515 = vmatpush1.msra.mxu0 0.0
    %1516 = vmatprep.subr.mxu0 0.0
    %1517 = vmatpush1.msra.mxu0 0.0
    %1518 = vmatprep.subr.mxu0 0.0
    %1519 = vmatpush1.msra.mxu0 0.0
    %1520 = vmatprep.subr.mxu0 0.0
    %1521 = vmatpush1.msra.mxu0 0.0
    %1522 = vmatprep.subr.mxu0 0.0
    %1523 = vmatpush1.msra.mxu0 0.0
    %1524 = vmatprep.subr.mxu0 0.0
    %1525 = vmatpush1.msra.mxu0 0.0
    %1526 = vmatprep.subr.mxu0 0.0
    %1527 = vmatpush1.msra.mxu0 0.0
    %1528 = vmatprep.subr.mxu0 0.0
    %1529 = vmatpush1.msra.mxu0 0.0
    %1530 = vmatprep.subr.mxu0 0.0
    %1531 = vmatpush1.msra.mxu0 0.0
    %1532 = vmatprep.subr.mxu0 0.0
    %1533 = vmatpush1.msra.mxu0 0.0
    %1534 = vmatprep.subr.mxu0 0.0
    %1535 = vmatpush1.msra.mxu0 0.0
    %1536 = vmatprep.subr.mxu0 0.0
    %1537 = vmatpush1.msra.mxu0 0.0
    %1538 = vmatprep.subr.mxu0 0.0
    %1539 = vmatpush1.msra.mxu0 0.0
    %1540 = vmatprep.subr.mxu0 0.0
    %1541 = vmatpush1.msra.mxu0 0.0
    %1542 = vmatprep.subr.mxu0 0.0
    %1543 = vmatpush1.msra.mxu0 0.0
    %1544 = vmatprep.subr.mxu0 0.0
    %1545 = vmatpush1.msra.mxu0 0.0
    %1546 = vmatprep.mubr.f32.mxu0 0.0
    %1547 = vmatmul.mubr.f32.gmra.mrb[0].mxu0 %v1477
    %v1548 = vpop.f32.mrb[0].mxu0
    %v1549 = vadd.f32 0.0, %v1548
    %v1550 = vpop.f32.mrb[0].mxu0
    %1551 = vmatprep.mubr.f32.mxu0 0.0
    %1552 = vmatmul.mubr.f32.gmra.mrb[0].mxu0 %v1480
    %v1553 = vpop.f32.mrb[0].mxu0
    %v1554 = vadd.f32 0.0, %v1553
    %v1555 = vpop.f32.mrb[0].mxu0
    %1556 = vdwg.mxu0
    %v1557 = vld [vmem:[#allocation13] sm:$0xff]
    %v1558 = vld [vmem:[#allocation13 + $0x8] sm:$0xff]
    %v1559 = vld [vmem:[#allocation13 + $0x10] sm:$0xff]
    %v1560 = vld [vmem:[#allocation13 + $0x18] sm:$0xff]
    %v1562 = vsel %vm223, %v1468, 0
    %v1565 = vsel %vm223, %v1469, 0
    %v1568 = vsel %vm223, %v1470, 0
    %v1571 = vsel %vm223, %v1471, 0
    %1573 = vmatprep.subr.mxu0 0.0
    %1574 = vmatpush1.msra.mxu0 %v1557
    %1575 = vmatprep.subr.mxu0 0.0
    %1576 = vmatpush1.msra.mxu0 %v1558
    %1577 = vmatprep.subr.mxu0 0.0
    %1578 = vmatpush1.msra.mxu0 %v1559
    %1579 = vmatprep.subr.mxu0 0.0
    %1580 = vmatpush1.msra.mxu0 %v1560
    %1581 = vmatprep.subr.mxu0 0.0
    %1582 = vmatpush1.msra.mxu0 0.0
    %1583 = vmatprep.subr.mxu0 0.0
    %1584 = vmatpush1.msra.mxu0 0.0
    %1585 = vmatprep.subr.mxu0 0.0
    %1586 = vmatpush1.msra.mxu0 0.0
    %1587 = vmatprep.subr.mxu0 0.0
    %1588 = vmatpush1.msra.mxu0 0.0
    %1589 = vmatprep.subr.mxu0 0.0
    %1590 = vmatpush1.msra.mxu0 0.0
    %1591 = vmatprep.subr.mxu0 0.0
    %1592 = vmatpush1.msra.mxu0 0.0
    %1593 = vmatprep.subr.mxu0 0.0
    %1594 = vmatpush1.msra.mxu0 0.0
    %1595 = vmatprep.subr.mxu0 0.0
    %1596 = vmatpush1.msra.mxu0 0.0
    %1597 = vmatprep.subr.mxu0 0.0
    %1598 = vmatpush1.msra.mxu0 0.0
    %1599 = vmatprep.subr.mxu0 0.0
    %1600 = vmatpush1.msra.mxu0 0.0
    %1601 = vmatprep.subr.mxu0 0.0
    %1602 = vmatpush1.msra.mxu0 0.0
    %1603 = vmatprep.subr.mxu0 0.0
    %1604 = vmatpush1.msra.mxu0 0.0
    %1605 = vmatprep.subr.mxu0 0.0
    %1606 = vmatpush1.msra.mxu0 0.0
    %1607 = vmatprep.subr.mxu0 0.0
    %1608 = vmatpush1.msra.mxu0 0.0
    %1609 = vmatprep.subr.mxu0 0.0
    %1610 = vmatpush1.msra.mxu0 0.0
    %1611 = vmatprep.subr.mxu0 0.0
    %1612 = vmatpush1.msra.mxu0 0.0
    %1613 = vmatprep.subr.mxu0 0.0
    %1614 = vmatpush1.msra.mxu0 0.0
    %1615 = vmatprep.subr.mxu0 0.0
    %1616 = vmatpush1.msra.mxu0 0.0
    %1617 = vmatprep.subr.mxu0 0.0
    %1618 = vmatpush1.msra.mxu0 0.0
    %1619 = vmatprep.subr.mxu0 0.0
    %1620 = vmatpush1.msra.mxu0 0.0
    %1621 = vmatprep.subr.mxu0 0.0
    %1622 = vmatpush1.msra.mxu0 0.0
    %1623 = vmatprep.subr.mxu0 0.0
    %1624 = vmatpush1.msra.mxu0 0.0
    %1625 = vmatprep.subr.mxu0 0.0
    %1626 = vmatpush1.msra.mxu0 0.0
    %1627 = vmatprep.subr.mxu0 0.0
    %1628 = vmatpush1.msra.mxu0 0.0
    %1629 = vmatprep.subr.mxu0 0.0
    %1630 = vmatpush1.msra.mxu0 0.0
    %1631 = vmatprep.subr.mxu0 0.0
    %1632 = vmatpush1.msra.mxu0 0.0
    %1633 = vmatprep.subr.mxu0 0.0
    %1634 = vmatpush1.msra.mxu0 0.0
    %1635 = vmatprep.subr.mxu0 0.0
    %1636 = vmatpush1.msra.mxu0 0.0
    %1637 = vmatprep.mubr.f32.mxu0 0.0
    %1638 = vmatmul.mubr.f32.gmra.mrb[0].mxu0 %v1562
    %v1639 = vpop.f32.mrb[0].mxu0
    %v1640 = vadd.f32 0.0, %v1639
    %v1641 = vpop.f32.mrb[0].mxu0
    %1642 = vmatprep.mubr.f32.mxu0 0.0
    %1643 = vmatmul.mubr.f32.gmra.mrb[0].mxu0 %v1565
    %v1644 = vpop.f32.mrb[0].mxu0
    %v1645 = vadd.f32 0.0, %v1644
    %v1646 = vpop.f32.mrb[0].mxu0
    %1647 = vmatprep.mubr.f32.mxu0 0.0
    %1648 = vmatmul.mubr.f32.gmra.mrb[0].mxu0 %v1568
    %v1649 = vpop.f32.mrb[0].mxu0
    %v1650 = vadd.f32 0.0, %v1649
    %v1651 = vpop.f32.mrb[0].mxu0
    %1652 = vmatprep.mubr.f32.mxu0 0.0
    %1653 = vmatmul.mubr.f32.gmra.mrb[0].mxu0 %v1571
    %v1654 = vpop.f32.mrb[0].mxu0
    %v1655 = vadd.f32 0.0, %v1654
    %v1656 = vpop.f32.mrb[0].mxu0
    %1657 = vdwg.mxu0
    %v1658 = vld [vmem:[#allocation14] sm:$0xff]
    %v1659 = vld [vmem:[#allocation14 + $0x8] sm:$0xff]
    %v1660 = vld [vmem:[#allocation14 + $0x10] sm:$0xff]
    %v1661 = vld [vmem:[#allocation14 + $0x18] sm:$0xff]
    %v1663 = vsel %vm223, %v1460, 0
    %v1666 = vsel %vm223, %v1461, 0
    %v1669 = vsel %vm223, %v1462, 0
    %v1672 = vsel %vm223, %v1463, 0
    %1674 = vmatprep.subr.mxu0 0.0
    %1675 = vmatpush1.msra.mxu0 %v1658
    %1676 = vmatprep.subr.mxu0 0.0
    %1677 = vmatpush1.msra.mxu0 %v1659
    %1678 = vmatprep.subr.mxu0 0.0
    %1679 = vmatpush1.msra.mxu0 %v1660
    %1680 = vmatprep.subr.mxu0 0.0
    %1681 = vmatpush1.msra.mxu0 %v1661
    %1682 = vmatprep.subr.mxu0 0.0
    %1683 = vmatpush1.msra.mxu0 0.0
    %1684 = vmatprep.subr.mxu0 0.0
    %1685 = vmatpush1.msra.mxu0 0.0
    %1686 = vmatprep.subr.mxu0 0.0
    %1687 = vmatpush1.msra.mxu0 0.0
    %1688 = vmatprep.subr.mxu0 0.0
    %1689 = vmatpush1.msra.mxu0 0.0
    %1690 = vmatprep.subr.mxu0 0.0
    %1691 = vmatpush1.msra.mxu0 0.0
    %1692 = vmatprep.subr.mxu0 0.0
    %1693 = vmatpush1.msra.mxu0 0.0
    %1694 = vmatprep.subr.mxu0 0.0
    %1695 = vmatpush1.msra.mxu0 0.0
    %1696 = vmatprep.subr.mxu0 0.0
    %1697 = vmatpush1.msra.mxu0 0.0
    %1698 = vmatprep.subr.mxu0 0.0
    %1699 = vmatpush1.msra.mxu0 0.0
    %1700 = vmatprep.subr.mxu0 0.0
    %1701 = vmatpush1.msra.mxu0 0.0
    %1702 = vmatprep.subr.mxu0 0.0
    %1703 = vmatpush1.msra.mxu0 0.0
    %1704 = vmatprep.subr.mxu0 0.0
    %1705 = vmatpush1.msra.mxu0 0.0
    %1706 = vmatprep.subr.mxu0 0.0
    %1707 = vmatpush1.msra.mxu0 0.0
    %1708 = vmatprep.subr.mxu0 0.0
    %1709 = vmatpush1.msra.mxu0 0.0
    %1710 = vmatprep.subr.mxu0 0.0
    %1711 = vmatpush1.msra.mxu0 0.0
    %1712 = vmatprep.subr.mxu0 0.0
    %1713 = vmatpush1.msra.mxu0 0.0
    %1714 = vmatprep.subr.mxu0 0.0
    %1715 = vmatpush1.msra.mxu0 0.0
    %1716 = vmatprep.subr.mxu0 0.0
    %1717 = vmatpush1.msra.mxu0 0.0
    %1718 = vmatprep.subr.mxu0 0.0
    %1719 = vmatpush1.msra.mxu0 0.0
    %1720 = vmatprep.subr.mxu0 0.0
    %1721 = vmatpush1.msra.mxu0 0.0
    %1722 = vmatprep.subr.mxu0 0.0
    %1723 = vmatpush1.msra.mxu0 0.0
    %1724 = vmatprep.subr.mxu0 0.0
    %1725 = vmatpush1.msra.mxu0 0.0
    %1726 = vmatprep.subr.mxu0 0.0
    %1727 = vmatpush1.msra.mxu0 0.0
    %1728 = vmatprep.subr.mxu0 0.0
    %1729 = vmatpush1.msra.mxu0 0.0
    %1730 = vmatprep.subr.mxu0 0.0
    %1731 = vmatpush1.msra.mxu0 0.0
    %1732 = vmatprep.subr.mxu0 0.0
    %1733 = vmatpush1.msra.mxu0 0.0
    %1734 = vmatprep.subr.mxu0 0.0
    %1735 = vmatpush1.msra.mxu0 0.0
    %1736 = vmatprep.subr.mxu0 0.0
    %1737 = vmatpush1.msra.mxu0 0.0
    %1738 = vmatprep.mubr.f32.mxu0 0.0
    %1739 = vmatmul.mubr.f32.gmra.mrb[0].mxu0 %v1663
    %v1740 = vpop.f32.mrb[0].mxu0
    %v1741 = vadd.f32 0.0, %v1740
    %v1742 = vpop.f32.mrb[0].mxu0
    %1743 = vmatprep.mubr.f32.mxu0 0.0
    %1744 = vmatmul.mubr.f32.gmra.mrb[0].mxu0 %v1666
    %v1745 = vpop.f32.mrb[0].mxu0
    %v1746 = vadd.f32 0.0, %v1745
    %v1747 = vpop.f32.mrb[0].mxu0
    %1748 = vmatprep.mubr.f32.mxu0 0.0
    %1749 = vmatmul.mubr.f32.gmra.mrb[0].mxu0 %v1669
    %v1750 = vpop.f32.mrb[0].mxu0
    %v1751 = vadd.f32 0.0, %v1750
    %v1752 = vpop.f32.mrb[0].mxu0
    %1753 = vmatprep.mubr.f32.mxu0 0.0
    %1754 = vmatmul.mubr.f32.gmra.mrb[0].mxu0 %v1672
    %v1755 = vpop.f32.mrb[0].mxu0
    %v1756 = vadd.f32 0.0, %v1755
    %v1757 = vpop.f32.mrb[0].mxu0
    %1758 = vdwg.mxu0
    %v1759 = vld [vmem:[#allocation16] sm:$0xff]
    %v1760 = vld [vmem:[#allocation16 + $0x8] sm:$0xff]
    %v1761 = vld [vmem:[#allocation16 + $0x10] sm:$0xff]
    %v1762 = vld [vmem:[#allocation16 + $0x18] sm:$0xff]
    %v1764 = vsel %vm452, %v1549, 0
    %v1767 = vsel %vm452, %v1640, 0
    %v1770 = vsel %vm452, %v1645, 0
    %1772 = vmatprep.subr.mxu0 0.0
    %1773 = vmatpush1.xpose.msra.mxu0 %v1767
    %1774 = vmatprep.subr.mxu0 0.0
    %1775 = vmatpush1.xpose.msra.mxu0 %v1770
    %1776 = vmatprep.subr.mxu0 0.0
    %1777 = vmatpush1.xpose.msra.mxu0 0.0
    %1778 = vmatprep.subr.mxu0 0.0
    %1779 = vmatpush1.xpose.msra.mxu0 0.0
    %1780 = vmatprep.subr.mxu0 0.0
    %1781 = vmatpush1.xpose.msra.mxu0 0.0
    %1782 = vmatprep.subr.mxu0 0.0
    %1783 = vmatpush1.xpose.msra.mxu0 0.0
    %1784 = vmatprep.subr.mxu0 0.0
    %1785 = vmatpush1.xpose.msra.mxu0 0.0
    %1786 = vmatprep.subr.mxu0 0.0
    %1787 = vmatpush1.xpose.msra.mxu0 0.0
    %1788 = vmatprep.subr.mxu0 0.0
    %1789 = vmatpush1.xpose.msra.mxu0 0.0
    %1790 = vmatprep.subr.mxu0 0.0
    %1791 = vmatpush1.xpose.msra.mxu0 0.0
    %1792 = vmatprep.subr.mxu0 0.0
    %1793 = vmatpush1.xpose.msra.mxu0 0.0
    %1794 = vmatprep.subr.mxu0 0.0
    %1795 = vmatpush1.xpose.msra.mxu0 0.0
    %1796 = vmatprep.subr.mxu0 0.0
    %1797 = vmatpush1.xpose.msra.mxu0 0.0
    %1798 = vmatprep.subr.mxu0 0.0
    %1799 = vmatpush1.xpose.msra.mxu0 0.0
    %1800 = vmatprep.subr.mxu0 0.0
    %1801 = vmatpush1.xpose.msra.mxu0 0.0
    %1802 = vmatprep.subr.mxu0 0.0
    %1803 = vmatpush1.xpose.msra.mxu0 0.0
    %1804 = vmatprep.subr.mxu0 0.0
    %1805 = vmatpush1.xpose.msra.mxu0 0.0
    %1806 = vmatprep.subr.mxu0 0.0
    %1807 = vmatpush1.xpose.msra.mxu0 0.0
    %1808 = vmatprep.subr.mxu0 0.0
    %1809 = vmatpush1.xpose.msra.mxu0 0.0
    %1810 = vmatprep.subr.mxu0 0.0
    %1811 = vmatpush1.xpose.msra.mxu0 0.0
    %1812 = vmatprep.subr.mxu0 0.0
    %1813 = vmatpush1.xpose.msra.mxu0 0.0
    %1814 = vmatprep.subr.mxu0 0.0
    %1815 = vmatpush1.xpose.msra.mxu0 0.0
    %1816 = vmatprep.subr.mxu0 0.0
    %1817 = vmatpush1.xpose.msra.mxu0 0.0
    %1818 = vmatprep.subr.mxu0 0.0
    %1819 = vmatpush1.xpose.msra.mxu0 0.0
    %1820 = vmatprep.subr.mxu0 0.0
    %1821 = vmatpush1.xpose.msra.mxu0 0.0
    %1822 = vmatprep.subr.mxu0 0.0
    %1823 = vmatpush1.xpose.msra.mxu0 0.0
    %1824 = vmatprep.subr.mxu0 0.0
    %1825 = vmatpush1.xpose.msra.mxu0 0.0
    %1826 = vmatprep.subr.mxu0 0.0
    %1827 = vmatpush1.xpose.msra.mxu0 0.0
    %1828 = vmatprep.subr.mxu0 0.0
    %1829 = vmatpush1.xpose.msra.mxu0 0.0
    %1830 = vmatprep.subr.mxu0 0.0
    %1831 = vmatpush1.xpose.msra.mxu0 0.0
    %1832 = vmatprep.subr.mxu0 0.0
    %1833 = vmatpush1.xpose.msra.mxu0 0.0
    %1834 = vmatprep.subr.mxu0 0.0
    %1835 = vmatpush1.xpose.msra.mxu0 0.0
    %1836 = vmatprep.mubr.f32.mxu0 0.0
    %1837 = vmatmul.mubr.f32.gmra.mrb[0].mxu0 %v1764
    %v1838 = vpop.f32.mrb[0].mxu0
    %v1839 = vadd.f32 0.0, %v1838
    %v1840 = vpop.f32.mrb[0].mxu0
    %1841 = vdwg.mxu0
    %vm1842 = vcmask 130048
    %v1843 = vsel %vm1842, %v1839, -inf
    %1844 = vmax.xlane.f32.xlu0 %v1843
    %v1845 = vpop.xlane.xlu0 %1844
    %v1846 = vsub.f32 %v1839, %v1845
    %v1847 = vmul.f32 %v1846, 1.442695
    %v1848 = vpow.pop %v1847
    %v1849 = vsel %vm1842, %v1848, 0.0
    %1850 = vadd.xlane.f32.xlu0 %v1849
    %v1851 = vpop.xlane.xlu0 %1850
    %v1852 = vrcp.pop %v1851
    %v1853 = vmul.f32 %v1848, %v1852
    %v1855 = vsel %vm1842, %v1853, 0
    %1857 = vmatprep.subr.mxu0 0.0
    %1858 = vmatpush1.msra.mxu0 %v1741
    %1859 = vmatprep.subr.mxu0 0.0
    %1860 = vmatpush1.msra.mxu0 %v1746
    %1861 = vmatprep.subr.mxu0 0.0
    %1862 = vmatpush1.msra.mxu0 0.0
    %1863 = vmatprep.subr.mxu0 0.0
    %1864 = vmatpush1.msra.mxu0 0.0
    %1865 = vmatprep.subr.mxu0 0.0
    %1866 = vmatpush1.msra.mxu0 0.0
    %1867 = vmatprep.subr.mxu0 0.0
    %1868 = vmatpush1.msra.mxu0 0.0
    %1869 = vmatprep.subr.mxu0 0.0
    %1870 = vmatpush1.msra.mxu0 0.0
    %1871 = vmatprep.subr.mxu0 0.0
    %1872 = vmatpush1.msra.mxu0 0.0
    %1873 = vmatprep.subr.mxu0 0.0
    %1874 = vmatpush1.msra.mxu0 0.0
    %1875 = vmatprep.subr.mxu0 0.0
    %1876 = vmatpush1.msra.mxu0 0.0
    %1877 = vmatprep.subr.mxu0 0.0
    %1878 = vmatpush1.msra.mxu0 0.0
    %1879 = vmatprep.subr.mxu0 0.0
    %1880 = vmatpush1.msra.mxu0 0.0
    %1881 = vmatprep.subr.mxu0 0.0
    %1882 = vmatpush1.msra.mxu0 0.0
    %1883 = vmatprep.subr.mxu0 0.0
    %1884 = vmatpush1.msra.mxu0 0.0
    %1885 = vmatprep.subr.mxu0 0.0
    %1886 = vmatpush1.msra.mxu0 0.0
    %1887 = vmatprep.subr.mxu0 0.0
    %1888 = vmatpush1.msra.mxu0 0.0
    %1889 = vmatprep.subr.mxu0 0.0
    %1890 = vmatpush1.msra.mxu0 0.0
    %1891 = vmatprep.subr.mxu0 0.0
    %1892 = vmatpush1.msra.mxu0 0.0
    %1893 = vmatprep.subr.mxu0 0.0
    %1894 = vmatpush1.msra.mxu0 0.0
    %1895 = vmatprep.subr.mxu0 0.0
    %1896 = vmatpush1.msra.mxu0 0.0
    %1897 = vmatprep.subr.mxu0 0.0
    %1898 = vmatpush1.msra.mxu0 0.0
    %1899 = vmatprep.subr.mxu0 0.0
    %1900 = vmatpush1.msra.mxu0 0.0
    %1901 = vmatprep.subr.mxu0 0.0
    %1902 = vmatpush1.msra.mxu0 0.0
    %1903 = vmatprep.subr.mxu0 0.0
    %1904 = vmatpush1.msra.mxu0 0.0
    %1905 = vmatprep.subr.mxu0 0.0
    %1906 = vmatpush1.msra.mxu0 0.0
    %1907 = vmatprep.subr.mxu0 0.0
    %1908 = vmatpush1.msra.mxu0 0.0
    %1909 = vmatprep.subr.mxu0 0.0
    %1910 = vmatpush1.msra.mxu0 0.0
    %1911 = vmatprep.subr.mxu0 0.0
    %1912 = vmatpush1.msra.mxu0 0.0
    %1913 = vmatprep.subr.mxu0 0.0
    %1914 = vmatpush1.msra.mxu0 0.0
    %1915 = vmatprep.subr.mxu0 0.0
    %1916 = vmatpush1.msra.mxu0 0.0
    %1917 = vmatprep.subr.mxu0 0.0
    %1918 = vmatpush1.msra.mxu0 0.0
    %1919 = vmatprep.subr.mxu0 0.0
    %1920 = vmatpush1.msra.mxu0 0.0
    %1921 = vmatprep.mubr.f32.mxu0 0.0
    %1922 = vmatmul.mubr.f32.gmra.mrb[0].mxu0 %v1855
    %v1923 = vpop.f32.mrb[0].mxu0
    %v1924 = vadd.f32 0.0, %v1923
    %v1925 = vpop.f32.mrb[0].mxu0
    %1926 = vdwg.mxu0
    %1927 = vrot.lane.b32.xlu0 %v1549, 120
    %v1928 = vpop.permute.xlu0 %1927
    %1929 = vrot.lane.b32.xlu0 %v1640, 120
    %v1930 = vpop.permute.xlu0 %1929
    %1931 = vrot.lane.b32.xlu0 %v1645, 120
    %v1932 = vpop.permute.xlu0 %1931
    %v1933 = vsel %vm452, %v1928, 0
    %v1935 = vsel %vm452, %v1930, 0
    %v1937 = vsel %vm452, %v1932, 0
    %1939 = vmatprep.subr.mxu0 0.0
    %1940 = vmatpush1.xpose.msra.mxu0 %v1935
    %1941 = vmatprep.subr.mxu0 0.0
    %1942 = vmatpush1.xpose.msra.mxu0 %v1937
    %1943 = vmatprep.subr.mxu0 0.0
    %1944 = vmatpush1.xpose.msra.mxu0 0.0
    %1945 = vmatprep.subr.mxu0 0.0
    %1946 = vmatpush1.xpose.msra.mxu0 0.0
    %1947 = vmatprep.subr.mxu0 0.0
    %1948 = vmatpush1.xpose.msra.mxu0 0.0
    %1949 = vmatprep.subr.mxu0 0.0
    %1950 = vmatpush1.xpose.msra.mxu0 0.0
    %1951 = vmatprep.subr.mxu0 0.0
    %1952 = vmatpush1.xpose.msra.mxu0 0.0
    %1953 = vmatprep.subr.mxu0 0.0
    %1954 = vmatpush1.xpose.msra.mxu0 0.0
    %1955 = vmatprep.subr.mxu0 0.0
    %1956 = vmatpush1.xpose.msra.mxu0 0.0
    %1957 = vmatprep.subr.mxu0 0.0
    %1958 = vmatpush1.xpose.msra.mxu0 0.0
    %1959 = vmatprep.subr.mxu0 0.0
    %1960 = vmatpush1.xpose.msra.mxu0 0.0
    %1961 = vmatprep.subr.mxu0 0.0
    %1962 = vmatpush1.xpose.msra.mxu0 0.0
    %1963 = vmatprep.subr.mxu0 0.0
    %1964 = vmatpush1.xpose.msra.mxu0 0.0
    %1965 = vmatprep.subr.mxu0 0.0
    %1966 = vmatpush1.xpose.msra.mxu0 0.0
    %1967 = vmatprep.subr.mxu0 0.0
    %1968 = vmatpush1.xpose.msra.mxu0 0.0
    %1969 = vmatprep.subr.mxu0 0.0
    %1970 = vmatpush1.xpose.msra.mxu0 0.0
    %1971 = vmatprep.subr.mxu0 0.0
    %1972 = vmatpush1.xpose.msra.mxu0 0.0
    %1973 = vmatprep.subr.mxu0 0.0
    %1974 = vmatpush1.xpose.msra.mxu0 0.0
    %1975 = vmatprep.subr.mxu0 0.0
    %1976 = vmatpush1.xpose.msra.mxu0 0.0
    %1977 = vmatprep.subr.mxu0 0.0
    %1978 = vmatpush1.xpose.msra.mxu0 0.0
    %1979 = vmatprep.subr.mxu0 0.0
    %1980 = vmatpush1.xpose.msra.mxu0 0.0
    %1981 = vmatprep.subr.mxu0 0.0
    %1982 = vmatpush1.xpose.msra.mxu0 0.0
    %1983 = vmatprep.subr.mxu0 0.0
    %1984 = vmatpush1.xpose.msra.mxu0 0.0
    %1985 = vmatprep.subr.mxu0 0.0
    %1986 = vmatpush1.xpose.msra.mxu0 0.0
    %1987 = vmatprep.subr.mxu0 0.0
    %1988 = vmatpush1.xpose.msra.mxu0 0.0
    %1989 = vmatprep.subr.mxu0 0.0
    %1990 = vmatpush1.xpose.msra.mxu0 0.0
    %1991 = vmatprep.subr.mxu0 0.0
    %1992 = vmatpush1.xpose.msra.mxu0 0.0
    %1993 = vmatprep.subr.mxu0 0.0
    %1994 = vmatpush1.xpose.msra.mxu0 0.0
    %1995 = vmatprep.subr.mxu0 0.0
    %1996 = vmatpush1.xpose.msra.mxu0 0.0
    %1997 = vmatprep.subr.mxu0 0.0
    %1998 = vmatpush1.xpose.msra.mxu0 0.0
    %1999 = vmatprep.subr.mxu0 0.0
    %2000 = vmatpush1.xpose.msra.mxu0 0.0
    %2001 = vmatprep.subr.mxu0 0.0
    %2002 = vmatpush1.xpose.msra.mxu0 0.0
    %2003 = vmatprep.mubr.f32.mxu0 0.0
    %2004 = vmatmul.mubr.f32.gmra.mrb[0].mxu0 %v1933
    %v2005 = vpop.f32.mrb[0].mxu0
    %v2006 = vadd.f32 0.0, %v2005
    %v2007 = vpop.f32.mrb[0].mxu0
    %2008 = vdwg.mxu0
    %v2009 = vsel %vm1842, %v2006, -inf
    %2010 = vmax.xlane.f32.xlu0 %v2009
    %v2011 = vpop.xlane.xlu0 %2010
    %v2012 = vsub.f32 %v2006, %v2011
    %v2013 = vmul.f32 %v2012, 1.442695
    %v2014 = vpow.pop %v2013
    %v2015 = vsel %vm1842, %v2014, 0.0
    %2016 = vadd.xlane.f32.xlu0 %v2015
    %v2017 = vpop.xlane.xlu0 %2016
    %v2018 = vrcp.pop %v2017
    %v2019 = vmul.f32 %v2014, %v2018
    %2022 = vrot.lane.b32.xlu0 %v1741, 120
    %v2023 = vpop.permute.xlu0 %2022
    %2024 = vrot.lane.b32.xlu0 %v1746, 120
    %v2025 = vpop.permute.xlu0 %2024
    %v2029 = vsel %vm1842, %v2019, 0
    %2031 = vmatprep.subr.mxu0 0.0
    %2032 = vmatpush1.msra.mxu0 %v2023
    %2033 = vmatprep.subr.mxu0 0.0
    %2034 = vmatpush1.msra.mxu0 %v2025
    %2035 = vmatprep.subr.mxu0 0.0
    %2036 = vmatpush1.msra.mxu0 0.0
    %2037 = vmatprep.subr.mxu0 0.0
    %2038 = vmatpush1.msra.mxu0 0.0
    %2039 = vmatprep.subr.mxu0 0.0
    %2040 = vmatpush1.msra.mxu0 0.0
    %2041 = vmatprep.subr.mxu0 0.0
    %2042 = vmatpush1.msra.mxu0 0.0
    %2043 = vmatprep.subr.mxu0 0.0
    %2044 = vmatpush1.msra.mxu0 0.0
    %2045 = vmatprep.subr.mxu0 0.0
    %2046 = vmatpush1.msra.mxu0 0.0
    %2047 = vmatprep.subr.mxu0 0.0
    %2048 = vmatpush1.msra.mxu0 0.0
    %2049 = vmatprep.subr.mxu0 0.0
    %2050 = vmatpush1.msra.mxu0 0.0
    %2051 = vmatprep.subr.mxu0 0.0
    %2052 = vmatpush1.msra.mxu0 0.0
    %2053 = vmatprep.subr.mxu0 0.0
    %2054 = vmatpush1.msra.mxu0 0.0
    %2055 = vmatprep.subr.mxu0 0.0
    %2056 = vmatpush1.msra.mxu0 0.0
    %2057 = vmatprep.subr.mxu0 0.0
    %2058 = vmatpush1.msra.mxu0 0.0
    %2059 = vmatprep.subr.mxu0 0.0
    %2060 = vmatpush1.msra.mxu0 0.0
    %2061 = vmatprep.subr.mxu0 0.0
    %2062 = vmatpush1.msra.mxu0 0.0
    %2063 = vmatprep.subr.mxu0 0.0
    %2064 = vmatpush1.msra.mxu0 0.0
    %2065 = vmatprep.subr.mxu0 0.0
    %2066 = vmatpush1.msra.mxu0 0.0
    %2067 = vmatprep.subr.mxu0 0.0
    %2068 = vmatpush1.msra.mxu0 0.0
    %2069 = vmatprep.subr.mxu0 0.0
    %2070 = vmatpush1.msra.mxu0 0.0
    %2071 = vmatprep.subr.mxu0 0.0
    %2072 = vmatpush1.msra.mxu0 0.0
    %2073 = vmatprep.subr.mxu0 0.0
    %2074 = vmatpush1.msra.mxu0 0.0
    %2075 = vmatprep.subr.mxu0 0.0
    %2076 = vmatpush1.msra.mxu0 0.0
    %2077 = vmatprep.subr.mxu0 0.0
    %2078 = vmatpush1.msra.mxu0 0.0
    %2079 = vmatprep.subr.mxu0 0.0
    %2080 = vmatpush1.msra.mxu0 0.0
    %2081 = vmatprep.subr.mxu0 0.0
    %2082 = vmatpush1.msra.mxu0 0.0
    %2083 = vmatprep.subr.mxu0 0.0
    %2084 = vmatpush1.msra.mxu0 0.0
    %2085 = vmatprep.subr.mxu0 0.0
    %2086 = vmatpush1.msra.mxu0 0.0
    %2087 = vmatprep.subr.mxu0 0.0
    %2088 = vmatpush1.msra.mxu0 0.0
    %2089 = vmatprep.subr.mxu0 0.0
    %2090 = vmatpush1.msra.mxu0 0.0
    %2091 = vmatprep.subr.mxu0 0.0
    %2092 = vmatpush1.msra.mxu0 0.0
    %2093 = vmatprep.subr.mxu0 0.0
    %2094 = vmatpush1.msra.mxu0 0.0
    %2095 = vmatprep.mubr.f32.mxu0 0.0
    %2096 = vmatmul.mubr.f32.gmra.mrb[0].mxu0 %v2029
    %v2097 = vpop.f32.mrb[0].mxu0
    %v2098 = vadd.f32 0.0, %v2097
    %v2099 = vpop.f32.mrb[0].mxu0
    %2100 = vdwg.mxu0
    %v2102 = vsel %vm452, %v2098, 0
    %2104 = vmatprep.subr.mxu0 0.0
    %2105 = vmatpush1.msra.mxu0 %v1760
    %2106 = vmatprep.subr.mxu0 0.0
    %2107 = vmatpush1.msra.mxu0 0.0
    %2108 = vmatprep.subr.mxu0 0.0
    %2109 = vmatpush1.msra.mxu0 0.0
    %2110 = vmatprep.subr.mxu0 0.0
    %2111 = vmatpush1.msra.mxu0 0.0
    %2112 = vmatprep.subr.mxu0 0.0
    %2113 = vmatpush1.msra.mxu0 0.0
    %2114 = vmatprep.subr.mxu0 0.0
    %2115 = vmatpush1.msra.mxu0 0.0
    %2116 = vmatprep.subr.mxu0 0.0
    %2117 = vmatpush1.msra.mxu0 0.0
    %2118 = vmatprep.subr.mxu0 0.0
    %2119 = vmatpush1.msra.mxu0 0.0
    %2120 = vmatprep.subr.mxu0 0.0
    %2121 = vmatpush1.msra.mxu0 0.0
    %2122 = vmatprep.subr.mxu0 0.0
    %2123 = vmatpush1.msra.mxu0 0.0
    %2124 = vmatprep.subr.mxu0 0.0
    %2125 = vmatpush1.msra.mxu0 0.0
    %2126 = vmatprep.subr.mxu0 0.0
    %2127 = vmatpush1.msra.mxu0 0.0
    %2128 = vmatprep.subr.mxu0 0.0
    %2129 = vmatpush1.msra.mxu0 0.0
    %2130 = vmatprep.subr.mxu0 0.0
    %2131 = vmatpush1.msra.mxu0 0.0
    %2132 = vmatprep.subr.mxu0 0.0
    %2133 = vmatpush1.msra.mxu0 0.0
    %2134 = vmatprep.subr.mxu0 0.0
    %2135 = vmatpush1.msra.mxu0 0.0
    %2136 = vmatprep.subr.mxu0 0.0
    %2137 = vmatpush1.msra.mxu0 0.0
    %2138 = vmatprep.subr.mxu0 0.0
    %2139 = vmatpush1.msra.mxu0 0.0
    %2140 = vmatprep.subr.mxu0 0.0
    %2141 = vmatpush1.msra.mxu0 0.0
    %2142 = vmatprep.subr.mxu0 0.0
    %2143 = vmatpush1.msra.mxu0 0.0
    %2144 = vmatprep.subr.mxu0 0.0
    %2145 = vmatpush1.msra.mxu0 0.0
    %2146 = vmatprep.subr.mxu0 0.0
    %2147 = vmatpush1.msra.mxu0 0.0
    %2148 = vmatprep.subr.mxu0 0.0
    %2149 = vmatpush1.msra.mxu0 0.0
    %2150 = vmatprep.subr.mxu0 0.0
    %2151 = vmatpush1.msra.mxu0 0.0
    %2152 = vmatprep.subr.mxu0 0.0
    %2153 = vmatpush1.msra.mxu0 0.0
    %2154 = vmatprep.subr.mxu0 0.0
    %2155 = vmatpush1.msra.mxu0 0.0
    %2156 = vmatprep.subr.mxu0 0.0
    %2157 = vmatpush1.msra.mxu0 0.0
    %2158 = vmatprep.subr.mxu0 0.0
    %2159 = vmatpush1.msra.mxu0 0.0
    %2160 = vmatprep.subr.mxu0 0.0
    %2161 = vmatpush1.msra.mxu0 0.0
    %2162 = vmatprep.subr.mxu0 0.0
    %2163 = vmatpush1.msra.mxu0 0.0
    %2164 = vmatprep.subr.mxu0 0.0
    %2165 = vmatpush1.msra.mxu0 0.0
    %2166 = vmatprep.subr.mxu0 0.0
    %2167 = vmatpush1.msra.mxu0 0.0
    %2168 = vmatprep.mubr.f32.mxu0 0.0
    %2169 = vmatmul.mubr.f32.gmra.mrb[0].mxu0 %v2102
    %v2170 = vpop.f32.mrb[0].mxu0
    %v2171 = vadd.f32 0.0, %v2170
    %v2172 = vpop.f32.mrb[0].mxu0
    %2173 = vdwg.mxu0
    %v2175 = vsel %vm452, %v1924, 0
    %2177 = vmatprep.subr.mxu0 0.0
    %2178 = vmatpush1.msra.mxu0 %v1759
    %2179 = vmatprep.subr.mxu0 0.0
    %2180 = vmatpush1.msra.mxu0 0.0
    %2181 = vmatprep.subr.mxu0 0.0
    %2182 = vmatpush1.msra.mxu0 0.0
    %2183 = vmatprep.subr.mxu0 0.0
    %2184 = vmatpush1.msra.mxu0 0.0
    %2185 = vmatprep.subr.mxu0 0.0
    %2186 = vmatpush1.msra.mxu0 0.0
    %2187 = vmatprep.subr.mxu0 0.0
    %2188 = vmatpush1.msra.mxu0 0.0
    %2189 = vmatprep.subr.mxu0 0.0
    %2190 = vmatpush1.msra.mxu0 0.0
    %2191 = vmatprep.subr.mxu0 0.0
    %2192 = vmatpush1.msra.mxu0 0.0
    %2193 = vmatprep.subr.mxu0 0.0
    %2194 = vmatpush1.msra.mxu0 0.0
    %2195 = vmatprep.subr.mxu0 0.0
    %2196 = vmatpush1.msra.mxu0 0.0
    %2197 = vmatprep.subr.mxu0 0.0
    %2198 = vmatpush1.msra.mxu0 0.0
    %2199 = vmatprep.subr.mxu0 0.0
    %2200 = vmatpush1.msra.mxu0 0.0
    %2201 = vmatprep.subr.mxu0 0.0
    %2202 = vmatpush1.msra.mxu0 0.0
    %2203 = vmatprep.subr.mxu0 0.0
    %2204 = vmatpush1.msra.mxu0 0.0
    %2205 = vmatprep.subr.mxu0 0.0
    %2206 = vmatpush1.msra.mxu0 0.0
    %2207 = vmatprep.subr.mxu0 0.0
    %2208 = vmatpush1.msra.mxu0 0.0
    %2209 = vmatprep.subr.mxu0 0.0
    %2210 = vmatpush1.msra.mxu0 0.0
    %2211 = vmatprep.subr.mxu0 0.0
    %2212 = vmatpush1.msra.mxu0 0.0
    %2213 = vmatprep.subr.mxu0 0.0
    %2214 = vmatpush1.msra.mxu0 0.0
    %2215 = vmatprep.subr.mxu0 0.0
    %2216 = vmatpush1.msra.mxu0 0.0
    %2217 = vmatprep.subr.mxu0 0.0
    %2218 = vmatpush1.msra.mxu0 0.0
    %2219 = vmatprep.subr.mxu0 0.0
    %2220 = vmatpush1.msra.mxu0 0.0
    %2221 = vmatprep.subr.mxu0 0.0
    %2222 = vmatpush1.msra.mxu0 0.0
    %2223 = vmatprep.subr.mxu0 0.0
    %2224 = vmatpush1.msra.mxu0 0.0
    %2225 = vmatprep.subr.mxu0 0.0
    %2226 = vmatpush1.msra.mxu0 0.0
    %2227 = vmatprep.subr.mxu0 0.0
    %2228 = vmatpush1.msra.mxu0 0.0
    %2229 = vmatprep.subr.mxu0 0.0
    %2230 = vmatpush1.msra.mxu0 0.0
    %2231 = vmatprep.subr.mxu0 0.0
    %2232 = vmatpush1.msra.mxu0 0.0
    %2233 = vmatprep.subr.mxu0 0.0
    %2234 = vmatpush1.msra.mxu0 0.0
    %2235 = vmatprep.subr.mxu0 0.0
    %2236 = vmatpush1.msra.mxu0 0.0
    %2237 = vmatprep.subr.mxu0 0.0
    %2238 = vmatpush1.msra.mxu0 0.0
    %2239 = vmatprep.subr.mxu0 0.0
    %2240 = vmatpush1.msra.mxu0 0.0
    %2241 = vmatprep.mubr.f32.mxu0 0.0
    %2242 = vmatmul.mubr.f32.gmra.mrb[0].mxu0 %v2175
    %v2243 = vpop.f32.mrb[0].mxu0
    %v2244 = vadd.f32 %v2171, %v2243
    %v2245 = vpop.f32.mrb[0].mxu0
    %2246 = vdwg.mxu0
    %2247 = vrot.lane.b32.xlu0 %v1549, 112
    %v2248 = vpop.permute.xlu0 %2247
    %2249 = vrot.lane.b32.xlu0 %v1640, 112
    %v2250 = vpop.permute.xlu0 %2249
    %2251 = vrot.lane.b32.xlu0 %v1645, 112
    %v2252 = vpop.permute.xlu0 %2251
    %v2253 = vsel %vm452, %v2248, 0
    %v2255 = vsel %vm452, %v2250, 0
    %v2257 = vsel %vm452, %v2252, 0
    %2259 = vmatprep.subr.mxu0 0.0
    %2260 = vmatpush1.xpose.msra.mxu0 %v2255
    %2261 = vmatprep.subr.mxu0 0.0
    %2262 = vmatpush1.xpose.msra.mxu0 %v2257
    %2263 = vmatprep.subr.mxu0 0.0
    %2264 = vmatpush1.xpose.msra.mxu0 0.0
    %2265 = vmatprep.subr.mxu0 0.0
    %2266 = vmatpush1.xpose.msra.mxu0 0.0
    %2267 = vmatprep.subr.mxu0 0.0
    %2268 = vmatpush1.xpose.msra.mxu0 0.0
    %2269 = vmatprep.subr.mxu0 0.0
    %2270 = vmatpush1.xpose.msra.mxu0 0.0
    %2271 = vmatprep.subr.mxu0 0.0
    %2272 = vmatpush1.xpose.msra.mxu0 0.0
    %2273 = vmatprep.subr.mxu0 0.0
    %2274 = vmatpush1.xpose.msra.mxu0 0.0
    %2275 = vmatprep.subr.mxu0 0.0
    %2276 = vmatpush1.xpose.msra.mxu0 0.0
    %2277 = vmatprep.subr.mxu0 0.0
    %2278 = vmatpush1.xpose.msra.mxu0 0.0
    %2279 = vmatprep.subr.mxu0 0.0
    %2280 = vmatpush1.xpose.msra.mxu0 0.0
    %2281 = vmatprep.subr.mxu0 0.0
    %2282 = vmatpush1.xpose.msra.mxu0 0.0
    %2283 = vmatprep.subr.mxu0 0.0
    %2284 = vmatpush1.xpose.msra.mxu0 0.0
    %2285 = vmatprep.subr.mxu0 0.0
    %2286 = vmatpush1.xpose.msra.mxu0 0.0
    %2287 = vmatprep.subr.mxu0 0.0
    %2288 = vmatpush1.xpose.msra.mxu0 0.0
    %2289 = vmatprep.subr.mxu0 0.0
    %2290 = vmatpush1.xpose.msra.mxu0 0.0
    %2291 = vmatprep.subr.mxu0 0.0
    %2292 = vmatpush1.xpose.msra.mxu0 0.0
    %2293 = vmatprep.subr.mxu0 0.0
    %2294 = vmatpush1.xpose.msra.mxu0 0.0
    %2295 = vmatprep.subr.mxu0 0.0
    %2296 = vmatpush1.xpose.msra.mxu0 0.0
    %2297 = vmatprep.subr.mxu0 0.0
    %2298 = vmatpush1.xpose.msra.mxu0 0.0
    %2299 = vmatprep.subr.mxu0 0.0
    %2300 = vmatpush1.xpose.msra.mxu0 0.0
    %2301 = vmatprep.subr.mxu0 0.0
    %2302 = vmatpush1.xpose.msra.mxu0 0.0
    %2303 = vmatprep.subr.mxu0 0.0
    %2304 = vmatpush1.xpose.msra.mxu0 0.0
    %2305 = vmatprep.subr.mxu0 0.0
    %2306 = vmatpush1.xpose.msra.mxu0 0.0
    %2307 = vmatprep.subr.mxu0 0.0
    %2308 = vmatpush1.xpose.msra.mxu0 0.0
    %2309 = vmatprep.subr.mxu0 0.0
    %2310 = vmatpush1.xpose.msra.mxu0 0.0
    %2311 = vmatprep.subr.mxu0 0.0
    %2312 = vmatpush1.xpose.msra.mxu0 0.0
    %2313 = vmatprep.subr.mxu0 0.0
    %2314 = vmatpush1.xpose.msra.mxu0 0.0
    %2315 = vmatprep.subr.mxu0 0.0
    %2316 = vmatpush1.xpose.msra.mxu0 0.0
    %2317 = vmatprep.subr.mxu0 0.0
    %2318 = vmatpush1.xpose.msra.mxu0 0.0
    %2319 = vmatprep.subr.mxu0 0.0
    %2320 = vmatpush1.xpose.msra.mxu0 0.0
    %2321 = vmatprep.subr.mxu0 0.0
    %2322 = vmatpush1.xpose.msra.mxu0 0.0
    %2323 = vmatprep.mubr.f32.mxu0 0.0
    %2324 = vmatmul.mubr.f32.gmra.mrb[0].mxu0 %v2253
    %v2325 = vpop.f32.mrb[0].mxu0
    %v2326 = vadd.f32 0.0, %v2325
    %v2327 = vpop.f32.mrb[0].mxu0
    %2328 = vdwg.mxu0
    %v2329 = vsel %vm1842, %v2326, -inf
    %2330 = vmax.xlane.f32.xlu0 %v2329
    %v2331 = vpop.xlane.xlu0 %2330
    %v2332 = vsub.f32 %v2326, %v2331
    %v2333 = vmul.f32 %v2332, 1.442695
    %v2334 = vpow.pop %v2333
    %v2335 = vsel %vm1842, %v2334, 0.0
    %2336 = vadd.xlane.f32.xlu0 %v2335
    %v2337 = vpop.xlane.xlu0 %2336
    %v2338 = vrcp.pop %v2337
    %v2339 = vmul.f32 %v2334, %v2338
    %2340 = vrot.lane.b32.xlu0 %v1741, 112
    %v2341 = vpop.permute.xlu0 %2340
    %2342 = vrot.lane.b32.xlu0 %v1746, 112
    %v2343 = vpop.permute.xlu0 %2342
    %v2347 = vsel %vm1842, %v2339, 0
    %2349 = vmatprep.subr.mxu0 0.0
    %2350 = vmatpush1.msra.mxu0 %v2341
    %2351 = vmatprep.subr.mxu0 0.0
    %2352 = vmatpush1.msra.mxu0 %v2343
    %2353 = vmatprep.subr.mxu0 0.0
    %2354 = vmatpush1.msra.mxu0 0.0
    %2355 = vmatprep.subr.mxu0 0.0
    %2356 = vmatpush1.msra.mxu0 0.0
    %2357 = vmatprep.subr.mxu0 0.0
    %2358 = vmatpush1.msra.mxu0 0.0
    %2359 = vmatprep.subr.mxu0 0.0
    %2360 = vmatpush1.msra.mxu0 0.0
    %2361 = vmatprep.subr.mxu0 0.0
    %2362 = vmatpush1.msra.mxu0 0.0
    %2363 = vmatprep.subr.mxu0 0.0
    %2364 = vmatpush1.msra.mxu0 0.0
    %2365 = vmatprep.subr.mxu0 0.0
    %2366 = vmatpush1.msra.mxu0 0.0
    %2367 = vmatprep.subr.mxu0 0.0
    %2368 = vmatpush1.msra.mxu0 0.0
    %2369 = vmatprep.subr.mxu0 0.0
    %2370 = vmatpush1.msra.mxu0 0.0
    %2371 = vmatprep.subr.mxu0 0.0
    %2372 = vmatpush1.msra.mxu0 0.0
    %2373 = vmatprep.subr.mxu0 0.0
    %2374 = vmatpush1.msra.mxu0 0.0
    %2375 = vmatprep.subr.mxu0 0.0
    %2376 = vmatpush1.msra.mxu0 0.0
    %2377 = vmatprep.subr.mxu0 0.0
    %2378 = vmatpush1.msra.mxu0 0.0
    %2379 = vmatprep.subr.mxu0 0.0
    %2380 = vmatpush1.msra.mxu0 0.0
    %2381 = vmatprep.subr.mxu0 0.0
    %2382 = vmatpush1.msra.mxu0 0.0
    %2383 = vmatprep.subr.mxu0 0.0
    %2384 = vmatpush1.msra.mxu0 0.0
    %2385 = vmatprep.subr.mxu0 0.0
    %2386 = vmatpush1.msra.mxu0 0.0
    %2387 = vmatprep.subr.mxu0 0.0
    %2388 = vmatpush1.msra.mxu0 0.0
    %2389 = vmatprep.subr.mxu0 0.0
    %2390 = vmatpush1.msra.mxu0 0.0
    %2391 = vmatprep.subr.mxu0 0.0
    %2392 = vmatpush1.msra.mxu0 0.0
    %2393 = vmatprep.subr.mxu0 0.0
    %2394 = vmatpush1.msra.mxu0 0.0
    %2395 = vmatprep.subr.mxu0 0.0
    %2396 = vmatpush1.msra.mxu0 0.0
    %2397 = vmatprep.subr.mxu0 0.0
    %2398 = vmatpush1.msra.mxu0 0.0
    %2399 = vmatprep.subr.mxu0 0.0
    %2400 = vmatpush1.msra.mxu0 0.0
    %2401 = vmatprep.subr.mxu0 0.0
    %2402 = vmatpush1.msra.mxu0 0.0
    %2403 = vmatprep.subr.mxu0 0.0
    %2404 = vmatpush1.msra.mxu0 0.0
    %2405 = vmatprep.subr.mxu0 0.0
    %2406 = vmatpush1.msra.mxu0 0.0
    %2407 = vmatprep.subr.mxu0 0.0
    %2408 = vmatpush1.msra.mxu0 0.0
    %2409 = vmatprep.subr.mxu0 0.0
    %2410 = vmatpush1.msra.mxu0 0.0
    %2411 = vmatprep.subr.mxu0 0.0
    %2412 = vmatpush1.msra.mxu0 0.0
    %2413 = vmatprep.mubr.f32.mxu0 0.0
    %2414 = vmatmul.mubr.f32.gmra.mrb[0].mxu0 %v2347
    %v2415 = vpop.f32.mrb[0].mxu0
    %v2416 = vadd.f32 0.0, %v2415
    %v2417 = vpop.f32.mrb[0].mxu0
    %2418 = vdwg.mxu0
    %v2420 = vsel %vm452, %v2416, 0
    %2422 = vmatprep.subr.mxu0 0.0
    %2423 = vmatpush1.msra.mxu0 %v1761
    %2424 = vmatprep.subr.mxu0 0.0
    %2425 = vmatpush1.msra.mxu0 0.0
    %2426 = vmatprep.subr.mxu0 0.0
    %2427 = vmatpush1.msra.mxu0 0.0
    %2428 = vmatprep.subr.mxu0 0.0
    %2429 = vmatpush1.msra.mxu0 0.0
    %2430 = vmatprep.subr.mxu0 0.0
    %2431 = vmatpush1.msra.mxu0 0.0
    %2432 = vmatprep.subr.mxu0 0.0
    %2433 = vmatpush1.msra.mxu0 0.0
    %2434 = vmatprep.subr.mxu0 0.0
    %2435 = vmatpush1.msra.mxu0 0.0
    %2436 = vmatprep.subr.mxu0 0.0
    %2437 = vmatpush1.msra.mxu0 0.0
    %2438 = vmatprep.subr.mxu0 0.0
    %2439 = vmatpush1.msra.mxu0 0.0
    %2440 = vmatprep.subr.mxu0 0.0
    %2441 = vmatpush1.msra.mxu0 0.0
    %2442 = vmatprep.subr.mxu0 0.0
    %2443 = vmatpush1.msra.mxu0 0.0
    %2444 = vmatprep.subr.mxu0 0.0
    %2445 = vmatpush1.msra.mxu0 0.0
    %2446 = vmatprep.subr.mxu0 0.0
    %2447 = vmatpush1.msra.mxu0 0.0
    %2448 = vmatprep.subr.mxu0 0.0
    %2449 = vmatpush1.msra.mxu0 0.0
    %2450 = vmatprep.subr.mxu0 0.0
    %2451 = vmatpush1.msra.mxu0 0.0
    %2452 = vmatprep.subr.mxu0 0.0
    %2453 = vmatpush1.msra.mxu0 0.0
    %2454 = vmatprep.subr.mxu0 0.0
    %2455 = vmatpush1.msra.mxu0 0.0
    %2456 = vmatprep.subr.mxu0 0.0
    %2457 = vmatpush1.msra.mxu0 0.0
    %2458 = vmatprep.subr.mxu0 0.0
    %2459 = vmatpush1.msra.mxu0 0.0
    %2460 = vmatprep.subr.mxu0 0.0
    %2461 = vmatpush1.msra.mxu0 0.0
    %2462 = vmatprep.subr.mxu0 0.0
    %2463 = vmatpush1.msra.mxu0 0.0
    %2464 = vmatprep.subr.mxu0 0.0
    %2465 = vmatpush1.msra.mxu0 0.0
    %2466 = vmatprep.subr.mxu0 0.0
    %2467 = vmatpush1.msra.mxu0 0.0
    %2468 = vmatprep.subr.mxu0 0.0
    %2469 = vmatpush1.msra.mxu0 0.0
    %2470 = vmatprep.subr.mxu0 0.0
    %2471 = vmatpush1.msra.mxu0 0.0
    %2472 = vmatprep.subr.mxu0 0.0
    %2473 = vmatpush1.msra.mxu0 0.0
    %2474 = vmatprep.subr.mxu0 0.0
    %2475 = vmatpush1.msra.mxu0 0.0
    %2476 = vmatprep.subr.mxu0 0.0
    %2477 = vmatpush1.msra.mxu0 0.0
    %2478 = vmatprep.subr.mxu0 0.0
    %2479 = vmatpush1.msra.mxu0 0.0
    %2480 = vmatprep.subr.mxu0 0.0
    %2481 = vmatpush1.msra.mxu0 0.0
    %2482 = vmatprep.subr.mxu0 0.0
    %2483 = vmatpush1.msra.mxu0 0.0
    %2484 = vmatprep.subr.mxu0 0.0
    %2485 = vmatpush1.msra.mxu0 0.0
    %2486 = vmatprep.mubr.f32.mxu0 0.0
    %2487 = vmatmul.mubr.f32.gmra.mrb[0].mxu0 %v2420
    %v2488 = vpop.f32.mrb[0].mxu0
    %v2489 = vadd.f32 0.0, %v2488
    %v2490 = vpop.f32.mrb[0].mxu0
    %2491 = vdwg.mxu0
    %v2492 = vadd.f32 %v2244, %v2489
    %2493 = vrot.lane.b32.xlu0 %v1549, 104
    %v2494 = vpop.permute.xlu0 %2493
    %2495 = vrot.lane.b32.xlu0 %v1640, 104
    %v2496 = vpop.permute.xlu0 %2495
    %2497 = vrot.lane.b32.xlu0 %v1645, 104
    %v2498 = vpop.permute.xlu0 %2497
    %v2499 = vsel %vm452, %v2494, 0
    %v2501 = vsel %vm452, %v2496, 0
    %v2503 = vsel %vm452, %v2498, 0
    %2505 = vmatprep.subr.mxu0 0.0
    %2506 = vmatpush1.xpose.msra.mxu0 %v2501
    %2507 = vmatprep.subr.mxu0 0.0
    %2508 = vmatpush1.xpose.msra.mxu0 %v2503
    %2509 = vmatprep.subr.mxu0 0.0
    %2510 = vmatpush1.xpose.msra.mxu0 0.0
    %2511 = vmatprep.subr.mxu0 0.0
    %2512 = vmatpush1.xpose.msra.mxu0 0.0
    %2513 = vmatprep.subr.mxu0 0.0
    %2514 = vmatpush1.xpose.msra.mxu0 0.0
    %2515 = vmatprep.subr.mxu0 0.0
    %2516 = vmatpush1.xpose.msra.mxu0 0.0
    %2517 = vmatprep.subr.mxu0 0.0
    %2518 = vmatpush1.xpose.msra.mxu0 0.0
    %2519 = vmatprep.subr.mxu0 0.0
    %2520 = vmatpush1.xpose.msra.mxu0 0.0
    %2521 = vmatprep.subr.mxu0 0.0
    %2522 = vmatpush1.xpose.msra.mxu0 0.0
    %2523 = vmatprep.subr.mxu0 0.0
    %2524 = vmatpush1.xpose.msra.mxu0 0.0
    %2525 = vmatprep.subr.mxu0 0.0
    %2526 = vmatpush1.xpose.msra.mxu0 0.0
    %2527 = vmatprep.subr.mxu0 0.0
    %2528 = vmatpush1.xpose.msra.mxu0 0.0
    %2529 = vmatprep.subr.mxu0 0.0
    %2530 = vmatpush1.xpose.msra.mxu0 0.0
    %2531 = vmatprep.subr.mxu0 0.0
    %2532 = vmatpush1.xpose.msra.mxu0 0.0
    %2533 = vmatprep.subr.mxu0 0.0
    %2534 = vmatpush1.xpose.msra.mxu0 0.0
    %2535 = vmatprep.subr.mxu0 0.0
    %2536 = vmatpush1.xpose.msra.mxu0 0.0
    %2537 = vmatprep.subr.mxu0 0.0
    %2538 = vmatpush1.xpose.msra.mxu0 0.0
    %2539 = vmatprep.subr.mxu0 0.0
    %2540 = vmatpush1.xpose.msra.mxu0 0.0
    %2541 = vmatprep.subr.mxu0 0.0
    %2542 = vmatpush1.xpose.msra.mxu0 0.0
    %2543 = vmatprep.subr.mxu0 0.0
    %2544 = vmatpush1.xpose.msra.mxu0 0.0
    %2545 = vmatprep.subr.mxu0 0.0
    %2546 = vmatpush1.xpose.msra.mxu0 0.0
    %2547 = vmatprep.subr.mxu0 0.0
    %2548 = vmatpush1.xpose.msra.mxu0 0.0
    %2549 = vmatprep.subr.mxu0 0.0
    %2550 = vmatpush1.xpose.msra.mxu0 0.0
    %2551 = vmatprep.subr.mxu0 0.0
    %2552 = vmatpush1.xpose.msra.mxu0 0.0
    %2553 = vmatprep.subr.mxu0 0.0
    %2554 = vmatpush1.xpose.msra.mxu0 0.0
    %2555 = vmatprep.subr.mxu0 0.0
    %2556 = vmatpush1.xpose.msra.mxu0 0.0
    %2557 = vmatprep.subr.mxu0 0.0
    %2558 = vmatpush1.xpose.msra.mxu0 0.0
    %2559 = vmatprep.subr.mxu0 0.0
    %2560 = vmatpush1.xpose.msra.mxu0 0.0
    %2561 = vmatprep.subr.mxu0 0.0
    %2562 = vmatpush1.xpose.msra.mxu0 0.0
    %2563 = vmatprep.subr.mxu0 0.0
    %2564 = vmatpush1.xpose.msra.mxu0 0.0
    %2565 = vmatprep.subr.mxu0 0.0
    %2566 = vmatpush1.xpose.msra.mxu0 0.0
    %2567 = vmatprep.subr.mxu0 0.0
    %2568 = vmatpush1.xpose.msra.mxu0 0.0
    %2569 = vmatprep.mubr.f32.mxu0 0.0
    %2570 = vmatmul.mubr.f32.gmra.mrb[0].mxu0 %v2499
    %v2571 = vpop.f32.mrb[0].mxu0
    %v2572 = vadd.f32 0.0, %v2571
    %v2573 = vpop.f32.mrb[0].mxu0
    %2574 = vdwg.mxu0
    %v2575 = vsel %vm1842, %v2572, -inf
    %2576 = vmax.xlane.f32.xlu0 %v2575
    %v2577 = vpop.xlane.xlu0 %2576
    %v2578 = vsub.f32 %v2572, %v2577
    %v2579 = vmul.f32 %v2578, 1.442695
    %v2580 = vpow.pop %v2579
    %v2581 = vsel %vm1842, %v2580, 0.0
    %2582 = vadd.xlane.f32.xlu0 %v2581
    %v2583 = vpop.xlane.xlu0 %2582
    %v2584 = vrcp.pop %v2583
    %v2585 = vmul.f32 %v2580, %v2584
    %2586 = vrot.lane.b32.xlu0 %v1741, 104
    %v2587 = vpop.permute.xlu0 %2586
    %2588 = vrot.lane.b32.xlu0 %v1746, 104
    %v2589 = vpop.permute.xlu0 %2588
    %v2593 = vsel %vm1842, %v2585, 0
    %2595 = vmatprep.subr.mxu0 0.0
    %2596 = vmatpush1.msra.mxu0 %v2587
    %2597 = vmatprep.subr.mxu0 0.0
    %2598 = vmatpush1.msra.mxu0 %v2589
    %2599 = vmatprep.subr.mxu0 0.0
    %2600 = vmatpush1.msra.mxu0 0.0
    %2601 = vmatprep.subr.mxu0 0.0
    %2602 = vmatpush1.msra.mxu0 0.0
    %2603 = vmatprep.subr.mxu0 0.0
    %2604 = vmatpush1.msra.mxu0 0.0
    %2605 = vmatprep.subr.mxu0 0.0
    %2606 = vmatpush1.msra.mxu0 0.0
    %2607 = vmatprep.subr.mxu0 0.0
    %2608 = vmatpush1.msra.mxu0 0.0
    %2609 = vmatprep.subr.mxu0 0.0
    %2610 = vmatpush1.msra.mxu0 0.0
    %2611 = vmatprep.subr.mxu0 0.0
    %2612 = vmatpush1.msra.mxu0 0.0
    %2613 = vmatprep.subr.mxu0 0.0
    %2614 = vmatpush1.msra.mxu0 0.0
    %2615 = vmatprep.subr.mxu0 0.0
    %2616 = vmatpush1.msra.mxu0 0.0
    %2617 = vmatprep.subr.mxu0 0.0
    %2618 = vmatpush1.msra.mxu0 0.0
    %2619 = vmatprep.subr.mxu0 0.0
    %2620 = vmatpush1.msra.mxu0 0.0
    %2621 = vmatprep.subr.mxu0 0.0
    %2622 = vmatpush1.msra.mxu0 0.0
    %2623 = vmatprep.subr.mxu0 0.0
    %2624 = vmatpush1.msra.mxu0 0.0
    %2625 = vmatprep.subr.mxu0 0.0
    %2626 = vmatpush1.msra.mxu0 0.0
    %2627 = vmatprep.subr.mxu0 0.0
    %2628 = vmatpush1.msra.mxu0 0.0
    %2629 = vmatprep.subr.mxu0 0.0
    %2630 = vmatpush1.msra.mxu0 0.0
    %2631 = vmatprep.subr.mxu0 0.0
    %2632 = vmatpush1.msra.mxu0 0.0
    %2633 = vmatprep.subr.mxu0 0.0
    %2634 = vmatpush1.msra.mxu0 0.0
    %2635 = vmatprep.subr.mxu0 0.0
    %2636 = vmatpush1.msra.mxu0 0.0
    %2637 = vmatprep.subr.mxu0 0.0
    %2638 = vmatpush1.msra.mxu0 0.0
    %2639 = vmatprep.subr.mxu0 0.0
    %2640 = vmatpush1.msra.mxu0 0.0
    %2641 = vmatprep.subr.mxu0 0.0
    %2642 = vmatpush1.msra.mxu0 0.0
    %2643 = vmatprep.subr.mxu0 0.0
    %2644 = vmatpush1.msra.mxu0 0.0
    %2645 = vmatprep.subr.mxu0 0.0
    %2646 = vmatpush1.msra.mxu0 0.0
    %2647 = vmatprep.subr.mxu0 0.0
    %2648 = vmatpush1.msra.mxu0 0.0
    %2649 = vmatprep.subr.mxu0 0.0
    %2650 = vmatpush1.msra.mxu0 0.0
    %2651 = vmatprep.subr.mxu0 0.0
    %2652 = vmatpush1.msra.mxu0 0.0
    %2653 = vmatprep.subr.mxu0 0.0
    %2654 = vmatpush1.msra.mxu0 0.0
    %2655 = vmatprep.subr.mxu0 0.0
    %2656 = vmatpush1.msra.mxu0 0.0
    %2657 = vmatprep.subr.mxu0 0.0
    %2658 = vmatpush1.msra.mxu0 0.0
    %2659 = vmatprep.mubr.f32.mxu0 0.0
    %2660 = vmatmul.mubr.f32.gmra.mrb[0].mxu0 %v2593
    %v2661 = vpop.f32.mrb[0].mxu0
    %v2662 = vadd.f32 0.0, %v2661
    %v2663 = vpop.f32.mrb[0].mxu0
    %2664 = vdwg.mxu0
    %v2666 = vsel %vm452, %v2662, 0
    %2668 = vmatprep.subr.mxu0 0.0
    %2669 = vmatpush1.msra.mxu0 %v1762
    %2670 = vmatprep.subr.mxu0 0.0
    %2671 = vmatpush1.msra.mxu0 0.0
    %2672 = vmatprep.subr.mxu0 0.0
    %2673 = vmatpush1.msra.mxu0 0.0
    %2674 = vmatprep.subr.mxu0 0.0
    %2675 = vmatpush1.msra.mxu0 0.0
    %2676 = vmatprep.subr.mxu0 0.0
    %2677 = vmatpush1.msra.mxu0 0.0
    %2678 = vmatprep.subr.mxu0 0.0
    %2679 = vmatpush1.msra.mxu0 0.0
    %2680 = vmatprep.subr.mxu0 0.0
    %2681 = vmatpush1.msra.mxu0 0.0
    %2682 = vmatprep.subr.mxu0 0.0
    %2683 = vmatpush1.msra.mxu0 0.0
    %2684 = vmatprep.subr.mxu0 0.0
    %2685 = vmatpush1.msra.mxu0 0.0
    %2686 = vmatprep.subr.mxu0 0.0
    %2687 = vmatpush1.msra.mxu0 0.0
    %2688 = vmatprep.subr.mxu0 0.0
    %2689 = vmatpush1.msra.mxu0 0.0
    %2690 = vmatprep.subr.mxu0 0.0
    %2691 = vmatpush1.msra.mxu0 0.0
    %2692 = vmatprep.subr.mxu0 0.0
    %2693 = vmatpush1.msra.mxu0 0.0
    %2694 = vmatprep.subr.mxu0 0.0
    %2695 = vmatpush1.msra.mxu0 0.0
    %2696 = vmatprep.subr.mxu0 0.0
    %2697 = vmatpush1.msra.mxu0 0.0
    %2698 = vmatprep.subr.mxu0 0.0
    %2699 = vmatpush1.msra.mxu0 0.0
    %2700 = vmatprep.subr.mxu0 0.0
    %2701 = vmatpush1.msra.mxu0 0.0
    %2702 = vmatprep.subr.mxu0 0.0
    %2703 = vmatpush1.msra.mxu0 0.0
    %2704 = vmatprep.subr.mxu0 0.0
    %2705 = vmatpush1.msra.mxu0 0.0
    %2706 = vmatprep.subr.mxu0 0.0
    %2707 = vmatpush1.msra.mxu0 0.0
    %2708 = vmatprep.subr.mxu0 0.0
    %2709 = vmatpush1.msra.mxu0 0.0
    %2710 = vmatprep.subr.mxu0 0.0
    %2711 = vmatpush1.msra.mxu0 0.0
    %2712 = vmatprep.subr.mxu0 0.0
    %2713 = vmatpush1.msra.mxu0 0.0
    %2714 = vmatprep.subr.mxu0 0.0
    %2715 = vmatpush1.msra.mxu0 0.0
    %2716 = vmatprep.subr.mxu0 0.0
    %2717 = vmatpush1.msra.mxu0 0.0
    %2718 = vmatprep.subr.mxu0 0.0
    %2719 = vmatpush1.msra.mxu0 0.0
    %2720 = vmatprep.subr.mxu0 0.0
    %2721 = vmatpush1.msra.mxu0 0.0
    %2722 = vmatprep.subr.mxu0 0.0
    %2723 = vmatpush1.msra.mxu0 0.0
    %2724 = vmatprep.subr.mxu0 0.0
    %2725 = vmatpush1.msra.mxu0 0.0
    %2726 = vmatprep.subr.mxu0 0.0
    %2727 = vmatpush1.msra.mxu0 0.0
    %2728 = vmatprep.subr.mxu0 0.0
    %2729 = vmatpush1.msra.mxu0 0.0
    %2730 = vmatprep.subr.mxu0 0.0
    %2731 = vmatpush1.msra.mxu0 0.0
    %2732 = vmatprep.mubr.f32.mxu0 0.0
    %2733 = vmatmul.mubr.f32.gmra.mrb[0].mxu0 %v2666
    %v2734 = vpop.f32.mrb[0].mxu0
    %v2735 = vadd.f32 0.0, %v2734
    %v2736 = vpop.f32.mrb[0].mxu0
    %2737 = vdwg.mxu0
    %v2738 = vadd.f32 %v2492, %v2735
    %v2740 = vsel %vm452, %v1554, 0
    %v2743 = vsel %vm452, %v1650, 0
    %v2746 = vsel %vm452, %v1655, 0
    %2748 = vmatprep.subr.mxu0 0.0
    %2749 = vmatpush1.xpose.msra.mxu0 %v2743
    %2750 = vmatprep.subr.mxu0 0.0
    %2751 = vmatpush1.xpose.msra.mxu0 %v2746
    %2752 = vmatprep.subr.mxu0 0.0
    %2753 = vmatpush1.xpose.msra.mxu0 0.0
    %2754 = vmatprep.subr.mxu0 0.0
    %2755 = vmatpush1.xpose.msra.mxu0 0.0
    %2756 = vmatprep.subr.mxu0 0.0
    %2757 = vmatpush1.xpose.msra.mxu0 0.0
    %2758 = vmatprep.subr.mxu0 0.0
    %2759 = vmatpush1.xpose.msra.mxu0 0.0
    %2760 = vmatprep.subr.mxu0 0.0
    %2761 = vmatpush1.xpose.msra.mxu0 0.0
    %2762 = vmatprep.subr.mxu0 0.0
    %2763 = vmatpush1.xpose.msra.mxu0 0.0
    %2764 = vmatprep.subr.mxu0 0.0
    %2765 = vmatpush1.xpose.msra.mxu0 0.0
    %2766 = vmatprep.subr.mxu0 0.0
    %2767 = vmatpush1.xpose.msra.mxu0 0.0
    %2768 = vmatprep.subr.mxu0 0.0
    %2769 = vmatpush1.xpose.msra.mxu0 0.0
    %2770 = vmatprep.subr.mxu0 0.0
    %2771 = vmatpush1.xpose.msra.mxu0 0.0
    %2772 = vmatprep.subr.mxu0 0.0
    %2773 = vmatpush1.xpose.msra.mxu0 0.0
    %2774 = vmatprep.subr.mxu0 0.0
    %2775 = vmatpush1.xpose.msra.mxu0 0.0
    %2776 = vmatprep.subr.mxu0 0.0
    %2777 = vmatpush1.xpose.msra.mxu0 0.0
    %2778 = vmatprep.subr.mxu0 0.0
    %2779 = vmatpush1.xpose.msra.mxu0 0.0
    %2780 = vmatprep.subr.mxu0 0.0
    %2781 = vmatpush1.xpose.msra.mxu0 0.0
    %2782 = vmatprep.subr.mxu0 0.0
    %2783 = vmatpush1.xpose.msra.mxu0 0.0
    %2784 = vmatprep.subr.mxu0 0.0
    %2785 = vmatpush1.xpose.msra.mxu0 0.0
    %2786 = vmatprep.subr.mxu0 0.0
    %2787 = vmatpush1.xpose.msra.mxu0 0.0
    %2788 = vmatprep.subr.mxu0 0.0
    %2789 = vmatpush1.xpose.msra.mxu0 0.0
    %2790 = vmatprep.subr.mxu0 0.0
    %2791 = vmatpush1.xpose.msra.mxu0 0.0
    %2792 = vmatprep.subr.mxu0 0.0
    %2793 = vmatpush1.xpose.msra.mxu0 0.0
    %2794 = vmatprep.subr.mxu0 0.0
    %2795 = vmatpush1.xpose.msra.mxu0 0.0
    %2796 = vmatprep.subr.mxu0 0.0
    %2797 = vmatpush1.xpose.msra.mxu0 0.0
    %2798 = vmatprep.subr.mxu0 0.0
    %2799 = vmatpush1.xpose.msra.mxu0 0.0
    %2800 = vmatprep.subr.mxu0 0.0
    %2801 = vmatpush1.xpose.msra.mxu0 0.0
    %2802 = vmatprep.subr.mxu0 0.0
    %2803 = vmatpush1.xpose.msra.mxu0 0.0
    %2804 = vmatprep.subr.mxu0 0.0
    %2805 = vmatpush1.xpose.msra.mxu0 0.0
    %2806 = vmatprep.subr.mxu0 0.0
    %2807 = vmatpush1.xpose.msra.mxu0 0.0
    %2808 = vmatprep.subr.mxu0 0.0
    %2809 = vmatpush1.xpose.msra.mxu0 0.0
    %2810 = vmatprep.subr.mxu0 0.0
    %2811 = vmatpush1.xpose.msra.mxu0 0.0
    %2812 = vmatprep.mubr.f32.mxu0 0.0
    %2813 = vmatmul.mubr.f32.gmra.mrb[0].mxu0 %v2740
    %v2814 = vpop.f32.mrb[0].mxu0
    %v2815 = vadd.f32 0.0, %v2814
    %v2816 = vpop.f32.mrb[0].mxu0
    %2817 = vdwg.mxu0
    %v2818 = vsel %vm1842, %v2815, -inf
    %2819 = vmax.xlane.f32.xlu0 %v2818
    %v2820 = vpop.xlane.xlu0 %2819
    %v2821 = vsub.f32 %v2815, %v2820
    %v2822 = vmul.f32 %v2821, 1.442695
    %v2823 = vpow.pop %v2822
    %v2824 = vsel %vm1842, %v2823, 0.0
    %2825 = vadd.xlane.f32.xlu0 %v2824
    %v2826 = vpop.xlane.xlu0 %2825
    %v2827 = vrcp.pop %v2826
    %v2828 = vmul.f32 %v2823, %v2827
    %v2830 = vsel %vm1842, %v2828, 0
    %2832 = vmatprep.subr.mxu0 0.0
    %2833 = vmatpush1.msra.mxu0 %v1751
    %2834 = vmatprep.subr.mxu0 0.0
    %2835 = vmatpush1.msra.mxu0 %v1756
    %2836 = vmatprep.subr.mxu0 0.0
    %2837 = vmatpush1.msra.mxu0 0.0
    %2838 = vmatprep.subr.mxu0 0.0
    %2839 = vmatpush1.msra.mxu0 0.0
    %2840 = vmatprep.subr.mxu0 0.0
    %2841 = vmatpush1.msra.mxu0 0.0
    %2842 = vmatprep.subr.mxu0 0.0
    %2843 = vmatpush1.msra.mxu0 0.0
    %2844 = vmatprep.subr.mxu0 0.0
    %2845 = vmatpush1.msra.mxu0 0.0
    %2846 = vmatprep.subr.mxu0 0.0
    %2847 = vmatpush1.msra.mxu0 0.0
    %2848 = vmatprep.subr.mxu0 0.0
    %2849 = vmatpush1.msra.mxu0 0.0
    %2850 = vmatprep.subr.mxu0 0.0
    %2851 = vmatpush1.msra.mxu0 0.0
    %2852 = vmatprep.subr.mxu0 0.0
    %2853 = vmatpush1.msra.mxu0 0.0
    %2854 = vmatprep.subr.mxu0 0.0
    %2855 = vmatpush1.msra.mxu0 0.0
    %2856 = vmatprep.subr.mxu0 0.0
    %2857 = vmatpush1.msra.mxu0 0.0
    %2858 = vmatprep.subr.mxu0 0.0
    %2859 = vmatpush1.msra.mxu0 0.0
    %2860 = vmatprep.subr.mxu0 0.0
    %2861 = vmatpush1.msra.mxu0 0.0
    %2862 = vmatprep.subr.mxu0 0.0
    %2863 = vmatpush1.msra.mxu0 0.0
    %2864 = vmatprep.subr.mxu0 0.0
    %2865 = vmatpush1.msra.mxu0 0.0
    %2866 = vmatprep.subr.mxu0 0.0
    %2867 = vmatpush1.msra.mxu0 0.0
    %2868 = vmatprep.subr.mxu0 0.0
    %2869 = vmatpush1.msra.mxu0 0.0
    %2870 = vmatprep.subr.mxu0 0.0
    %2871 = vmatpush1.msra.mxu0 0.0
    %2872 = vmatprep.subr.mxu0 0.0
    %2873 = vmatpush1.msra.mxu0 0.0
    %2874 = vmatprep.subr.mxu0 0.0
    %2875 = vmatpush1.msra.mxu0 0.0
    %2876 = vmatprep.subr.mxu0 0.0
    %2877 = vmatpush1.msra.mxu0 0.0
    %2878 = vmatprep.subr.mxu0 0.0
    %2879 = vmatpush1.msra.mxu0 0.0
    %2880 = vmatprep.subr.mxu0 0.0
    %2881 = vmatpush1.msra.mxu0 0.0
    %2882 = vmatprep.subr.mxu0 0.0
    %2883 = vmatpush1.msra.mxu0 0.0
    %2884 = vmatprep.subr.mxu0 0.0
    %2885 = vmatpush1.msra.mxu0 0.0
    %2886 = vmatprep.subr.mxu0 0.0
    %2887 = vmatpush1.msra.mxu0 0.0
    %2888 = vmatprep.subr.mxu0 0.0
    %2889 = vmatpush1.msra.mxu0 0.0
    %2890 = vmatprep.subr.mxu0 0.0
    %2891 = vmatpush1.msra.mxu0 0.0
    %2892 = vmatprep.subr.mxu0 0.0
    %2893 = vmatpush1.msra.mxu0 0.0
    %2894 = vmatprep.subr.mxu0 0.0
    %2895 = vmatpush1.msra.mxu0 0.0
    %2896 = vmatprep.mubr.f32.mxu0 0.0
    %2897 = vmatmul.mubr.f32.gmra.mrb[0].mxu0 %v2830
    %v2898 = vpop.f32.mrb[0].mxu0
    %v2899 = vadd.f32 0.0, %v2898
    %v2900 = vpop.f32.mrb[0].mxu0
    %2901 = vdwg.mxu0
    %2902 = vrot.lane.b32.xlu0 %v1554, 120
    %v2903 = vpop.permute.xlu0 %2902
    %2904 = vrot.lane.b32.xlu0 %v1650, 120
    %v2905 = vpop.permute.xlu0 %2904
    %2906 = vrot.lane.b32.xlu0 %v1655, 120
    %v2907 = vpop.permute.xlu0 %2906
    %v2908 = vsel %vm452, %v2903, 0
    %v2910 = vsel %vm452, %v2905, 0
    %v2912 = vsel %vm452, %v2907, 0
    %2914 = vmatprep.subr.mxu0 0.0
    %2915 = vmatpush1.xpose.msra.mxu0 %v2910
    %2916 = vmatprep.subr.mxu0 0.0
    %2917 = vmatpush1.xpose.msra.mxu0 %v2912
    %2918 = vmatprep.subr.mxu0 0.0
    %2919 = vmatpush1.xpose.msra.mxu0 0.0
    %2920 = vmatprep.subr.mxu0 0.0
    %2921 = vmatpush1.xpose.msra.mxu0 0.0
    %2922 = vmatprep.subr.mxu0 0.0
    %2923 = vmatpush1.xpose.msra.mxu0 0.0
    %2924 = vmatprep.subr.mxu0 0.0
    %2925 = vmatpush1.xpose.msra.mxu0 0.0
    %2926 = vmatprep.subr.mxu0 0.0
    %2927 = vmatpush1.xpose.msra.mxu0 0.0
    %2928 = vmatprep.subr.mxu0 0.0
    %2929 = vmatpush1.xpose.msra.mxu0 0.0
    %2930 = vmatprep.subr.mxu0 0.0
    %2931 = vmatpush1.xpose.msra.mxu0 0.0
    %2932 = vmatprep.subr.mxu0 0.0
    %2933 = vmatpush1.xpose.msra.mxu0 0.0
    %2934 = vmatprep.subr.mxu0 0.0
    %2935 = vmatpush1.xpose.msra.mxu0 0.0
    %2936 = vmatprep.subr.mxu0 0.0
    %2937 = vmatpush1.xpose.msra.mxu0 0.0
    %2938 = vmatprep.subr.mxu0 0.0
    %2939 = vmatpush1.xpose.msra.mxu0 0.0
    %2940 = vmatprep.subr.mxu0 0.0
    %2941 = vmatpush1.xpose.msra.mxu0 0.0
    %2942 = vmatprep.subr.mxu0 0.0
    %2943 = vmatpush1.xpose.msra.mxu0 0.0
    %2944 = vmatprep.subr.mxu0 0.0
    %2945 = vmatpush1.xpose.msra.mxu0 0.0
    %2946 = vmatprep.subr.mxu0 0.0
    %2947 = vmatpush1.xpose.msra.mxu0 0.0
    %2948 = vmatprep.subr.mxu0 0.0
    %2949 = vmatpush1.xpose.msra.mxu0 0.0
    %2950 = vmatprep.subr.mxu0 0.0
    %2951 = vmatpush1.xpose.msra.mxu0 0.0
    %2952 = vmatprep.subr.mxu0 0.0
    %2953 = vmatpush1.xpose.msra.mxu0 0.0
    %2954 = vmatprep.subr.mxu0 0.0
    %2955 = vmatpush1.xpose.msra.mxu0 0.0
    %2956 = vmatprep.subr.mxu0 0.0
    %2957 = vmatpush1.xpose.msra.mxu0 0.0
    %2958 = vmatprep.subr.mxu0 0.0
    %2959 = vmatpush1.xpose.msra.mxu0 0.0
    %2960 = vmatprep.subr.mxu0 0.0
    %2961 = vmatpush1.xpose.msra.mxu0 0.0
    %2962 = vmatprep.subr.mxu0 0.0
    %2963 = vmatpush1.xpose.msra.mxu0 0.0
    %2964 = vmatprep.subr.mxu0 0.0
    %2965 = vmatpush1.xpose.msra.mxu0 0.0
    %2966 = vmatprep.subr.mxu0 0.0
    %2967 = vmatpush1.xpose.msra.mxu0 0.0
    %2968 = vmatprep.subr.mxu0 0.0
    %2969 = vmatpush1.xpose.msra.mxu0 0.0
    %2970 = vmatprep.subr.mxu0 0.0
    %2971 = vmatpush1.xpose.msra.mxu0 0.0
    %2972 = vmatprep.subr.mxu0 0.0
    %2973 = vmatpush1.xpose.msra.mxu0 0.0
    %2974 = vmatprep.subr.mxu0 0.0
    %2975 = vmatpush1.xpose.msra.mxu0 0.0
    %2976 = vmatprep.subr.mxu0 0.0
    %2977 = vmatpush1.xpose.msra.mxu0 0.0
    %2978 = vmatprep.mubr.f32.mxu0 0.0
    %2979 = vmatmul.mubr.f32.gmra.mrb[0].mxu0 %v2908
    %v2980 = vpop.f32.mrb[0].mxu0
    %v2981 = vadd.f32 0.0, %v2980
    %v2982 = vpop.f32.mrb[0].mxu0
    %2983 = vdwg.mxu0
    %v2984 = vsel %vm1842, %v2981, -inf
    %2985 = vmax.xlane.f32.xlu0 %v2984
    %v2986 = vpop.xlane.xlu0 %2985
    %v2987 = vsub.f32 %v2981, %v2986
    %v2988 = vmul.f32 %v2987, 1.442695
    %v2989 = vpow.pop %v2988
    %v2990 = vsel %vm1842, %v2989, 0.0
    %2991 = vadd.xlane.f32.xlu0 %v2990
    %v2992 = vpop.xlane.xlu0 %2991
    %v2993 = vrcp.pop %v2992
    %v2994 = vmul.f32 %v2989, %v2993
    %2997 = vrot.lane.b32.xlu0 %v1751, 120
    %v2998 = vpop.permute.xlu0 %2997
    %2999 = vrot.lane.b32.xlu0 %v1756, 120
    %v3000 = vpop.permute.xlu0 %2999
    %v3004 = vsel %vm1842, %v2994, 0
    %3006 = vmatprep.subr.mxu0 0.0
    %3007 = vmatpush1.msra.mxu0 %v2998
    %3008 = vmatprep.subr.mxu0 0.0
    %3009 = vmatpush1.msra.mxu0 %v3000
    %3010 = vmatprep.subr.mxu0 0.0
    %3011 = vmatpush1.msra.mxu0 0.0
    %3012 = vmatprep.subr.mxu0 0.0
    %3013 = vmatpush1.msra.mxu0 0.0
    %3014 = vmatprep.subr.mxu0 0.0
    %3015 = vmatpush1.msra.mxu0 0.0
    %3016 = vmatprep.subr.mxu0 0.0
    %3017 = vmatpush1.msra.mxu0 0.0
    %3018 = vmatprep.subr.mxu0 0.0
    %3019 = vmatpush1.msra.mxu0 0.0
    %3020 = vmatprep.subr.mxu0 0.0
    %3021 = vmatpush1.msra.mxu0 0.0
    %3022 = vmatprep.subr.mxu0 0.0
    %3023 = vmatpush1.msra.mxu0 0.0
    %3024 = vmatprep.subr.mxu0 0.0
    %3025 = vmatpush1.msra.mxu0 0.0
    %3026 = vmatprep.subr.mxu0 0.0
    %3027 = vmatpush1.msra.mxu0 0.0
    %3028 = vmatprep.subr.mxu0 0.0
    %3029 = vmatpush1.msra.mxu0 0.0
    %3030 = vmatprep.subr.mxu0 0.0
    %3031 = vmatpush1.msra.mxu0 0.0
    %3032 = vmatprep.subr.mxu0 0.0
    %3033 = vmatpush1.msra.mxu0 0.0
    %3034 = vmatprep.subr.mxu0 0.0
    %3035 = vmatpush1.msra.mxu0 0.0
    %3036 = vmatprep.subr.mxu0 0.0
    %3037 = vmatpush1.msra.mxu0 0.0
    %3038 = vmatprep.subr.mxu0 0.0
    %3039 = vmatpush1.msra.mxu0 0.0
    %3040 = vmatprep.subr.mxu0 0.0
    %3041 = vmatpush1.msra.mxu0 0.0
    %3042 = vmatprep.subr.mxu0 0.0
    %3043 = vmatpush1.msra.mxu0 0.0
    %3044 = vmatprep.subr.mxu0 0.0
    %3045 = vmatpush1.msra.mxu0 0.0
    %3046 = vmatprep.subr.mxu0 0.0
    %3047 = vmatpush1.msra.mxu0 0.0
    %3048 = vmatprep.subr.mxu0 0.0
    %3049 = vmatpush1.msra.mxu0 0.0
    %3050 = vmatprep.subr.mxu0 0.0
    %3051 = vmatpush1.msra.mxu0 0.0
    %3052 = vmatprep.subr.mxu0 0.0
    %3053 = vmatpush1.msra.mxu0 0.0
    %3054 = vmatprep.subr.mxu0 0.0
    %3055 = vmatpush1.msra.mxu0 0.0
    %3056 = vmatprep.subr.mxu0 0.0
    %3057 = vmatpush1.msra.mxu0 0.0
    %3058 = vmatprep.subr.mxu0 0.0
    %3059 = vmatpush1.msra.mxu0 0.0
    %3060 = vmatprep.subr.mxu0 0.0
    %3061 = vmatpush1.msra.mxu0 0.0
    %3062 = vmatprep.subr.mxu0 0.0
    %3063 = vmatpush1.msra.mxu0 0.0
    %3064 = vmatprep.subr.mxu0 0.0
    %3065 = vmatpush1.msra.mxu0 0.0
    %3066 = vmatprep.subr.mxu0 0.0
    %3067 = vmatpush1.msra.mxu0 0.0
    %3068 = vmatprep.subr.mxu0 0.0
    %3069 = vmatpush1.msra.mxu0 0.0
    %3070 = vmatprep.mubr.f32.mxu0 0.0
    %3071 = vmatmul.mubr.f32.gmra.mrb[0].mxu0 %v3004
    %v3072 = vpop.f32.mrb[0].mxu0
    %v3073 = vadd.f32 0.0, %v3072
    %v3074 = vpop.f32.mrb[0].mxu0
    %3075 = vdwg.mxu0
    %v3077 = vsel %vm452, %v3073, 0
    %3079 = vmatprep.subr.mxu0 0.0
    %3080 = vmatpush1.msra.mxu0 %v1760
    %3081 = vmatprep.subr.mxu0 0.0
    %3082 = vmatpush1.msra.mxu0 0.0
    %3083 = vmatprep.subr.mxu0 0.0
    %3084 = vmatpush1.msra.mxu0 0.0
    %3085 = vmatprep.subr.mxu0 0.0
    %3086 = vmatpush1.msra.mxu0 0.0
    %3087 = vmatprep.subr.mxu0 0.0
    %3088 = vmatpush1.msra.mxu0 0.0
    %3089 = vmatprep.subr.mxu0 0.0
    %3090 = vmatpush1.msra.mxu0 0.0
    %3091 = vmatprep.subr.mxu0 0.0
    %3092 = vmatpush1.msra.mxu0 0.0
    %3093 = vmatprep.subr.mxu0 0.0
    %3094 = vmatpush1.msra.mxu0 0.0
    %3095 = vmatprep.subr.mxu0 0.0
    %3096 = vmatpush1.msra.mxu0 0.0
    %3097 = vmatprep.subr.mxu0 0.0
    %3098 = vmatpush1.msra.mxu0 0.0
    %3099 = vmatprep.subr.mxu0 0.0
    %3100 = vmatpush1.msra.mxu0 0.0
    %3101 = vmatprep.subr.mxu0 0.0
    %3102 = vmatpush1.msra.mxu0 0.0
    %3103 = vmatprep.subr.mxu0 0.0
    %3104 = vmatpush1.msra.mxu0 0.0
    %3105 = vmatprep.subr.mxu0 0.0
    %3106 = vmatpush1.msra.mxu0 0.0
    %3107 = vmatprep.subr.mxu0 0.0
    %3108 = vmatpush1.msra.mxu0 0.0
    %3109 = vmatprep.subr.mxu0 0.0
    %3110 = vmatpush1.msra.mxu0 0.0
    %3111 = vmatprep.subr.mxu0 0.0
    %3112 = vmatpush1.msra.mxu0 0.0
    %3113 = vmatprep.subr.mxu0 0.0
    %3114 = vmatpush1.msra.mxu0 0.0
    %3115 = vmatprep.subr.mxu0 0.0
    %3116 = vmatpush1.msra.mxu0 0.0
    %3117 = vmatprep.subr.mxu0 0.0
    %3118 = vmatpush1.msra.mxu0 0.0
    %3119 = vmatprep.subr.mxu0 0.0
    %3120 = vmatpush1.msra.mxu0 0.0
    %3121 = vmatprep.subr.mxu0 0.0
    %3122 = vmatpush1.msra.mxu0 0.0
    %3123 = vmatprep.subr.mxu0 0.0
    %3124 = vmatpush1.msra.mxu0 0.0
    %3125 = vmatprep.subr.mxu0 0.0
    %3126 = vmatpush1.msra.mxu0 0.0
    %3127 = vmatprep.subr.mxu0 0.0
    %3128 = vmatpush1.msra.mxu0 0.0
    %3129 = vmatprep.subr.mxu0 0.0
    %3130 = vmatpush1.msra.mxu0 0.0
    %3131 = vmatprep.subr.mxu0 0.0
    %3132 = vmatpush1.msra.mxu0 0.0
    %3133 = vmatprep.subr.mxu0 0.0
    %3134 = vmatpush1.msra.mxu0 0.0
    %3135 = vmatprep.subr.mxu0 0.0
    %3136 = vmatpush1.msra.mxu0 0.0
    %3137 = vmatprep.subr.mxu0 0.0
    %3138 = vmatpush1.msra.mxu0 0.0
    %3139 = vmatprep.subr.mxu0 0.0
    %3140 = vmatpush1.msra.mxu0 0.0
    %3141 = vmatprep.subr.mxu0 0.0
    %3142 = vmatpush1.msra.mxu0 0.0
    %3143 = vmatprep.mubr.f32.mxu0 0.0
    %3144 = vmatmul.mubr.f32.gmra.mrb[0].mxu0 %v3077
    %v3145 = vpop.f32.mrb[0].mxu0
    %v3146 = vadd.f32 0.0, %v3145
    %v3147 = vpop.f32.mrb[0].mxu0
    %3148 = vdwg.mxu0
    %v3150 = vsel %vm452, %v2899, 0
    %3152 = vmatprep.subr.mxu0 0.0
    %3153 = vmatpush1.msra.mxu0 %v1759
    %3154 = vmatprep.subr.mxu0 0.0
    %3155 = vmatpush1.msra.mxu0 0.0
    %3156 = vmatprep.subr.mxu0 0.0
    %3157 = vmatpush1.msra.mxu0 0.0
    %3158 = vmatprep.subr.mxu0 0.0
    %3159 = vmatpush1.msra.mxu0 0.0
    %3160 = vmatprep.subr.mxu0 0.0
    %3161 = vmatpush1.msra.mxu0 0.0
    %3162 = vmatprep.subr.mxu0 0.0
    %3163 = vmatpush1.msra.mxu0 0.0
    %3164 = vmatprep.subr.mxu0 0.0
    %3165 = vmatpush1.msra.mxu0 0.0
    %3166 = vmatprep.subr.mxu0 0.0
    %3167 = vmatpush1.msra.mxu0 0.0
    %3168 = vmatprep.subr.mxu0 0.0
    %3169 = vmatpush1.msra.mxu0 0.0
    %3170 = vmatprep.subr.mxu0 0.0
    %3171 = vmatpush1.msra.mxu0 0.0
    %3172 = vmatprep.subr.mxu0 0.0
    %3173 = vmatpush1.msra.mxu0 0.0
    %3174 = vmatprep.subr.mxu0 0.0
    %3175 = vmatpush1.msra.mxu0 0.0
    %3176 = vmatprep.subr.mxu0 0.0
    %3177 = vmatpush1.msra.mxu0 0.0
    %3178 = vmatprep.subr.mxu0 0.0
    %3179 = vmatpush1.msra.mxu0 0.0
    %3180 = vmatprep.subr.mxu0 0.0
    %3181 = vmatpush1.msra.mxu0 0.0
    %3182 = vmatprep.subr.mxu0 0.0
    %3183 = vmatpush1.msra.mxu0 0.0
    %3184 = vmatprep.subr.mxu0 0.0
    %3185 = vmatpush1.msra.mxu0 0.0
    %3186 = vmatprep.subr.mxu0 0.0
    %3187 = vmatpush1.msra.mxu0 0.0
    %3188 = vmatprep.subr.mxu0 0.0
    %3189 = vmatpush1.msra.mxu0 0.0
    %3190 = vmatprep.subr.mxu0 0.0
    %3191 = vmatpush1.msra.mxu0 0.0
    %3192 = vmatprep.subr.mxu0 0.0
    %3193 = vmatpush1.msra.mxu0 0.0
    %3194 = vmatprep.subr.mxu0 0.0
    %3195 = vmatpush1.msra.mxu0 0.0
    %3196 = vmatprep.subr.mxu0 0.0
    %3197 = vmatpush1.msra.mxu0 0.0
    %3198 = vmatprep.subr.mxu0 0.0
    %3199 = vmatpush1.msra.mxu0 0.0
    %3200 = vmatprep.subr.mxu0 0.0
    %3201 = vmatpush1.msra.mxu0 0.0
    %3202 = vmatprep.subr.mxu0 0.0
    %3203 = vmatpush1.msra.mxu0 0.0
    %3204 = vmatprep.subr.mxu0 0.0
    %3205 = vmatpush1.msra.mxu0 0.0
    %3206 = vmatprep.subr.mxu0 0.0
    %3207 = vmatpush1.msra.mxu0 0.0
    %3208 = vmatprep.subr.mxu0 0.0
    %3209 = vmatpush1.msra.mxu0 0.0
    %3210 = vmatprep.subr.mxu0 0.0
    %3211 = vmatpush1.msra.mxu0 0.0
    %3212 = vmatprep.subr.mxu0 0.0
    %3213 = vmatpush1.msra.mxu0 0.0
    %3214 = vmatprep.subr.mxu0 0.0
    %3215 = vmatpush1.msra.mxu0 0.0
    %3216 = vmatprep.mubr.f32.mxu0 0.0
    %3217 = vmatmul.mubr.f32.gmra.mrb[0].mxu0 %v3150
    %v3218 = vpop.f32.mrb[0].mxu0
    %v3219 = vadd.f32 %v3146, %v3218
    %v3220 = vpop.f32.mrb[0].mxu0
    %3221 = vdwg.mxu0
    %3222 = vrot.lane.b32.xlu0 %v1554, 112
    %v3223 = vpop.permute.xlu0 %3222
    %3224 = vrot.lane.b32.xlu0 %v1650, 112
    %v3225 = vpop.permute.xlu0 %3224
    %3226 = vrot.lane.b32.xlu0 %v1655, 112
    %v3227 = vpop.permute.xlu0 %3226
    %v3228 = vsel %vm452, %v3223, 0
    %v3230 = vsel %vm452, %v3225, 0
    %v3232 = vsel %vm452, %v3227, 0
    %3234 = vmatprep.subr.mxu0 0.0
    %3235 = vmatpush1.xpose.msra.mxu0 %v3230
    %3236 = vmatprep.subr.mxu0 0.0
    %3237 = vmatpush1.xpose.msra.mxu0 %v3232
    %3238 = vmatprep.subr.mxu0 0.0
    %3239 = vmatpush1.xpose.msra.mxu0 0.0
    %3240 = vmatprep.subr.mxu0 0.0
    %3241 = vmatpush1.xpose.msra.mxu0 0.0
    %3242 = vmatprep.subr.mxu0 0.0
    %3243 = vmatpush1.xpose.msra.mxu0 0.0
    %3244 = vmatprep.subr.mxu0 0.0
    %3245 = vmatpush1.xpose.msra.mxu0 0.0
    %3246 = vmatprep.subr.mxu0 0.0
    %3247 = vmatpush1.xpose.msra.mxu0 0.0
    %3248 = vmatprep.subr.mxu0 0.0
    %3249 = vmatpush1.xpose.msra.mxu0 0.0
    %3250 = vmatprep.subr.mxu0 0.0
    %3251 = vmatpush1.xpose.msra.mxu0 0.0
    %3252 = vmatprep.subr.mxu0 0.0
    %3253 = vmatpush1.xpose.msra.mxu0 0.0
    %3254 = vmatprep.subr.mxu0 0.0
    %3255 = vmatpush1.xpose.msra.mxu0 0.0
    %3256 = vmatprep.subr.mxu0 0.0
    %3257 = vmatpush1.xpose.msra.mxu0 0.0
    %3258 = vmatprep.subr.mxu0 0.0
    %3259 = vmatpush1.xpose.msra.mxu0 0.0
    %3260 = vmatprep.subr.mxu0 0.0
    %3261 = vmatpush1.xpose.msra.mxu0 0.0
    %3262 = vmatprep.subr.mxu0 0.0
    %3263 = vmatpush1.xpose.msra.mxu0 0.0
    %3264 = vmatprep.subr.mxu0 0.0
    %3265 = vmatpush1.xpose.msra.mxu0 0.0
    %3266 = vmatprep.subr.mxu0 0.0
    %3267 = vmatpush1.xpose.msra.mxu0 0.0
    %3268 = vmatprep.subr.mxu0 0.0
    %3269 = vmatpush1.xpose.msra.mxu0 0.0
    %3270 = vmatprep.subr.mxu0 0.0
    %3271 = vmatpush1.xpose.msra.mxu0 0.0
    %3272 = vmatprep.subr.mxu0 0.0
    %3273 = vmatpush1.xpose.msra.mxu0 0.0
    %3274 = vmatprep.subr.mxu0 0.0
    %3275 = vmatpush1.xpose.msra.mxu0 0.0
    %3276 = vmatprep.subr.mxu0 0.0
    %3277 = vmatpush1.xpose.msra.mxu0 0.0
    %3278 = vmatprep.subr.mxu0 0.0
    %3279 = vmatpush1.xpose.msra.mxu0 0.0
    %3280 = vmatprep.subr.mxu0 0.0
    %3281 = vmatpush1.xpose.msra.mxu0 0.0
    %3282 = vmatprep.subr.mxu0 0.0
    %3283 = vmatpush1.xpose.msra.mxu0 0.0
    %3284 = vmatprep.subr.mxu0 0.0
    %3285 = vmatpush1.xpose.msra.mxu0 0.0
    %3286 = vmatprep.subr.mxu0 0.0
    %3287 = vmatpush1.xpose.msra.mxu0 0.0
    %3288 = vmatprep.subr.mxu0 0.0
    %3289 = vmatpush1.xpose.msra.mxu0 0.0
    %3290 = vmatprep.subr.mxu0 0.0
    %3291 = vmatpush1.xpose.msra.mxu0 0.0
    %3292 = vmatprep.subr.mxu0 0.0
    %3293 = vmatpush1.xpose.msra.mxu0 0.0
    %3294 = vmatprep.subr.mxu0 0.0
    %3295 = vmatpush1.xpose.msra.mxu0 0.0
    %3296 = vmatprep.subr.mxu0 0.0
    %3297 = vmatpush1.xpose.msra.mxu0 0.0
    %3298 = vmatprep.mubr.f32.mxu0 0.0
    %3299 = vmatmul.mubr.f32.gmra.mrb[0].mxu0 %v3228
    %v3300 = vpop.f32.mrb[0].mxu0
    %v3301 = vadd.f32 0.0, %v3300
    %v3302 = vpop.f32.mrb[0].mxu0
    %3303 = vdwg.mxu0
    %v3304 = vsel %vm1842, %v3301, -inf
    %3305 = vmax.xlane.f32.xlu0 %v3304
    %v3306 = vpop.xlane.xlu0 %3305
    %v3307 = vsub.f32 %v3301, %v3306
    %v3308 = vmul.f32 %v3307, 1.442695
    %v3309 = vpow.pop %v3308
    %v3310 = vsel %vm1842, %v3309, 0.0
    %3311 = vadd.xlane.f32.xlu0 %v3310
    %v3312 = vpop.xlane.xlu0 %3311
    %v3313 = vrcp.pop %v3312
    %v3314 = vmul.f32 %v3309, %v3313
    %3315 = vrot.lane.b32.xlu0 %v1751, 112
    %v3316 = vpop.permute.xlu0 %3315
    %3317 = vrot.lane.b32.xlu0 %v1756, 112
    %v3318 = vpop.permute.xlu0 %3317
    %v3322 = vsel %vm1842, %v3314, 0
    %3324 = vmatprep.subr.mxu0 0.0
    %3325 = vmatpush1.msra.mxu0 %v3316
    %3326 = vmatprep.subr.mxu0 0.0
    %3327 = vmatpush1.msra.mxu0 %v3318
    %3328 = vmatprep.subr.mxu0 0.0
    %3329 = vmatpush1.msra.mxu0 0.0
    %3330 = vmatprep.subr.mxu0 0.0
    %3331 = vmatpush1.msra.mxu0 0.0
    %3332 = vmatprep.subr.mxu0 0.0
    %3333 = vmatpush1.msra.mxu0 0.0
    %3334 = vmatprep.subr.mxu0 0.0
    %3335 = vmatpush1.msra.mxu0 0.0
    %3336 = vmatprep.subr.mxu0 0.0
    %3337 = vmatpush1.msra.mxu0 0.0
    %3338 = vmatprep.subr.mxu0 0.0
    %3339 = vmatpush1.msra.mxu0 0.0
    %3340 = vmatprep.subr.mxu0 0.0
    %3341 = vmatpush1.msra.mxu0 0.0
    %3342 = vmatprep.subr.mxu0 0.0
    %3343 = vmatpush1.msra.mxu0 0.0
    %3344 = vmatprep.subr.mxu0 0.0
    %3345 = vmatpush1.msra.mxu0 0.0
    %3346 = vmatprep.subr.mxu0 0.0
    %3347 = vmatpush1.msra.mxu0 0.0
    %3348 = vmatprep.subr.mxu0 0.0
    %3349 = vmatpush1.msra.mxu0 0.0
    %3350 = vmatprep.subr.mxu0 0.0
    %3351 = vmatpush1.msra.mxu0 0.0
    %3352 = vmatprep.subr.mxu0 0.0
    %3353 = vmatpush1.msra.mxu0 0.0
    %3354 = vmatprep.subr.mxu0 0.0
    %3355 = vmatpush1.msra.mxu0 0.0
    %3356 = vmatprep.subr.mxu0 0.0
    %3357 = vmatpush1.msra.mxu0 0.0
    %3358 = vmatprep.subr.mxu0 0.0
    %3359 = vmatpush1.msra.mxu0 0.0
    %3360 = vmatprep.subr.mxu0 0.0
    %3361 = vmatpush1.msra.mxu0 0.0
    %3362 = vmatprep.subr.mxu0 0.0
    %3363 = vmatpush1.msra.mxu0 0.0
    %3364 = vmatprep.subr.mxu0 0.0
    %3365 = vmatpush1.msra.mxu0 0.0
    %3366 = vmatprep.subr.mxu0 0.0
    %3367 = vmatpush1.msra.mxu0 0.0
    %3368 = vmatprep.subr.mxu0 0.0
    %3369 = vmatpush1.msra.mxu0 0.0
    %3370 = vmatprep.subr.mxu0 0.0
    %3371 = vmatpush1.msra.mxu0 0.0
    %3372 = vmatprep.subr.mxu0 0.0
    %3373 = vmatpush1.msra.mxu0 0.0
    %3374 = vmatprep.subr.mxu0 0.0
    %3375 = vmatpush1.msra.mxu0 0.0
    %3376 = vmatprep.subr.mxu0 0.0
    %3377 = vmatpush1.msra.mxu0 0.0
    %3378 = vmatprep.subr.mxu0 0.0
    %3379 = vmatpush1.msra.mxu0 0.0
    %3380 = vmatprep.subr.mxu0 0.0
    %3381 = vmatpush1.msra.mxu0 0.0
    %3382 = vmatprep.subr.mxu0 0.0
    %3383 = vmatpush1.msra.mxu0 0.0
    %3384 = vmatprep.subr.mxu0 0.0
    %3385 = vmatpush1.msra.mxu0 0.0
    %3386 = vmatprep.subr.mxu0 0.0
    %3387 = vmatpush1.msra.mxu0 0.0
    %3388 = vmatprep.mubr.f32.mxu0 0.0
    %3389 = vmatmul.mubr.f32.gmra.mrb[0].mxu0 %v3322
    %v3390 = vpop.f32.mrb[0].mxu0
    %v3391 = vadd.f32 0.0, %v3390
    %v3392 = vpop.f32.mrb[0].mxu0
    %3393 = vdwg.mxu0
    %v3395 = vsel %vm452, %v3391, 0
    %3397 = vmatprep.subr.mxu0 0.0
    %3398 = vmatpush1.msra.mxu0 %v1761
    %3399 = vmatprep.subr.mxu0 0.0
    %3400 = vmatpush1.msra.mxu0 0.0
    %3401 = vmatprep.subr.mxu0 0.0
    %3402 = vmatpush1.msra.mxu0 0.0
    %3403 = vmatprep.subr.mxu0 0.0
    %3404 = vmatpush1.msra.mxu0 0.0
    %3405 = vmatprep.subr.mxu0 0.0
    %3406 = vmatpush1.msra.mxu0 0.0
    %3407 = vmatprep.subr.mxu0 0.0
    %3408 = vmatpush1.msra.mxu0 0.0
    %3409 = vmatprep.subr.mxu0 0.0
    %3410 = vmatpush1.msra.mxu0 0.0
    %3411 = vmatprep.subr.mxu0 0.0
    %3412 = vmatpush1.msra.mxu0 0.0
    %3413 = vmatprep.subr.mxu0 0.0
    %3414 = vmatpush1.msra.mxu0 0.0
    %3415 = vmatprep.subr.mxu0 0.0
    %3416 = vmatpush1.msra.mxu0 0.0
    %3417 = vmatprep.subr.mxu0 0.0
    %3418 = vmatpush1.msra.mxu0 0.0
    %3419 = vmatprep.subr.mxu0 0.0
    %3420 = vmatpush1.msra.mxu0 0.0
    %3421 = vmatprep.subr.mxu0 0.0
    %3422 = vmatpush1.msra.mxu0 0.0
    %3423 = vmatprep.subr.mxu0 0.0
    %3424 = vmatpush1.msra.mxu0 0.0
    %3425 = vmatprep.subr.mxu0 0.0
    %3426 = vmatpush1.msra.mxu0 0.0
    %3427 = vmatprep.subr.mxu0 0.0
    %3428 = vmatpush1.msra.mxu0 0.0
    %3429 = vmatprep.subr.mxu0 0.0
    %3430 = vmatpush1.msra.mxu0 0.0
    %3431 = vmatprep.subr.mxu0 0.0
    %3432 = vmatpush1.msra.mxu0 0.0
    %3433 = vmatprep.subr.mxu0 0.0
    %3434 = vmatpush1.msra.mxu0 0.0
    %3435 = vmatprep.subr.mxu0 0.0
    %3436 = vmatpush1.msra.mxu0 0.0
    %3437 = vmatprep.subr.mxu0 0.0
    %3438 = vmatpush1.msra.mxu0 0.0
    %3439 = vmatprep.subr.mxu0 0.0
    %3440 = vmatpush1.msra.mxu0 0.0
    %3441 = vmatprep.subr.mxu0 0.0
    %3442 = vmatpush1.msra.mxu0 0.0
    %3443 = vmatprep.subr.mxu0 0.0
    %3444 = vmatpush1.msra.mxu0 0.0
    %3445 = vmatprep.subr.mxu0 0.0
    %3446 = vmatpush1.msra.mxu0 0.0
    %3447 = vmatprep.subr.mxu0 0.0
    %3448 = vmatpush1.msra.mxu0 0.0
    %3449 = vmatprep.subr.mxu0 0.0
    %3450 = vmatpush1.msra.mxu0 0.0
    %3451 = vmatprep.subr.mxu0 0.0
    %3452 = vmatpush1.msra.mxu0 0.0
    %3453 = vmatprep.subr.mxu0 0.0
    %3454 = vmatpush1.msra.mxu0 0.0
    %3455 = vmatprep.subr.mxu0 0.0
    %3456 = vmatpush1.msra.mxu0 0.0
    %3457 = vmatprep.subr.mxu0 0.0
    %3458 = vmatpush1.msra.mxu0 0.0
    %3459 = vmatprep.subr.mxu0 0.0
    %3460 = vmatpush1.msra.mxu0 0.0
    %3461 = vmatprep.mubr.f32.mxu0 0.0
    %3462 = vmatmul.mubr.f32.gmra.mrb[0].mxu0 %v3395
    %v3463 = vpop.f32.mrb[0].mxu0
    %v3464 = vadd.f32 0.0, %v3463
    %v3465 = vpop.f32.mrb[0].mxu0
    %3466 = vdwg.mxu0
    %v3467 = vadd.f32 %v3219, %v3464
    %3468 = vrot.lane.b32.xlu0 %v1554, 104
    %v3469 = vpop.permute.xlu0 %3468
    %3470 = vrot.lane.b32.xlu0 %v1650, 104
    %v3471 = vpop.permute.xlu0 %3470
    %3472 = vrot.lane.b32.xlu0 %v1655, 104
    %v3473 = vpop.permute.xlu0 %3472
    %v3474 = vsel %vm452, %v3469, 0
    %v3476 = vsel %vm452, %v3471, 0
    %v3478 = vsel %vm452, %v3473, 0
    %3480 = vmatprep.subr.mxu0 0.0
    %3481 = vmatpush1.xpose.msra.mxu0 %v3476
    %3482 = vmatprep.subr.mxu0 0.0
    %3483 = vmatpush1.xpose.msra.mxu0 %v3478
    %3484 = vmatprep.subr.mxu0 0.0
    %3485 = vmatpush1.xpose.msra.mxu0 0.0
    %3486 = vmatprep.subr.mxu0 0.0
    %3487 = vmatpush1.xpose.msra.mxu0 0.0
    %3488 = vmatprep.subr.mxu0 0.0
    %3489 = vmatpush1.xpose.msra.mxu0 0.0
    %3490 = vmatprep.subr.mxu0 0.0
    %3491 = vmatpush1.xpose.msra.mxu0 0.0
    %3492 = vmatprep.subr.mxu0 0.0
    %3493 = vmatpush1.xpose.msra.mxu0 0.0
    %3494 = vmatprep.subr.mxu0 0.0
    %3495 = vmatpush1.xpose.msra.mxu0 0.0
    %3496 = vmatprep.subr.mxu0 0.0
    %3497 = vmatpush1.xpose.msra.mxu0 0.0
    %3498 = vmatprep.subr.mxu0 0.0
    %3499 = vmatpush1.xpose.msra.mxu0 0.0
    %3500 = vmatprep.subr.mxu0 0.0
    %3501 = vmatpush1.xpose.msra.mxu0 0.0
    %3502 = vmatprep.subr.mxu0 0.0
    %3503 = vmatpush1.xpose.msra.mxu0 0.0
    %3504 = vmatprep.subr.mxu0 0.0
    %3505 = vmatpush1.xpose.msra.mxu0 0.0
    %3506 = vmatprep.subr.mxu0 0.0
    %3507 = vmatpush1.xpose.msra.mxu0 0.0
    %3508 = vmatprep.subr.mxu0 0.0
    %3509 = vmatpush1.xpose.msra.mxu0 0.0
    %3510 = vmatprep.subr.mxu0 0.0
    %3511 = vmatpush1.xpose.msra.mxu0 0.0
    %3512 = vmatprep.subr.mxu0 0.0
    %3513 = vmatpush1.xpose.msra.mxu0 0.0
    %3514 = vmatprep.subr.mxu0 0.0
    %3515 = vmatpush1.xpose.msra.mxu0 0.0
    %3516 = vmatprep.subr.mxu0 0.0
    %3517 = vmatpush1.xpose.msra.mxu0 0.0
    %3518 = vmatprep.subr.mxu0 0.0
    %3519 = vmatpush1.xpose.msra.mxu0 0.0
    %3520 = vmatprep.subr.mxu0 0.0
    %3521 = vmatpush1.xpose.msra.mxu0 0.0
    %3522 = vmatprep.subr.mxu0 0.0
    %3523 = vmatpush1.xpose.msra.mxu0 0.0
    %3524 = vmatprep.subr.mxu0 0.0
    %3525 = vmatpush1.xpose.msra.mxu0 0.0
    %3526 = vmatprep.subr.mxu0 0.0
    %3527 = vmatpush1.xpose.msra.mxu0 0.0
    %3528 = vmatprep.subr.mxu0 0.0
    %3529 = vmatpush1.xpose.msra.mxu0 0.0
    %3530 = vmatprep.subr.mxu0 0.0
    %3531 = vmatpush1.xpose.msra.mxu0 0.0
    %3532 = vmatprep.subr.mxu0 0.0
    %3533 = vmatpush1.xpose.msra.mxu0 0.0
    %3534 = vmatprep.subr.mxu0 0.0
    %3535 = vmatpush1.xpose.msra.mxu0 0.0
    %3536 = vmatprep.subr.mxu0 0.0
    %3537 = vmatpush1.xpose.msra.mxu0 0.0
    %3538 = vmatprep.subr.mxu0 0.0
    %3539 = vmatpush1.xpose.msra.mxu0 0.0
    %3540 = vmatprep.subr.mxu0 0.0
    %3541 = vmatpush1.xpose.msra.mxu0 0.0
    %3542 = vmatprep.subr.mxu0 0.0
    %3543 = vmatpush1.xpose.msra.mxu0 0.0
    %3544 = vmatprep.mubr.f32.mxu0 0.0
    %3545 = vmatmul.mubr.f32.gmra.mrb[0].mxu0 %v3474
    %v3546 = vpop.f32.mrb[0].mxu0
    %v3547 = vadd.f32 0.0, %v3546
    %v3548 = vpop.f32.mrb[0].mxu0
    %3549 = vdwg.mxu0
    %v3550 = vsel %vm1842, %v3547, -inf
    %3551 = vmax.xlane.f32.xlu0 %v3550
    %v3552 = vpop.xlane.xlu0 %3551
    %v3553 = vsub.f32 %v3547, %v3552
    %v3554 = vmul.f32 %v3553, 1.442695
    %v3555 = vpow.pop %v3554
    %v3556 = vsel %vm1842, %v3555, 0.0
    %3557 = vadd.xlane.f32.xlu0 %v3556
    %v3558 = vpop.xlane.xlu0 %3557
    %v3559 = vrcp.pop %v3558
    %v3560 = vmul.f32 %v3555, %v3559
    %3561 = vrot.lane.b32.xlu0 %v1751, 104
    %v3562 = vpop.permute.xlu0 %3561
    %3563 = vrot.lane.b32.xlu0 %v1756, 104
    %v3564 = vpop.permute.xlu0 %3563
    %v3568 = vsel %vm1842, %v3560, 0
    %3570 = vmatprep.subr.mxu0 0.0
    %3571 = vmatpush1.msra.mxu0 %v3562
    %3572 = vmatprep.subr.mxu0 0.0
    %3573 = vmatpush1.msra.mxu0 %v3564
    %3574 = vmatprep.subr.mxu0 0.0
    %3575 = vmatpush1.msra.mxu0 0.0
    %3576 = vmatprep.subr.mxu0 0.0
    %3577 = vmatpush1.msra.mxu0 0.0
    %3578 = vmatprep.subr.mxu0 0.0
    %3579 = vmatpush1.msra.mxu0 0.0
    %3580 = vmatprep.subr.mxu0 0.0
    %3581 = vmatpush1.msra.mxu0 0.0
    %3582 = vmatprep.subr.mxu0 0.0
    %3583 = vmatpush1.msra.mxu0 0.0
    %3584 = vmatprep.subr.mxu0 0.0
    %3585 = vmatpush1.msra.mxu0 0.0
    %3586 = vmatprep.subr.mxu0 0.0
    %3587 = vmatpush1.msra.mxu0 0.0
    %3588 = vmatprep.subr.mxu0 0.0
    %3589 = vmatpush1.msra.mxu0 0.0
    %3590 = vmatprep.subr.mxu0 0.0
    %3591 = vmatpush1.msra.mxu0 0.0
    %3592 = vmatprep.subr.mxu0 0.0
    %3593 = vmatpush1.msra.mxu0 0.0
    %3594 = vmatprep.subr.mxu0 0.0
    %3595 = vmatpush1.msra.mxu0 0.0
    %3596 = vmatprep.subr.mxu0 0.0
    %3597 = vmatpush1.msra.mxu0 0.0
    %3598 = vmatprep.subr.mxu0 0.0
    %3599 = vmatpush1.msra.mxu0 0.0
    %3600 = vmatprep.subr.mxu0 0.0
    %3601 = vmatpush1.msra.mxu0 0.0
    %3602 = vmatprep.subr.mxu0 0.0
    %3603 = vmatpush1.msra.mxu0 0.0
    %3604 = vmatprep.subr.mxu0 0.0
    %3605 = vmatpush1.msra.mxu0 0.0
    %3606 = vmatprep.subr.mxu0 0.0
    %3607 = vmatpush1.msra.mxu0 0.0
    %3608 = vmatprep.subr.mxu0 0.0
    %3609 = vmatpush1.msra.mxu0 0.0
    %3610 = vmatprep.subr.mxu0 0.0
    %3611 = vmatpush1.msra.mxu0 0.0
    %3612 = vmatprep.subr.mxu0 0.0
    %3613 = vmatpush1.msra.mxu0 0.0
    %3614 = vmatprep.subr.mxu0 0.0
    %3615 = vmatpush1.msra.mxu0 0.0
    %3616 = vmatprep.subr.mxu0 0.0
    %3617 = vmatpush1.msra.mxu0 0.0
    %3618 = vmatprep.subr.mxu0 0.0
    %3619 = vmatpush1.msra.mxu0 0.0
    %3620 = vmatprep.subr.mxu0 0.0
    %3621 = vmatpush1.msra.mxu0 0.0
    %3622 = vmatprep.subr.mxu0 0.0
    %3623 = vmatpush1.msra.mxu0 0.0
    %3624 = vmatprep.subr.mxu0 0.0
    %3625 = vmatpush1.msra.mxu0 0.0
    %3626 = vmatprep.subr.mxu0 0.0
    %3627 = vmatpush1.msra.mxu0 0.0
    %3628 = vmatprep.subr.mxu0 0.0
    %3629 = vmatpush1.msra.mxu0 0.0
    %3630 = vmatprep.subr.mxu0 0.0
    %3631 = vmatpush1.msra.mxu0 0.0
    %3632 = vmatprep.subr.mxu0 0.0
    %3633 = vmatpush1.msra.mxu0 0.0
    %3634 = vmatprep.mubr.f32.mxu0 0.0
    %3635 = vmatmul.mubr.f32.gmra.mrb[0].mxu0 %v3568
    %v3636 = vpop.f32.mrb[0].mxu0
    %v3637 = vadd.f32 0.0, %v3636
    %v3638 = vpop.f32.mrb[0].mxu0
    %3639 = vdwg.mxu0
    %v3641 = vsel %vm452, %v3637, 0
    %3643 = vmatprep.subr.mxu0 0.0
    %3644 = vmatpush1.msra.mxu0 %v1762
    %3645 = vmatprep.subr.mxu0 0.0
    %3646 = vmatpush1.msra.mxu0 0.0
    %3647 = vmatprep.subr.mxu0 0.0
    %3648 = vmatpush1.msra.mxu0 0.0
    %3649 = vmatprep.subr.mxu0 0.0
    %3650 = vmatpush1.msra.mxu0 0.0
    %3651 = vmatprep.subr.mxu0 0.0
    %3652 = vmatpush1.msra.mxu0 0.0
    %3653 = vmatprep.subr.mxu0 0.0
    %3654 = vmatpush1.msra.mxu0 0.0
    %3655 = vmatprep.subr.mxu0 0.0
    %3656 = vmatpush1.msra.mxu0 0.0
    %3657 = vmatprep.subr.mxu0 0.0
    %3658 = vmatpush1.msra.mxu0 0.0
    %3659 = vmatprep.subr.mxu0 0.0
    %3660 = vmatpush1.msra.mxu0 0.0
    %3661 = vmatprep.subr.mxu0 0.0
    %3662 = vmatpush1.msra.mxu0 0.0
    %3663 = vmatprep.subr.mxu0 0.0
    %3664 = vmatpush1.msra.mxu0 0.0
    %3665 = vmatprep.subr.mxu0 0.0
    %3666 = vmatpush1.msra.mxu0 0.0
    %3667 = vmatprep.subr.mxu0 0.0
    %3668 = vmatpush1.msra.mxu0 0.0
    %3669 = vmatprep.subr.mxu0 0.0
    %3670 = vmatpush1.msra.mxu0 0.0
    %3671 = vmatprep.subr.mxu0 0.0
    %3672 = vmatpush1.msra.mxu0 0.0
    %3673 = vmatprep.subr.mxu0 0.0
    %3674 = vmatpush1.msra.mxu0 0.0
    %3675 = vmatprep.subr.mxu0 0.0
    %3676 = vmatpush1.msra.mxu0 0.0
    %3677 = vmatprep.subr.mxu0 0.0
    %3678 = vmatpush1.msra.mxu0 0.0
    %3679 = vmatprep.subr.mxu0 0.0
    %3680 = vmatpush1.msra.mxu0 0.0
    %3681 = vmatprep.subr.mxu0 0.0
    %3682 = vmatpush1.msra.mxu0 0.0
    %3683 = vmatprep.subr.mxu0 0.0
    %3684 = vmatpush1.msra.mxu0 0.0
    %3685 = vmatprep.subr.mxu0 0.0
    %3686 = vmatpush1.msra.mxu0 0.0
    %3687 = vmatprep.subr.mxu0 0.0
    %3688 = vmatpush1.msra.mxu0 0.0
    %3689 = vmatprep.subr.mxu0 0.0
    %3690 = vmatpush1.msra.mxu0 0.0
    %3691 = vmatprep.subr.mxu0 0.0
    %3692 = vmatpush1.msra.mxu0 0.0
    %3693 = vmatprep.subr.mxu0 0.0
    %3694 = vmatpush1.msra.mxu0 0.0
    %3695 = vmatprep.subr.mxu0 0.0
    %3696 = vmatpush1.msra.mxu0 0.0
    %3697 = vmatprep.subr.mxu0 0.0
    %3698 = vmatpush1.msra.mxu0 0.0
    %3699 = vmatprep.subr.mxu0 0.0
    %3700 = vmatpush1.msra.mxu0 0.0
    %3701 = vmatprep.subr.mxu0 0.0
    %3702 = vmatpush1.msra.mxu0 0.0
    %3703 = vmatprep.subr.mxu0 0.0
    %3704 = vmatpush1.msra.mxu0 0.0
    %3705 = vmatprep.subr.mxu0 0.0
    %3706 = vmatpush1.msra.mxu0 0.0
    %3707 = vmatprep.mubr.f32.mxu0 0.0
    %3708 = vmatmul.mubr.f32.gmra.mrb[0].mxu0 %v3641
    %v3709 = vpop.f32.mrb[0].mxu0
    %v3710 = vadd.f32 0.0, %v3709
    %v3711 = vpop.f32.mrb[0].mxu0
    %3712 = vdwg.mxu0
    %v3713 = vadd.f32 %v3467, %v3710
    %v3714 = vld [vmem:[%s13] sm:$0x1]
    %v3716 = vlaneseq
    %v3717 = vshrl.u32 %v3716, 7
    %v3718 = vsub.s32 0, %v3717
    %v3719 = vrot.slane %v3714, %v3718
    %v3721 = vadd.f32 %v2738, %v3719
    %v3722 = vadd.f32 %v3713, %v3719
    %v3723 = vadd.f32 %v1456, %v3721
    %v3724 = vadd.f32 %v1457, %v3722
    %v3725 = vld [vmem:[%s20] sm:$0x1]
    %v3726 = vld [vmem:[%s21] sm:$0x1]
    %v3727 = vsel %vm223, %v3723, 0.0
    %3728 = vadd.xlane.f32.xlu0 %v3727
    %v3729 = vpop.xlane.xlu0 %3728
    %v3730 = vsel %vm223, %v3724, 0.0
    %3731 = vadd.xlane.f32.xlu0 %v3730
    %v3732 = vpop.xlane.xlu0 %3731
    %v3733 = vmul.f32 %v3729, %v1421
    %v3734 = vmul.f32 %v3732, %v1421
    %v3735 = vsub.f32 %v3723, %v3733
    %v3736 = vsub.f32 %v3724, %v3734
    %v3737 = vmul.f32 %v3735, %v3735
    %v3738 = vmul.f32 %v3736, %v3736
    %v3739 = vsel %vm223, %v3737, 0.0
    %3740 = vadd.xlane.f32.xlu0 %v3739
    %v3741 = vpop.xlane.xlu0 %3740
    %v3742 = vsel %vm223, %v3738, 0.0
    %3743 = vadd.xlane.f32.xlu0 %v3742
    %v3744 = vpop.xlane.xlu0 %3743
    %v3745 = vmul.f32 %v3741, %v1421
    %v3746 = vmul.f32 %v3744, %v1421
    %v3747 = vadd.f32 %v3745, 1e-05
    %v3748 = vadd.f32 %v3746, 1e-05
    %v3749 = vrsqrt.pop %v3747
    %v3750 = vrsqrt.pop %v3748
    %v3751 = vmul.f32 %v3735, %v3749
    %v3752 = vmul.f32 %v3736, %v3750
    %v3754 = vlaneseq
    %v3755 = vshrl.u32 %v3754, 7
    %v3756 = vsub.s32 0, %v3755
    %v3757 = vrot.slane %v3725, %v3756
    %v3759 = vmul.f32 %v3751, %v3757
    %v3760 = vmul.f32 %v3752, %v3757
    %v3762 = vlaneseq
    %v3763 = vshrl.u32 %v3762, 7
    %v3764 = vsub.s32 0, %v3763
    %v3765 = vrot.slane %v3726, %v3764
    %v3767 = vadd.f32 %v3759, %v3765
    %v3768 = vadd.f32 %v3760, %v3765
    %v3769 = vld [vmem:[#allocation17] sm:$0xff]
    %v3770 = vld [vmem:[#allocation17 + $0x8] sm:$0xff]
    %v3771 = vld [vmem:[#allocation17 + $0x10] sm:$0xff]
    %v3772 = vld [vmem:[#allocation17 + $0x18] sm:$0xff]
    %v3773 = vld [vmem:[%s15] sm:$0x1]
    %v3775 = vlaneseq
    %v3776 = vshrl.u32 %v3775, 7
    %v3777 = vsub.s32 0, %v3776
    %v3778 = vrot.slane %v3773, %v3777
    %v3781 = vsel %vm223, %v3767, 0
    %v3784 = vsel %vm223, %v3768, 0
    %3786 = vmatprep.subr.mxu0 0.0
    %3787 = vmatpush1.msra.mxu0 %v3769
    %3788 = vmatprep.subr.mxu0 0.0
    %3789 = vmatpush1.msra.mxu0 %v3770
    %3790 = vmatprep.subr.mxu0 0.0
    %3791 = vmatpush1.msra.mxu0 %v3771
    %3792 = vmatprep.subr.mxu0 0.0
    %3793 = vmatpush1.msra.mxu0 %v3772
    %3794 = vmatprep.subr.mxu0 0.0
    %3795 = vmatpush1.msra.mxu0 0.0
    %3796 = vmatprep.subr.mxu0 0.0
    %3797 = vmatpush1.msra.mxu0 0.0
    %3798 = vmatprep.subr.mxu0 0.0
    %3799 = vmatpush1.msra.mxu0 0.0
    %3800 = vmatprep.subr.mxu0 0.0
    %3801 = vmatpush1.msra.mxu0 0.0
    %3802 = vmatprep.subr.mxu0 0.0
    %3803 = vmatpush1.msra.mxu0 0.0
    %3804 = vmatprep.subr.mxu0 0.0
    %3805 = vmatpush1.msra.mxu0 0.0
    %3806 = vmatprep.subr.mxu0 0.0
    %3807 = vmatpush1.msra.mxu0 0.0
    %3808 = vmatprep.subr.mxu0 0.0
    %3809 = vmatpush1.msra.mxu0 0.0
    %3810 = vmatprep.subr.mxu0 0.0
    %3811 = vmatpush1.msra.mxu0 0.0
    %3812 = vmatprep.subr.mxu0 0.0
    %3813 = vmatpush1.msra.mxu0 0.0
    %3814 = vmatprep.subr.mxu0 0.0
    %3815 = vmatpush1.msra.mxu0 0.0
    %3816 = vmatprep.subr.mxu0 0.0
    %3817 = vmatpush1.msra.mxu0 0.0
    %3818 = vmatprep.subr.mxu0 0.0
    %3819 = vmatpush1.msra.mxu0 0.0
    %3820 = vmatprep.subr.mxu0 0.0
    %3821 = vmatpush1.msra.mxu0 0.0
    %3822 = vmatprep.subr.mxu0 0.0
    %3823 = vmatpush1.msra.mxu0 0.0
    %3824 = vmatprep.subr.mxu0 0.0
    %3825 = vmatpush1.msra.mxu0 0.0
    %3826 = vmatprep.subr.mxu0 0.0
    %3827 = vmatpush1.msra.mxu0 0.0
    %3828 = vmatprep.subr.mxu0 0.0
    %3829 = vmatpush1.msra.mxu0 0.0
    %3830 = vmatprep.subr.mxu0 0.0
    %3831 = vmatpush1.msra.mxu0 0.0
    %3832 = vmatprep.subr.mxu0 0.0
    %3833 = vmatpush1.msra.mxu0 0.0
    %3834 = vmatprep.subr.mxu0 0.0
    %3835 = vmatpush1.msra.mxu0 0.0
    %3836 = vmatprep.subr.mxu0 0.0
    %3837 = vmatpush1.msra.mxu0 0.0
    %3838 = vmatprep.subr.mxu0 0.0
    %3839 = vmatpush1.msra.mxu0 0.0
    %3840 = vmatprep.subr.mxu0 0.0
    %3841 = vmatpush1.msra.mxu0 0.0
    %3842 = vmatprep.subr.mxu0 0.0
    %3843 = vmatpush1.msra.mxu0 0.0
    %3844 = vmatprep.subr.mxu0 0.0
    %3845 = vmatpush1.msra.mxu0 0.0
    %3846 = vmatprep.subr.mxu0 0.0
    %3847 = vmatpush1.msra.mxu0 0.0
    %3848 = vmatprep.subr.mxu0 0.0
    %3849 = vmatpush1.msra.mxu0 0.0
    %3850 = vmatprep.mubr.f32.mxu0 0.0
    %3851 = vmatmul.mubr.f32.gmra.mrb[0].mxu0 %v3781
    %v3852 = vpop.f32.mrb[0].mxu0
    %v3853 = vadd.f32 %v3778, %v3852
    %v3854 = vpop.f32.mrb[0].mxu0
    %3855 = vmatprep.mubr.f32.mxu0 0.0
    %3856 = vmatmul.mubr.f32.gmra.mrb[0].mxu0 %v3784
    %v3857 = vpop.f32.mrb[0].mxu0
    %v3858 = vadd.f32 %v3778, %v3857
    %v3859 = vpop.f32.mrb[0].mxu0
    %3860 = vdwg.mxu0
    %v3861 = vmax.f32 %v3853, 0.0
    %v3862 = vmax.f32 %v3858, 0.0
    %v3863 = vld [vmem:[%s16] sm:$0xff]
    %v3864 = vld [vmem:[%s16 + $0x8] sm:$0xff]
    %v3865 = vld [vmem:[%s16 + $0x10] sm:$0xff]
    %v3866 = vld [vmem:[%s16 + $0x18] sm:$0xff]
    %v3867 = vld [vmem:[%s16 + $0x20] sm:$0xff]
    %v3868 = vld [vmem:[%s16 + $0x28] sm:$0xff]
    %v3869 = vld [vmem:[%s16 + $0x30] sm:$0xff]
    %v3870 = vld [vmem:[%s16 + $0x38] sm:$0xff]
    %v3871 = vld [vmem:[%s17] sm:$0x1]
    %v3873 = vlaneseq
    %v3874 = vshrl.u32 %v3873, 7
    %v3875 = vsub.s32 0, %v3874
    %v3876 = vrot.slane %v3871, %v3875
    %vm3878 = vcmask 523264
    %v3880 = vsel %vm3878, %v3861, 0
    %v3883 = vsel %vm3878, %v3862, 0
    %3885 = vmatprep.subr.mxu0 0.0
    %3886 = vmatpush1.msra.mxu0 %v3863
    %3887 = vmatprep.subr.mxu0 0.0
    %3888 = vmatpush1.msra.mxu0 %v3864
    %3889 = vmatprep.subr.mxu0 0.0
    %3890 = vmatpush1.msra.mxu0 %v3865
    %3891 = vmatprep.subr.mxu0 0.0
    %3892 = vmatpush1.msra.mxu0 %v3866
    %3893 = vmatprep.subr.mxu0 0.0
    %3894 = vmatpush1.msra.mxu0 %v3867
    %3895 = vmatprep.subr.mxu0 0.0
    %3896 = vmatpush1.msra.mxu0 %v3868
    %3897 = vmatprep.subr.mxu0 0.0
    %3898 = vmatpush1.msra.mxu0 %v3869
    %3899 = vmatprep.subr.mxu0 0.0
    %3900 = vmatpush1.msra.mxu0 %v3870
    %3901 = vmatprep.subr.mxu0 0.0
    %3902 = vmatpush1.msra.mxu0 0.0
    %3903 = vmatprep.subr.mxu0 0.0
    %3904 = vmatpush1.msra.mxu0 0.0
    %3905 = vmatprep.subr.mxu0 0.0
    %3906 = vmatpush1.msra.mxu0 0.0
    %3907 = vmatprep.subr.mxu0 0.0
    %3908 = vmatpush1.msra.mxu0 0.0
    %3909 = vmatprep.subr.mxu0 0.0
    %3910 = vmatpush1.msra.mxu0 0.0
    %3911 = vmatprep.subr.mxu0 0.0
    %3912 = vmatpush1.msra.mxu0 0.0
    %3913 = vmatprep.subr.mxu0 0.0
    %3914 = vmatpush1.msra.mxu0 0.0
    %3915 = vmatprep.subr.mxu0 0.0
    %3916 = vmatpush1.msra.mxu0 0.0
    %3917 = vmatprep.subr.mxu0 0.0
    %3918 = vmatpush1.msra.mxu0 0.0
    %3919 = vmatprep.subr.mxu0 0.0
    %3920 = vmatpush1.msra.mxu0 0.0
    %3921 = vmatprep.subr.mxu0 0.0
    %3922 = vmatpush1.msra.mxu0 0.0
    %3923 = vmatprep.subr.mxu0 0.0
    %3924 = vmatpush1.msra.mxu0 0.0
    %3925 = vmatprep.subr.mxu0 0.0
    %3926 = vmatpush1.msra.mxu0 0.0
    %3927 = vmatprep.subr.mxu0 0.0
    %3928 = vmatpush1.msra.mxu0 0.0
    %3929 = vmatprep.subr.mxu0 0.0
    %3930 = vmatpush1.msra.mxu0 0.0
    %3931 = vmatprep.subr.mxu0 0.0
    %3932 = vmatpush1.msra.mxu0 0.0
    %3933 = vmatprep.subr.mxu0 0.0
    %3934 = vmatpush1.msra.mxu0 0.0
    %3935 = vmatprep.subr.mxu0 0.0
    %3936 = vmatpush1.msra.mxu0 0.0
    %3937 = vmatprep.subr.mxu0 0.0
    %3938 = vmatpush1.msra.mxu0 0.0
    %3939 = vmatprep.subr.mxu0 0.0
    %3940 = vmatpush1.msra.mxu0 0.0
    %3941 = vmatprep.subr.mxu0 0.0
    %3942 = vmatpush1.msra.mxu0 0.0
    %3943 = vmatprep.subr.mxu0 0.0
    %3944 = vmatpush1.msra.mxu0 0.0
    %3945 = vmatprep.subr.mxu0 0.0
    %3946 = vmatpush1.msra.mxu0 0.0
    %3947 = vmatprep.subr.mxu0 0.0
    %3948 = vmatpush1.msra.mxu0 0.0
    %3949 = vmatprep.mubr.f32.mxu0 0.0
    %3950 = vmatmul.mubr.f32.gmra.mrb[0].mxu0 %v3880
    %v3951 = vpop.f32.mrb[0].mxu0
    %v3952 = vadd.f32 %v3876, %v3951
    %v3953 = vpop.f32.mrb[0].mxu0
    %3954 = vmatprep.mubr.f32.mxu0 0.0
    %3955 = vmatmul.mubr.f32.gmra.mrb[0].mxu0 %v3883
    %v3956 = vpop.f32.mrb[0].mxu0
    %v3957 = vadd.f32 %v3876, %v3956
    %v3958 = vpop.f32.mrb[0].mxu0
    %3959 = vdwg.mxu0
    %v3960 = vadd.f32 %v3767, %v3952
    %v3961 = vadd.f32 %v3768, %v3957
    %v3962 = vld [vmem:[%s22] sm:$0x1]
    %v3963 = vld [vmem:[%s23] sm:$0x1]
    %v3964 = vsel %vm223, %v3960, 0.0
    %3965 = vadd.xlane.f32.xlu0 %v3964
    %v3966 = vpop.xlane.xlu0 %3965
    %v3967 = vsel %vm223, %v3961, 0.0
    %3968 = vadd.xlane.f32.xlu0 %v3967
    %v3969 = vpop.xlane.xlu0 %3968
    %v3970 = vmul.f32 %v3966, %v1421
    %v3971 = vmul.f32 %v3969, %v1421
    %v3972 = vsub.f32 %v3960, %v3970
    %v3973 = vsub.f32 %v3961, %v3971
    %v3974 = vmul.f32 %v3972, %v3972
    %v3975 = vmul.f32 %v3973, %v3973
    %v3976 = vsel %vm223, %v3974, 0.0
    %3977 = vadd.xlane.f32.xlu0 %v3976
    %v3978 = vpop.xlane.xlu0 %3977
    %v3979 = vsel %vm223, %v3975, 0.0
    %3980 = vadd.xlane.f32.xlu0 %v3979
    %v3981 = vpop.xlane.xlu0 %3980
    %v3982 = vmul.f32 %v3978, %v1421
    %v3983 = vmul.f32 %v3981, %v1421
    %v3984 = vadd.f32 %v3982, 1e-05
    %v3985 = vadd.f32 %v3983, 1e-05
    %v3986 = vrsqrt.pop %v3984
    %v3987 = vrsqrt.pop %v3985
    %v3988 = vmul.f32 %v3972, %v3986
    %v3989 = vmul.f32 %v3973, %v3987
    %v3991 = vlaneseq
    %v3992 = vshrl.u32 %v3991, 7
    %v3993 = vsub.s32 0, %v3992
    %v3994 = vrot.slane %v3962, %v3993
    %v3996 = vmul.f32 %v3988, %v3994
    %v3997 = vmul.f32 %v3989, %v3994
    %v3999 = vlaneseq
    %v4000 = vshrl.u32 %v3999, 7
    %v4001 = vsub.s32 0, %v4000
    %v4002 = vrot.slane %v3963, %v4001
    %v4004 = vadd.f32 %v3996, %v4002
    %v4005 = vadd.f32 %v3997, %v4002
    %4006 = vst.msk [vmem:[#allocation19] sm:$0xff] %vm223, %v4004
    %4007 = vst.msk [vmem:[#allocation19 + $0x8] sm:$0xff] %vm223, %v4005
    // Predicated region
    $region138: #{tpu_custom_call.1} parent=1 // pred_check
      _
    $region139: #{tpu_custom_call.1} parent=1 // pred_check_branch
      %4009 = sbr.rel (0) target = $region141
    $region140: #{tpu_custom_call.1} parent=1 // pred_region
      %s4011 = ssub.s32 256, 256
      %4012 = vsyncadd [#allocation4], %s4011
      %s4013 = sshll.u32 [#allocation19], 4
      %s4014 = int_to_ptr.vmem [resolvable:$true] %s4013
      %4019 = dma.vmem_to_hbm [thread:$0]  %s4014, 256, %s24, [#allocation4], 128, 128, 8
    $region141: #{tpu_custom_call.1} parent=1 // pred_fallthru
      _
    // Predicated region
    $region142: #{tpu_custom_call.1} parent=1 // pred_check
      _
    $region143: #{tpu_custom_call.1} parent=1 // pred_check_branch
      %4021 = sbr.rel (0) target = $region145
    $region144: #{tpu_custom_call.1} parent=1 // pred_region
      %4022 = dma.done [#allocation4], 256
    $region145: #{tpu_custom_call.1} parent=1 // pred_fallthru
      _
    %4023 = vsyncpa [#allocation3], 1
    %4024 = vsyncpa [#allocation6], 1
    %4025 = vsyncpa [#allocation9], 1
    %4026 = vsyncpa [#allocation12], 1
    %4027 = vsyncpa [#allocation15], 1
    %4028 = vsyncpa [#allocation18], 1
    %4029 = vsyncpa [#allocation4], 1

</llo_original>
